<compile_context>
chip_gen: v6e
topology: v6e:2x2x1
jax: 0.10.0
libtpu: 0.0.40
codegen_flags: <defaults>
</compile_context>

<pallas_src>
import functools

import jax
import jax.numpy as jnp
from jax.experimental import pallas as pl
from jax.experimental.pallas import tpu as pltpu

NUM_LAYERS = 5
HIDDEN = 3  # input_size == hidden_size == 3 in the module

# PyTorch gate order is (i, f, g, o); we pack fused weights as (i, f, o, g) so the
# three sigmoid gates are contiguous in lanes and `g` (tanh) is last.
GATE_ORDER_FUSED = (0, 1, 3, 2)


def lstm_net_kernel(x_ref, wih_ref, whh_ref, b_ref, wl_ref, bl_ref, y_ref,
                    *, seq_len, batch):
    # x_ref:   (T*B, 3)   time-major input, flattened (row = t*B + b)
    # wih_ref: (L, 3, 12) fused per-layer W_ih^T, gate order [i, f, o, g]
    # whh_ref: (L, 3, 12) fused per-layer W_hh^T
    # b_ref:   (L, 1, 12) fused per-layer (b_ih + b_hh)
    # wl_ref:  (3, 3)     Linear weight transposed
    # bl_ref:  (1, 3)     Linear bias
    # y_ref:   (B, 3)     output
    _, H = x_ref.shape
    G3 = 3 * H  # 9 sigmoid lanes

    x_all = x_ref[...]                                        # (T*B, H)
    x_last = x_all[(seq_len - 1) * batch:seq_len * batch, :]  # (B, H) original input, last t
    seq = x_all

    h = jnp.zeros((batch, H), jnp.float32)
    for layer in range(NUM_LAYERS):
        wih_l = wih_ref[layer]   # (H, 4H)
        whh_l = whh_ref[layer]   # (H, 4H)
        b_l = b_ref[layer]       # (1, 4H)

        # Hoisted input projection for the whole sequence: one MXU matmul per layer.
        gx = jnp.dot(seq, wih_l, preferred_element_type=jnp.float32) + b_l  # (T*B, 4H)

        h = jnp.zeros((batch, H), jnp.float32)
        c = jnp.zeros((batch, H), jnp.float32)
        outs = []
        for t in range(seq_len):  # fully unrolled (static T)
            g = gx[t * batch:(t + 1) * batch, :]
            # Recurrent term via VPU broadcast-FMAs (K = 3): no MXU in the serial chain.
            g = g + (h[:, 0:1] * whh_l[0:1, :]
                     + h[:, 1:2] * whh_l[1:2, :]
                     + h[:, 2:3] * whh_l[2:3, :])              # (B, 4H)
            ifo = jax.nn.sigmoid(g[:, :G3])                    # one EUP pass over i,f,o
            g_g = jnp.tanh(g[:, G3:])                          # one EUP pass over g
            i_g = ifo[:, 0:H]
            f_g = ifo[:, H:2 * H]
            o_g = ifo[:, 2 * H:3 * H]
            c = f_g * c + i_g * g_g
            h = o_g * jnp.tanh(c)
            outs.append(h)
        if layer < NUM_LAYERS - 1:
            seq = jnp.concatenate(outs, axis=0)                # (T*B, H) next layer input

    # h == LSTM output at the last timestep of the last layer: (B, 3)
    lin = jnp.dot(h, wl_ref[...], preferred_element_type=jnp.float32) + bl_ref[...]

    # Block: max((1 + lin) * x_input[:, -1, :], 0)
    y_ref[...] = jnp.maximum((1.0 + lin) * x_last, 0.0)


def pack_params(wih, whh, b):
    """Fuse per-gate params (L,4,3,3)/(L,4,1,3) into (L,3,12)/(L,1,12), order [i,f,o,g]."""
    wih_f = jnp.concatenate([wih[:, g] for g in GATE_ORDER_FUSED], axis=-1)
    whh_f = jnp.concatenate([whh[:, g] for g in GATE_ORDER_FUSED], axis=-1)
    b_f = jnp.concatenate([b[:, g] for g in GATE_ORDER_FUSED], axis=-1)
    return wih_f, whh_f, b_f


def net_forward(x_input, wih, whh, b, wl, bl):
    """x_input: (B, T, 3) float32 (PyTorch batch_first layout)."""
    B, T, F = x_input.shape
    wih_f, whh_f, b_f = pack_params(wih, whh, b)
    # Time-major, flattened to 2-D so the kernel never reshapes inside Pallas.
    x2d = jnp.transpose(x_input, (1, 0, 2)).reshape(T * B, F)

    kernel = functools.partial(lstm_net_kernel, seq_len=T, batch=B)
    call = pl.pallas_call(
        kernel,
        out_shape=jax.ShapeDtypeStruct((B, F), jnp.float32),
        in_specs=[pl.BlockSpec(memory_space=pltpu.MemorySpace.VMEM)] * 6,
        out_specs=pl.BlockSpec(memory_space=pltpu.MemorySpace.VMEM),
    )
    return call(x2d, wih_f, whh_f, b_f, wl, bl)


def net_ref(x_input, wih, whh, b, wl, bl):
    """Pure-JAX reference matching nn.LSTM(5 layers) + Linear + Block (gate order i,f,g,o)."""
    B, T, F = x_input.shape
    seq = x_input
    for layer in range(NUM_LAYERS):
        h = jnp.zeros((B, F), jnp.float32)
        c = jnp.zeros((B, F), jnp.float32)
        outs = []
        for t in range(T):
            xt = seq[:, t, :]
            gi = xt @ wih[layer, 0] + h @ whh[layer, 0] + b[layer, 0]
            gf = xt @ wih[layer, 1] + h @ whh[layer, 1] + b[layer, 1]
            gg = xt @ wih[layer, 2] + h @ whh[layer, 2] + b[layer, 2]
            go = xt @ wih[layer, 3] + h @ whh[layer, 3] + b[layer, 3]
            i_g = jax.nn.sigmoid(gi)
            f_g = jax.nn.sigmoid(gf)
            g_g = jnp.tanh(gg)
            o_g = jax.nn.sigmoid(go)
            c = f_g * c + i_g * g_g
            h = o_g * jnp.tanh(c)
            outs.append(h)
        seq = jnp.stack(outs, axis=1)
    lin = seq[:, -1, :] @ wl + bl
    return jnp.maximum((1.0 + lin) * x_input[:, -1, :], 0.0)


if __name__ == "__main__":
    B, T, F = 2, 8, 3  # input_size is fixed at 3 by the module

    key = jax.random.PRNGKey(0)
    k_x, k_wih, k_whh, k_b, k_wl, k_bl = jax.random.split(key, 6)

    x_input = jax.random.normal(k_x, (B, T, F), dtype=jnp.float32)

    # Deterministic synthetic parameters (PyTorch gate order i, f, g, o; stored transposed).
    scale = 0.3
    wih = scale * jax.random.normal(k_wih, (NUM_LAYERS, 4, F, HIDDEN), jnp.float32)
    whh = scale * jax.random.normal(k_whh, (NUM_LAYERS, 4, HIDDEN, HIDDEN), jnp.float32)
    b = scale * jax.random.normal(k_b, (NUM_LAYERS, 4, 1, HIDDEN), jnp.float32)
    wl = scale * jax.random.normal(k_wl, (HIDDEN, HIDDEN), jnp.float32)
    bl = scale * jax.random.normal(k_bl, (1, HIDDEN), jnp.float32)

    y = net_forward(x_input, wih, whh, b, wl, bl)
    jax.block_until_ready(y)

    y_ref = net_ref(x_input, wih, whh, b, wl, bl)
    assert y.shape == (B, F)
    assert jnp.allclose(y, y_ref, rtol=1e-3, atol=1e-4), (y, y_ref)

    print("KERNEL_OK")
</pallas_src>

<mosaic_0001>
module attributes {stable_mosaic.version = 11 : i64} {
  func.func @lstm_net_kernel(%arg0: memref<16x3xf32, #tpu.memory_space<vmem>>, %arg1: memref<5x3x12xf32, #tpu.memory_space<vmem>>, %arg2: memref<5x3x12xf32, #tpu.memory_space<vmem>>, %arg3: memref<5x1x12xf32, #tpu.memory_space<vmem>>, %arg4: memref<3x3xf32, #tpu.memory_space<vmem>>, %arg5: memref<1x3xf32, #tpu.memory_space<vmem>>, %arg6: memref<2x3xf32, #tpu.memory_space<vmem>>) attributes {dimension_semantics = [], scalar_prefetch = 0 : i64, scratch_operands = 0 : i64, tpu.core_type = #tpu.core_type<tc>} {
    %c0 = arith.constant 0 : index
    %c0_0 = arith.constant 0 : index
    %0 = vector.load %arg0[%c0, %c0_0] : memref<16x3xf32, #tpu.memory_space<vmem>>, vector<16x3xf32>
    %1 = vector.extract_strided_slice %0 {offsets = [14, 0], sizes = [2, 3], strides = [1, 1]} : vector<16x3xf32> to vector<2x3xf32>
    %c0_1 = arith.constant 0 : index
    %c0_2 = arith.constant 0 : index
    %c0_3 = arith.constant 0 : index
    %2 = vector.load %arg1[%c0_1, %c0_2, %c0_3] : memref<5x3x12xf32, #tpu.memory_space<vmem>>, vector<1x3x12xf32>
    %3 = vector.shape_cast %2 : vector<1x3x12xf32> to vector<3x12xf32>
    %c0_4 = arith.constant 0 : index
    %c0_5 = arith.constant 0 : index
    %c0_6 = arith.constant 0 : index
    %4 = vector.load %arg2[%c0_4, %c0_5, %c0_6] : memref<5x3x12xf32, #tpu.memory_space<vmem>>, vector<1x3x12xf32>
    %5 = vector.shape_cast %4 : vector<1x3x12xf32> to vector<3x12xf32>
    %c0_7 = arith.constant 0 : index
    %c0_8 = arith.constant 0 : index
    %c0_9 = arith.constant 0 : index
    %6 = vector.load %arg3[%c0_7, %c0_8, %c0_9] : memref<5x1x12xf32, #tpu.memory_space<vmem>>, vector<1x1x12xf32>
    %7 = vector.shape_cast %6 : vector<1x1x12xf32> to vector<1x12xf32>
    %cst = arith.constant dense<0.000000e+00> : vector<16x12xf32>
    %8 = tpu.matmul %0, %3, %cst {dimension_numbers = #tpu.dot_dimension_numbers<[1], [0], [0], [1], [0, 0, 1, 1], [], []>} : vector<16x3xf32>, vector<3x12xf32>, vector<16x12xf32> -> vector<16x12xf32>
    %9 = vector.broadcast %7 : vector<1x12xf32> to vector<16x12xf32>
    %10 = arith.addf %8, %9 : vector<16x12xf32>
    %cst_10 = arith.constant 0.000000e+00 : f32
    %11 = vector.broadcast %cst_10 : f32 to vector<2x3xf32>
    %cst_11 = arith.constant 0.000000e+00 : f32
    %12 = vector.broadcast %cst_11 : f32 to vector<2x3xf32>
    %13 = vector.extract_strided_slice %10 {offsets = [0, 0], sizes = [2, 12], strides = [1, 1]} : vector<16x12xf32> to vector<2x12xf32>
    %14 = vector.extract_strided_slice %11 {offsets = [0, 0], sizes = [2, 1], strides = [1, 1]} : vector<2x3xf32> to vector<2x1xf32>
    %15 = vector.extract_strided_slice %5 {offsets = [0, 0], sizes = [1, 12], strides = [1, 1]} : vector<3x12xf32> to vector<1x12xf32>
    %16 = vector.broadcast %14 : vector<2x1xf32> to vector<2x12xf32>
    %17 = vector.broadcast %15 : vector<1x12xf32> to vector<2x12xf32>
    %18 = arith.mulf %16, %17 : vector<2x12xf32>
    %19 = vector.extract_strided_slice %11 {offsets = [0, 1], sizes = [2, 1], strides = [1, 1]} : vector<2x3xf32> to vector<2x1xf32>
    %20 = vector.extract_strided_slice %5 {offsets = [1, 0], sizes = [1, 12], strides = [1, 1]} : vector<3x12xf32> to vector<1x12xf32>
    %21 = vector.broadcast %19 : vector<2x1xf32> to vector<2x12xf32>
    %22 = vector.broadcast %20 : vector<1x12xf32> to vector<2x12xf32>
    %23 = arith.mulf %21, %22 : vector<2x12xf32>
    %24 = arith.addf %18, %23 : vector<2x12xf32>
    %25 = vector.extract_strided_slice %11 {offsets = [0, 2], sizes = [2, 1], strides = [1, 1]} : vector<2x3xf32> to vector<2x1xf32>
    %26 = vector.extract_strided_slice %5 {offsets = [2, 0], sizes = [1, 12], strides = [1, 1]} : vector<3x12xf32> to vector<1x12xf32>
    %27 = vector.broadcast %25 : vector<2x1xf32> to vector<2x12xf32>
    %28 = vector.broadcast %26 : vector<1x12xf32> to vector<2x12xf32>
    %29 = arith.mulf %27, %28 : vector<2x12xf32>
    %30 = arith.addf %24, %29 : vector<2x12xf32>
    %31 = arith.addf %13, %30 : vector<2x12xf32>
    %32 = vector.extract_strided_slice %31 {offsets = [0, 0], sizes = [2, 9], strides = [1, 1]} : vector<2x12xf32> to vector<2x9xf32>
    %33 = arith.negf %32 : vector<2x9xf32>
    %34 = math.exp %33 : vector<2x9xf32>
    %cst_12 = arith.constant 1.000000e+00 : f32
    %35 = vector.broadcast %cst_12 : f32 to vector<2x9xf32>
    %36 = arith.addf %35, %34 : vector<2x9xf32>
    %37 = arith.divf %35, %36 : vector<2x9xf32>
    %38 = vector.extract_strided_slice %31 {offsets = [0, 9], sizes = [2, 3], strides = [1, 1]} : vector<2x12xf32> to vector<2x3xf32>
    %39 = math.tanh %38 : vector<2x3xf32>
    %40 = vector.extract_strided_slice %37 {offsets = [0, 0], sizes = [2, 3], strides = [1, 1]} : vector<2x9xf32> to vector<2x3xf32>
    %41 = vector.extract_strided_slice %37 {offsets = [0, 3], sizes = [2, 3], strides = [1, 1]} : vector<2x9xf32> to vector<2x3xf32>
    %42 = vector.extract_strided_slice %37 {offsets = [0, 6], sizes = [2, 3], strides = [1, 1]} : vector<2x9xf32> to vector<2x3xf32>
    %43 = arith.mulf %41, %12 : vector<2x3xf32>
    %44 = arith.mulf %40, %39 : vector<2x3xf32>
    %45 = arith.addf %43, %44 : vector<2x3xf32>
    %46 = math.tanh %45 : vector<2x3xf32>
    %47 = arith.mulf %42, %46 : vector<2x3xf32>
    %48 = vector.extract_strided_slice %10 {offsets = [2, 0], sizes = [2, 12], strides = [1, 1]} : vector<16x12xf32> to vector<2x12xf32>
    %49 = vector.extract_strided_slice %47 {offsets = [0, 0], sizes = [2, 1], strides = [1, 1]} : vector<2x3xf32> to vector<2x1xf32>
    %50 = vector.extract_strided_slice %5 {offsets = [0, 0], sizes = [1, 12], strides = [1, 1]} : vector<3x12xf32> to vector<1x12xf32>
    %51 = vector.broadcast %49 : vector<2x1xf32> to vector<2x12xf32>
    %52 = vector.broadcast %50 : vector<1x12xf32> to vector<2x12xf32>
    %53 = arith.mulf %51, %52 : vector<2x12xf32>
    %54 = vector.extract_strided_slice %47 {offsets = [0, 1], sizes = [2, 1], strides = [1, 1]} : vector<2x3xf32> to vector<2x1xf32>
    %55 = vector.extract_strided_slice %5 {offsets = [1, 0], sizes = [1, 12], strides = [1, 1]} : vector<3x12xf32> to vector<1x12xf32>
    %56 = vector.broadcast %54 : vector<2x1xf32> to vector<2x12xf32>
    %57 = vector.broadcast %55 : vector<1x12xf32> to vector<2x12xf32>
    %58 = arith.mulf %56, %57 : vector<2x12xf32>
    %59 = arith.addf %53, %58 : vector<2x12xf32>
    %60 = vector.extract_strided_slice %47 {offsets = [0, 2], sizes = [2, 1], strides = [1, 1]} : vector<2x3xf32> to vector<2x1xf32>
    %61 = vector.extract_strided_slice %5 {offsets = [2, 0], sizes = [1, 12], strides = [1, 1]} : vector<3x12xf32> to vector<1x12xf32>
    %62 = vector.broadcast %60 : vector<2x1xf32> to vector<2x12xf32>
    %63 = vector.broadcast %61 : vector<1x12xf32> to vector<2x12xf32>
    %64 = arith.mulf %62, %63 : vector<2x12xf32>
    %65 = arith.addf %59, %64 : vector<2x12xf32>
    %66 = arith.addf %48, %65 : vector<2x12xf32>
    %67 = vector.extract_strided_slice %66 {offsets = [0, 0], sizes = [2, 9], strides = [1, 1]} : vector<2x12xf32> to vector<2x9xf32>
    %68 = arith.negf %67 : vector<2x9xf32>
    %69 = math.exp %68 : vector<2x9xf32>
    %cst_13 = arith.constant 1.000000e+00 : f32
    %70 = vector.broadcast %cst_13 : f32 to vector<2x9xf32>
    %71 = arith.addf %70, %69 : vector<2x9xf32>
    %72 = arith.divf %70, %71 : vector<2x9xf32>
    %73 = vector.extract_strided_slice %66 {offsets = [0, 9], sizes = [2, 3], strides = [1, 1]} : vector<2x12xf32> to vector<2x3xf32>
    %74 = math.tanh %73 : vector<2x3xf32>
    %75 = vector.extract_strided_slice %72 {offsets = [0, 0], sizes = [2, 3], strides = [1, 1]} : vector<2x9xf32> to vector<2x3xf32>
    %76 = vector.extract_strided_slice %72 {offsets = [0, 3], sizes = [2, 3], strides = [1, 1]} : vector<2x9xf32> to vector<2x3xf32>
    %77 = vector.extract_strided_slice %72 {offsets = [0, 6], sizes = [2, 3], strides = [1, 1]} : vector<2x9xf32> to vector<2x3xf32>
    %78 = arith.mulf %76, %45 : vector<2x3xf32>
    %79 = arith.mulf %75, %74 : vector<2x3xf32>
    %80 = arith.addf %78, %79 : vector<2x3xf32>
    %81 = math.tanh %80 : vector<2x3xf32>
    %82 = arith.mulf %77, %81 : vector<2x3xf32>
    %83 = vector.extract_strided_slice %10 {offsets = [4, 0], sizes = [2, 12], strides = [1, 1]} : vector<16x12xf32> to vector<2x12xf32>
    %84 = vector.extract_strided_slice %82 {offsets = [0, 0], sizes = [2, 1], strides = [1, 1]} : vector<2x3xf32> to vector<2x1xf32>
    %85 = vector.extract_strided_slice %5 {offsets = [0, 0], sizes = [1, 12], strides = [1, 1]} : vector<3x12xf32> to vector<1x12xf32>
    %86 = vector.broadcast %84 : vector<2x1xf32> to vector<2x12xf32>
    %87 = vector.broadcast %85 : vector<1x12xf32> to vector<2x12xf32>
    %88 = arith.mulf %86, %87 : vector<2x12xf32>
    %89 = vector.extract_strided_slice %82 {offsets = [0, 1], sizes = [2, 1], strides = [1, 1]} : vector<2x3xf32> to vector<2x1xf32>
    %90 = vector.extract_strided_slice %5 {offsets = [1, 0], sizes = [1, 12], strides = [1, 1]} : vector<3x12xf32> to vector<1x12xf32>
    %91 = vector.broadcast %89 : vector<2x1xf32> to vector<2x12xf32>
    %92 = vector.broadcast %90 : vector<1x12xf32> to vector<2x12xf32>
    %93 = arith.mulf %91, %92 : vector<2x12xf32>
    %94 = arith.addf %88, %93 : vector<2x12xf32>
    %95 = vector.extract_strided_slice %82 {offsets = [0, 2], sizes = [2, 1], strides = [1, 1]} : vector<2x3xf32> to vector<2x1xf32>
    %96 = vector.extract_strided_slice %5 {offsets = [2, 0], sizes = [1, 12], strides = [1, 1]} : vector<3x12xf32> to vector<1x12xf32>
    %97 = vector.broadcast %95 : vector<2x1xf32> to vector<2x12xf32>
    %98 = vector.broadcast %96 : vector<1x12xf32> to vector<2x12xf32>
    %99 = arith.mulf %97, %98 : vector<2x12xf32>
    %100 = arith.addf %94, %99 : vector<2x12xf32>
    %101 = arith.addf %83, %100 : vector<2x12xf32>
    %102 = vector.extract_strided_slice %101 {offsets = [0, 0], sizes = [2, 9], strides = [1, 1]} : vector<2x12xf32> to vector<2x9xf32>
    %103 = arith.negf %102 : vector<2x9xf32>
    %104 = math.exp %103 : vector<2x9xf32>
    %cst_14 = arith.constant 1.000000e+00 : f32
    %105 = vector.broadcast %cst_14 : f32 to vector<2x9xf32>
    %106 = arith.addf %105, %104 : vector<2x9xf32>
    %107 = arith.divf %105, %106 : vector<2x9xf32>
    %108 = vector.extract_strided_slice %101 {offsets = [0, 9], sizes = [2, 3], strides = [1, 1]} : vector<2x12xf32> to vector<2x3xf32>
    %109 = math.tanh %108 : vector<2x3xf32>
    %110 = vector.extract_strided_slice %107 {offsets = [0, 0], sizes = [2, 3], strides = [1, 1]} : vector<2x9xf32> to vector<2x3xf32>
    %111 = vector.extract_strided_slice %107 {offsets = [0, 3], sizes = [2, 3], strides = [1, 1]} : vector<2x9xf32> to vector<2x3xf32>
    %112 = vector.extract_strided_slice %107 {offsets = [0, 6], sizes = [2, 3], strides = [1, 1]} : vector<2x9xf32> to vector<2x3xf32>
    %113 = arith.mulf %111, %80 : vector<2x3xf32>
    %114 = arith.mulf %110, %109 : vector<2x3xf32>
    %115 = arith.addf %113, %114 : vector<2x3xf32>
    %116 = math.tanh %115 : vector<2x3xf32>
    %117 = arith.mulf %112, %116 : vector<2x3xf32>
    %118 = vector.extract_strided_slice %10 {offsets = [6, 0], sizes = [2, 12], strides = [1, 1]} : vector<16x12xf32> to vector<2x12xf32>
    %119 = vector.extract_strided_slice %117 {offsets = [0, 0], sizes = [2, 1], strides = [1, 1]} : vector<2x3xf32> to vector<2x1xf32>
    %120 = vector.extract_strided_slice %5 {offsets = [0, 0], sizes = [1, 12], strides = [1, 1]} : vector<3x12xf32> to vector<1x12xf32>
    %121 = vector.broadcast %119 : vector<2x1xf32> to vector<2x12xf32>
    %122 = vector.broadcast %120 : vector<1x12xf32> to vector<2x12xf32>
    %123 = arith.mulf %121, %122 : vector<2x12xf32>
    %124 = vector.extract_strided_slice %117 {offsets = [0, 1], sizes = [2, 1], strides = [1, 1]} : vector<2x3xf32> to vector<2x1xf32>
    %125 = vector.extract_strided_slice %5 {offsets = [1, 0], sizes = [1, 12], strides = [1, 1]} : vector<3x12xf32> to vector<1x12xf32>
    %126 = vector.broadcast %124 : vector<2x1xf32> to vector<2x12xf32>
    %127 = vector.broadcast %125 : vector<1x12xf32> to vector<2x12xf32>
    %128 = arith.mulf %126, %127 : vector<2x12xf32>
    %129 = arith.addf %123, %128 : vector<2x12xf32>
    %130 = vector.extract_strided_slice %117 {offsets = [0, 2], sizes = [2, 1], strides = [1, 1]} : vector<2x3xf32> to vector<2x1xf32>
    %131 = vector.extract_strided_slice %5 {offsets = [2, 0], sizes = [1, 12], strides = [1, 1]} : vector<3x12xf32> to vector<1x12xf32>
    %132 = vector.broadcast %130 : vector<2x1xf32> to vector<2x12xf32>
    %133 = vector.broadcast %131 : vector<1x12xf32> to vector<2x12xf32>
    %134 = arith.mulf %132, %133 : vector<2x12xf32>
    %135 = arith.addf %129, %134 : vector<2x12xf32>
    %136 = arith.addf %118, %135 : vector<2x12xf32>
    %137 = vector.extract_strided_slice %136 {offsets = [0, 0], sizes = [2, 9], strides = [1, 1]} : vector<2x12xf32> to vector<2x9xf32>
    %138 = arith.negf %137 : vector<2x9xf32>
    %139 = math.exp %138 : vector<2x9xf32>
    %cst_15 = arith.constant 1.000000e+00 : f32
    %140 = vector.broadcast %cst_15 : f32 to vector<2x9xf32>
    %141 = arith.addf %140, %139 : vector<2x9xf32>
    %142 = arith.divf %140, %141 : vector<2x9xf32>
    %143 = vector.extract_strided_slice %136 {offsets = [0, 9], sizes = [2, 3], strides = [1, 1]} : vector<2x12xf32> to vector<2x3xf32>
    %144 = math.tanh %143 : vector<2x3xf32>
    %145 = vector.extract_strided_slice %142 {offsets = [0, 0], sizes = [2, 3], strides = [1, 1]} : vector<2x9xf32> to vector<2x3xf32>
    %146 = vector.extract_strided_slice %142 {offsets = [0, 3], sizes = [2, 3], strides = [1, 1]} : vector<2x9xf32> to vector<2x3xf32>
    %147 = vector.extract_strided_slice %142 {offsets = [0, 6], sizes = [2, 3], strides = [1, 1]} : vector<2x9xf32> to vector<2x3xf32>
    %148 = arith.mulf %146, %115 : vector<2x3xf32>
    %149 = arith.mulf %145, %144 : vector<2x3xf32>
    %150 = arith.addf %148, %149 : vector<2x3xf32>
    %151 = math.tanh %150 : vector<2x3xf32>
    %152 = arith.mulf %147, %151 : vector<2x3xf32>
    %153 = vector.extract_strided_slice %10 {offsets = [8, 0], sizes = [2, 12], strides = [1, 1]} : vector<16x12xf32> to vector<2x12xf32>
    %154 = vector.extract_strided_slice %152 {offsets = [0, 0], sizes = [2, 1], strides = [1, 1]} : vector<2x3xf32> to vector<2x1xf32>
    %155 = vector.extract_strided_slice %5 {offsets = [0, 0], sizes = [1, 12], strides = [1, 1]} : vector<3x12xf32> to vector<1x12xf32>
    %156 = vector.broadcast %154 : vector<2x1xf32> to vector<2x12xf32>
    %157 = vector.broadcast %155 : vector<1x12xf32> to vector<2x12xf32>
    %158 = arith.mulf %156, %157 : vector<2x12xf32>
    %159 = vector.extract_strided_slice %152 {offsets = [0, 1], sizes = [2, 1], strides = [1, 1]} : vector<2x3xf32> to vector<2x1xf32>
    %160 = vector.extract_strided_slice %5 {offsets = [1, 0], sizes = [1, 12], strides = [1, 1]} : vector<3x12xf32> to vector<1x12xf32>
    %161 = vector.broadcast %159 : vector<2x1xf32> to vector<2x12xf32>
    %162 = vector.broadcast %160 : vector<1x12xf32> to vector<2x12xf32>
    %163 = arith.mulf %161, %162 : vector<2x12xf32>
    %164 = arith.addf %158, %163 : vector<2x12xf32>
    %165 = vector.extract_strided_slice %152 {offsets = [0, 2], sizes = [2, 1], strides = [1, 1]} : vector<2x3xf32> to vector<2x1xf32>
    %166 = vector.extract_strided_slice %5 {offsets = [2, 0], sizes = [1, 12], strides = [1, 1]} : vector<3x12xf32> to vector<1x12xf32>
    %167 = vector.broadcast %165 : vector<2x1xf32> to vector<2x12xf32>
    %168 = vector.broadcast %166 : vector<1x12xf32> to vector<2x12xf32>
    %169 = arith.mulf %167, %168 : vector<2x12xf32>
    %170 = arith.addf %164, %169 : vector<2x12xf32>
    %171 = arith.addf %153, %170 : vector<2x12xf32>
    %172 = vector.extract_strided_slice %171 {offsets = [0, 0], sizes = [2, 9], strides = [1, 1]} : vector<2x12xf32> to vector<2x9xf32>
    %173 = arith.negf %172 : vector<2x9xf32>
    %174 = math.exp %173 : vector<2x9xf32>
    %cst_16 = arith.constant 1.000000e+00 : f32
    %175 = vector.broadcast %cst_16 : f32 to vector<2x9xf32>
    %176 = arith.addf %175, %174 : vector<2x9xf32>
    %177 = arith.divf %175, %176 : vector<2x9xf32>
    %178 = vector.extract_strided_slice %171 {offsets = [0, 9], sizes = [2, 3], strides = [1, 1]} : vector<2x12xf32> to vector<2x3xf32>
    %179 = math.tanh %178 : vector<2x3xf32>
    %180 = vector.extract_strided_slice %177 {offsets = [0, 0], sizes = [2, 3], strides = [1, 1]} : vector<2x9xf32> to vector<2x3xf32>
    %181 = vector.extract_strided_slice %177 {offsets = [0, 3], sizes = [2, 3], strides = [1, 1]} : vector<2x9xf32> to vector<2x3xf32>
    %182 = vector.extract_strided_slice %177 {offsets = [0, 6], sizes = [2, 3], strides = [1, 1]} : vector<2x9xf32> to vector<2x3xf32>
    %183 = arith.mulf %181, %150 : vector<2x3xf32>
    %184 = arith.mulf %180, %179 : vector<2x3xf32>
    %185 = arith.addf %183, %184 : vector<2x3xf32>
    %186 = math.tanh %185 : vector<2x3xf32>
    %187 = arith.mulf %182, %186 : vector<2x3xf32>
    %188 = vector.extract_strided_slice %10 {offsets = [10, 0], sizes = [2, 12], strides = [1, 1]} : vector<16x12xf32> to vector<2x12xf32>
    %189 = vector.extract_strided_slice %187 {offsets = [0, 0], sizes = [2, 1], strides = [1, 1]} : vector<2x3xf32> to vector<2x1xf32>
    %190 = vector.extract_strided_slice %5 {offsets = [0, 0], sizes = [1, 12], strides = [1, 1]} : vector<3x12xf32> to vector<1x12xf32>
    %191 = vector.broadcast %189 : vector<2x1xf32> to vector<2x12xf32>
    %192 = vector.broadcast %190 : vector<1x12xf32> to vector<2x12xf32>
    %193 = arith.mulf %191, %192 : vector<2x12xf32>
    %194 = vector.extract_strided_slice %187 {offsets = [0, 1], sizes = [2, 1], strides = [1, 1]} : vector<2x3xf32> to vector<2x1xf32>
    %195 = vector.extract_strided_slice %5 {offsets = [1, 0], sizes = [1, 12], strides = [1, 1]} : vector<3x12xf32> to vector<1x12xf32>
    %196 = vector.broadcast %194 : vector<2x1xf32> to vector<2x12xf32>
    %197 = vector.broadcast %195 : vector<1x12xf32> to vector<2x12xf32>
    %198 = arith.mulf %196, %197 : vector<2x12xf32>
    %199 = arith.addf %193, %198 : vector<2x12xf32>
    %200 = vector.extract_strided_slice %187 {offsets = [0, 2], sizes = [2, 1], strides = [1, 1]} : vector<2x3xf32> to vector<2x1xf32>
    %201 = vector.extract_strided_slice %5 {offsets = [2, 0], sizes = [1, 12], strides = [1, 1]} : vector<3x12xf32> to vector<1x12xf32>
    %202 = vector.broadcast %200 : vector<2x1xf32> to vector<2x12xf32>
    %203 = vector.broadcast %201 : vector<1x12xf32> to vector<2x12xf32>
    %204 = arith.mulf %202, %203 : vector<2x12xf32>
    %205 = arith.addf %199, %204 : vector<2x12xf32>
    %206 = arith.addf %188, %205 : vector<2x12xf32>
    %207 = vector.extract_strided_slice %206 {offsets = [0, 0], sizes = [2, 9], strides = [1, 1]} : vector<2x12xf32> to vector<2x9xf32>
    %208 = arith.negf %207 : vector<2x9xf32>
    %209 = math.exp %208 : vector<2x9xf32>
    %cst_17 = arith.constant 1.000000e+00 : f32
    %210 = vector.broadcast %cst_17 : f32 to vector<2x9xf32>
    %211 = arith.addf %210, %209 : vector<2x9xf32>
    %212 = arith.divf %210, %211 : vector<2x9xf32>
    %213 = vector.extract_strided_slice %206 {offsets = [0, 9], sizes = [2, 3], strides = [1, 1]} : vector<2x12xf32> to vector<2x3xf32>
    %214 = math.tanh %213 : vector<2x3xf32>
    %215 = vector.extract_strided_slice %212 {offsets = [0, 0], sizes = [2, 3], strides = [1, 1]} : vector<2x9xf32> to vector<2x3xf32>
    %216 = vector.extract_strided_slice %212 {offsets = [0, 3], sizes = [2, 3], strides = [1, 1]} : vector<2x9xf32> to vector<2x3xf32>
    %217 = vector.extract_strided_slice %212 {offsets = [0, 6], sizes = [2, 3], strides = [1, 1]} : vector<2x9xf32> to vector<2x3xf32>
    %218 = arith.mulf %216, %185 : vector<2x3xf32>
    %219 = arith.mulf %215, %214 : vector<2x3xf32>
    %220 = arith.addf %218, %219 : vector<2x3xf32>
    %221 = math.tanh %220 : vector<2x3xf32>
    %222 = arith.mulf %217, %221 : vector<2x3xf32>
    %223 = vector.extract_strided_slice %10 {offsets = [12, 0], sizes = [2, 12], strides = [1, 1]} : vector<16x12xf32> to vector<2x12xf32>
    %224 = vector.extract_strided_slice %222 {offsets = [0, 0], sizes = [2, 1], strides = [1, 1]} : vector<2x3xf32> to vector<2x1xf32>
    %225 = vector.extract_strided_slice %5 {offsets = [0, 0], sizes = [1, 12], strides = [1, 1]} : vector<3x12xf32> to vector<1x12xf32>
    %226 = vector.broadcast %224 : vector<2x1xf32> to vector<2x12xf32>
    %227 = vector.broadcast %225 : vector<1x12xf32> to vector<2x12xf32>
    %228 = arith.mulf %226, %227 : vector<2x12xf32>
    %229 = vector.extract_strided_slice %222 {offsets = [0, 1], sizes = [2, 1], strides = [1, 1]} : vector<2x3xf32> to vector<2x1xf32>
    %230 = vector.extract_strided_slice %5 {offsets = [1, 0], sizes = [1, 12], strides = [1, 1]} : vector<3x12xf32> to vector<1x12xf32>
    %231 = vector.broadcast %229 : vector<2x1xf32> to vector<2x12xf32>
    %232 = vector.broadcast %230 : vector<1x12xf32> to vector<2x12xf32>
    %233 = arith.mulf %231, %232 : vector<2x12xf32>
    %234 = arith.addf %228, %233 : vector<2x12xf32>
    %235 = vector.extract_strided_slice %222 {offsets = [0, 2], sizes = [2, 1], strides = [1, 1]} : vector<2x3xf32> to vector<2x1xf32>
    %236 = vector.extract_strided_slice %5 {offsets = [2, 0], sizes = [1, 12], strides = [1, 1]} : vector<3x12xf32> to vector<1x12xf32>
    %237 = vector.broadcast %235 : vector<2x1xf32> to vector<2x12xf32>
    %238 = vector.broadcast %236 : vector<1x12xf32> to vector<2x12xf32>
    %239 = arith.mulf %237, %238 : vector<2x12xf32>
    %240 = arith.addf %234, %239 : vector<2x12xf32>
    %241 = arith.addf %223, %240 : vector<2x12xf32>
    %242 = vector.extract_strided_slice %241 {offsets = [0, 0], sizes = [2, 9], strides = [1, 1]} : vector<2x12xf32> to vector<2x9xf32>
    %243 = arith.negf %242 : vector<2x9xf32>
    %244 = math.exp %243 : vector<2x9xf32>
    %cst_18 = arith.constant 1.000000e+00 : f32
    %245 = vector.broadcast %cst_18 : f32 to vector<2x9xf32>
    %246 = arith.addf %245, %244 : vector<2x9xf32>
    %247 = arith.divf %245, %246 : vector<2x9xf32>
    %248 = vector.extract_strided_slice %241 {offsets = [0, 9], sizes = [2, 3], strides = [1, 1]} : vector<2x12xf32> to vector<2x3xf32>
    %249 = math.tanh %248 : vector<2x3xf32>
    %250 = vector.extract_strided_slice %247 {offsets = [0, 0], sizes = [2, 3], strides = [1, 1]} : vector<2x9xf32> to vector<2x3xf32>
    %251 = vector.extract_strided_slice %247 {offsets = [0, 3], sizes = [2, 3], strides = [1, 1]} : vector<2x9xf32> to vector<2x3xf32>
    %252 = vector.extract_strided_slice %247 {offsets = [0, 6], sizes = [2, 3], strides = [1, 1]} : vector<2x9xf32> to vector<2x3xf32>
    %253 = arith.mulf %251, %220 : vector<2x3xf32>
    %254 = arith.mulf %250, %249 : vector<2x3xf32>
    %255 = arith.addf %253, %254 : vector<2x3xf32>
    %256 = math.tanh %255 : vector<2x3xf32>
    %257 = arith.mulf %252, %256 : vector<2x3xf32>
    %258 = vector.extract_strided_slice %10 {offsets = [14, 0], sizes = [2, 12], strides = [1, 1]} : vector<16x12xf32> to vector<2x12xf32>
    %259 = vector.extract_strided_slice %257 {offsets = [0, 0], sizes = [2, 1], strides = [1, 1]} : vector<2x3xf32> to vector<2x1xf32>
    %260 = vector.extract_strided_slice %5 {offsets = [0, 0], sizes = [1, 12], strides = [1, 1]} : vector<3x12xf32> to vector<1x12xf32>
    %261 = vector.broadcast %259 : vector<2x1xf32> to vector<2x12xf32>
    %262 = vector.broadcast %260 : vector<1x12xf32> to vector<2x12xf32>
    %263 = arith.mulf %261, %262 : vector<2x12xf32>
    %264 = vector.extract_strided_slice %257 {offsets = [0, 1], sizes = [2, 1], strides = [1, 1]} : vector<2x3xf32> to vector<2x1xf32>
    %265 = vector.extract_strided_slice %5 {offsets = [1, 0], sizes = [1, 12], strides = [1, 1]} : vector<3x12xf32> to vector<1x12xf32>
    %266 = vector.broadcast %264 : vector<2x1xf32> to vector<2x12xf32>
    %267 = vector.broadcast %265 : vector<1x12xf32> to vector<2x12xf32>
    %268 = arith.mulf %266, %267 : vector<2x12xf32>
    %269 = arith.addf %263, %268 : vector<2x12xf32>
    %270 = vector.extract_strided_slice %257 {offsets = [0, 2], sizes = [2, 1], strides = [1, 1]} : vector<2x3xf32> to vector<2x1xf32>
    %271 = vector.extract_strided_slice %5 {offsets = [2, 0], sizes = [1, 12], strides = [1, 1]} : vector<3x12xf32> to vector<1x12xf32>
    %272 = vector.broadcast %270 : vector<2x1xf32> to vector<2x12xf32>
    %273 = vector.broadcast %271 : vector<1x12xf32> to vector<2x12xf32>
    %274 = arith.mulf %272, %273 : vector<2x12xf32>
    %275 = arith.addf %269, %274 : vector<2x12xf32>
    %276 = arith.addf %258, %275 : vector<2x12xf32>
    %277 = vector.extract_strided_slice %276 {offsets = [0, 0], sizes = [2, 9], strides = [1, 1]} : vector<2x12xf32> to vector<2x9xf32>
    %278 = arith.negf %277 : vector<2x9xf32>
    %279 = math.exp %278 : vector<2x9xf32>
    %cst_19 = arith.constant 1.000000e+00 : f32
    %280 = vector.broadcast %cst_19 : f32 to vector<2x9xf32>
    %281 = arith.addf %280, %279 : vector<2x9xf32>
    %282 = arith.divf %280, %281 : vector<2x9xf32>
    %283 = vector.extract_strided_slice %276 {offsets = [0, 9], sizes = [2, 3], strides = [1, 1]} : vector<2x12xf32> to vector<2x3xf32>
    %284 = math.tanh %283 : vector<2x3xf32>
    %285 = vector.extract_strided_slice %282 {offsets = [0, 0], sizes = [2, 3], strides = [1, 1]} : vector<2x9xf32> to vector<2x3xf32>
    %286 = vector.extract_strided_slice %282 {offsets = [0, 3], sizes = [2, 3], strides = [1, 1]} : vector<2x9xf32> to vector<2x3xf32>
    %287 = vector.extract_strided_slice %282 {offsets = [0, 6], sizes = [2, 3], strides = [1, 1]} : vector<2x9xf32> to vector<2x3xf32>
    %288 = arith.mulf %286, %255 : vector<2x3xf32>
    %289 = arith.mulf %285, %284 : vector<2x3xf32>
    %290 = arith.addf %288, %289 : vector<2x3xf32>
    %291 = math.tanh %290 : vector<2x3xf32>
    %292 = arith.mulf %287, %291 : vector<2x3xf32>
    %293 = tpu.concatenate %47, %82, %117, %152, %187, %222, %257, %292 in 0 : vector<2x3xf32>, vector<2x3xf32>, vector<2x3xf32>, vector<2x3xf32>, vector<2x3xf32>, vector<2x3xf32>, vector<2x3xf32>, vector<2x3xf32> -> vector<16x3xf32>
    %c1 = arith.constant 1 : index
    %c0_20 = arith.constant 0 : index
    %c0_21 = arith.constant 0 : index
    %294 = vector.load %arg1[%c1, %c0_20, %c0_21] : memref<5x3x12xf32, #tpu.memory_space<vmem>>, vector<1x3x12xf32>
    %295 = vector.shape_cast %294 : vector<1x3x12xf32> to vector<3x12xf32>
    %c1_22 = arith.constant 1 : index
    %c0_23 = arith.constant 0 : index
    %c0_24 = arith.constant 0 : index
    %296 = vector.load %arg2[%c1_22, %c0_23, %c0_24] : memref<5x3x12xf32, #tpu.memory_space<vmem>>, vector<1x3x12xf32>
    %297 = vector.shape_cast %296 : vector<1x3x12xf32> to vector<3x12xf32>
    %c1_25 = arith.constant 1 : index
    %c0_26 = arith.constant 0 : index
    %c0_27 = arith.constant 0 : index
    %298 = vector.load %arg3[%c1_25, %c0_26, %c0_27] : memref<5x1x12xf32, #tpu.memory_space<vmem>>, vector<1x1x12xf32>
    %299 = vector.shape_cast %298 : vector<1x1x12xf32> to vector<1x12xf32>
    %cst_28 = arith.constant dense<0.000000e+00> : vector<16x12xf32>
    %300 = tpu.matmul %293, %295, %cst_28 {dimension_numbers = #tpu.dot_dimension_numbers<[1], [0], [0], [1], [0, 0, 1, 1], [], []>} : vector<16x3xf32>, vector<3x12xf32>, vector<16x12xf32> -> vector<16x12xf32>
    %301 = vector.broadcast %299 : vector<1x12xf32> to vector<16x12xf32>
    %302 = arith.addf %300, %301 : vector<16x12xf32>
    %cst_29 = arith.constant 0.000000e+00 : f32
    %303 = vector.broadcast %cst_29 : f32 to vector<2x3xf32>
    %cst_30 = arith.constant 0.000000e+00 : f32
    %304 = vector.broadcast %cst_30 : f32 to vector<2x3xf32>
    %305 = vector.extract_strided_slice %302 {offsets = [0, 0], sizes = [2, 12], strides = [1, 1]} : vector<16x12xf32> to vector<2x12xf32>
    %306 = vector.extract_strided_slice %303 {offsets = [0, 0], sizes = [2, 1], strides = [1, 1]} : vector<2x3xf32> to vector<2x1xf32>
    %307 = vector.extract_strided_slice %297 {offsets = [0, 0], sizes = [1, 12], strides = [1, 1]} : vector<3x12xf32> to vector<1x12xf32>
    %308 = vector.broadcast %306 : vector<2x1xf32> to vector<2x12xf32>
    %309 = vector.broadcast %307 : vector<1x12xf32> to vector<2x12xf32>
    %310 = arith.mulf %308, %309 : vector<2x12xf32>
    %311 = vector.extract_strided_slice %303 {offsets = [0, 1], sizes = [2, 1], strides = [1, 1]} : vector<2x3xf32> to vector<2x1xf32>
    %312 = vector.extract_strided_slice %297 {offsets = [1, 0], sizes = [1, 12], strides = [1, 1]} : vector<3x12xf32> to vector<1x12xf32>
    %313 = vector.broadcast %311 : vector<2x1xf32> to vector<2x12xf32>
    %314 = vector.broadcast %312 : vector<1x12xf32> to vector<2x12xf32>
    %315 = arith.mulf %313, %314 : vector<2x12xf32>
    %316 = arith.addf %310, %315 : vector<2x12xf32>
    %317 = vector.extract_strided_slice %303 {offsets = [0, 2], sizes = [2, 1], strides = [1, 1]} : vector<2x3xf32> to vector<2x1xf32>
    %318 = vector.extract_strided_slice %297 {offsets = [2, 0], sizes = [1, 12], strides = [1, 1]} : vector<3x12xf32> to vector<1x12xf32>
    %319 = vector.broadcast %317 : vector<2x1xf32> to vector<2x12xf32>
    %320 = vector.broadcast %318 : vector<1x12xf32> to vector<2x12xf32>
    %321 = arith.mulf %319, %320 : vector<2x12xf32>
    %322 = arith.addf %316, %321 : vector<2x12xf32>
    %323 = arith.addf %305, %322 : vector<2x12xf32>
    %324 = vector.extract_strided_slice %323 {offsets = [0, 0], sizes = [2, 9], strides = [1, 1]} : vector<2x12xf32> to vector<2x9xf32>
    %325 = arith.negf %324 : vector<2x9xf32>
    %326 = math.exp %325 : vector<2x9xf32>
    %cst_31 = arith.constant 1.000000e+00 : f32
    %327 = vector.broadcast %cst_31 : f32 to vector<2x9xf32>
    %328 = arith.addf %327, %326 : vector<2x9xf32>
    %329 = arith.divf %327, %328 : vector<2x9xf32>
    %330 = vector.extract_strided_slice %323 {offsets = [0, 9], sizes = [2, 3], strides = [1, 1]} : vector<2x12xf32> to vector<2x3xf32>
    %331 = math.tanh %330 : vector<2x3xf32>
    %332 = vector.extract_strided_slice %329 {offsets = [0, 0], sizes = [2, 3], strides = [1, 1]} : vector<2x9xf32> to vector<2x3xf32>
    %333 = vector.extract_strided_slice %329 {offsets = [0, 3], sizes = [2, 3], strides = [1, 1]} : vector<2x9xf32> to vector<2x3xf32>
    %334 = vector.extract_strided_slice %329 {offsets = [0, 6], sizes = [2, 3], strides = [1, 1]} : vector<2x9xf32> to vector<2x3xf32>
    %335 = arith.mulf %333, %304 : vector<2x3xf32>
    %336 = arith.mulf %332, %331 : vector<2x3xf32>
    %337 = arith.addf %335, %336 : vector<2x3xf32>
    %338 = math.tanh %337 : vector<2x3xf32>
    %339 = arith.mulf %334, %338 : vector<2x3xf32>
    %340 = vector.extract_strided_slice %302 {offsets = [2, 0], sizes = [2, 12], strides = [1, 1]} : vector<16x12xf32> to vector<2x12xf32>
    %341 = vector.extract_strided_slice %339 {offsets = [0, 0], sizes = [2, 1], strides = [1, 1]} : vector<2x3xf32> to vector<2x1xf32>
    %342 = vector.extract_strided_slice %297 {offsets = [0, 0], sizes = [1, 12], strides = [1, 1]} : vector<3x12xf32> to vector<1x12xf32>
    %343 = vector.broadcast %341 : vector<2x1xf32> to vector<2x12xf32>
    %344 = vector.broadcast %342 : vector<1x12xf32> to vector<2x12xf32>
    %345 = arith.mulf %343, %344 : vector<2x12xf32>
    %346 = vector.extract_strided_slice %339 {offsets = [0, 1], sizes = [2, 1], strides = [1, 1]} : vector<2x3xf32> to vector<2x1xf32>
    %347 = vector.extract_strided_slice %297 {offsets = [1, 0], sizes = [1, 12], strides = [1, 1]} : vector<3x12xf32> to vector<1x12xf32>
    %348 = vector.broadcast %346 : vector<2x1xf32> to vector<2x12xf32>
    %349 = vector.broadcast %347 : vector<1x12xf32> to vector<2x12xf32>
    %350 = arith.mulf %348, %349 : vector<2x12xf32>
    %351 = arith.addf %345, %350 : vector<2x12xf32>
    %352 = vector.extract_strided_slice %339 {offsets = [0, 2], sizes = [2, 1], strides = [1, 1]} : vector<2x3xf32> to vector<2x1xf32>
    %353 = vector.extract_strided_slice %297 {offsets = [2, 0], sizes = [1, 12], strides = [1, 1]} : vector<3x12xf32> to vector<1x12xf32>
    %354 = vector.broadcast %352 : vector<2x1xf32> to vector<2x12xf32>
    %355 = vector.broadcast %353 : vector<1x12xf32> to vector<2x12xf32>
    %356 = arith.mulf %354, %355 : vector<2x12xf32>
    %357 = arith.addf %351, %356 : vector<2x12xf32>
    %358 = arith.addf %340, %357 : vector<2x12xf32>
    %359 = vector.extract_strided_slice %358 {offsets = [0, 0], sizes = [2, 9], strides = [1, 1]} : vector<2x12xf32> to vector<2x9xf32>
    %360 = arith.negf %359 : vector<2x9xf32>
    %361 = math.exp %360 : vector<2x9xf32>
    %cst_32 = arith.constant 1.000000e+00 : f32
    %362 = vector.broadcast %cst_32 : f32 to vector<2x9xf32>
    %363 = arith.addf %362, %361 : vector<2x9xf32>
    %364 = arith.divf %362, %363 : vector<2x9xf32>
    %365 = vector.extract_strided_slice %358 {offsets = [0, 9], sizes = [2, 3], strides = [1, 1]} : vector<2x12xf32> to vector<2x3xf32>
    %366 = math.tanh %365 : vector<2x3xf32>
    %367 = vector.extract_strided_slice %364 {offsets = [0, 0], sizes = [2, 3], strides = [1, 1]} : vector<2x9xf32> to vector<2x3xf32>
    %368 = vector.extract_strided_slice %364 {offsets = [0, 3], sizes = [2, 3], strides = [1, 1]} : vector<2x9xf32> to vector<2x3xf32>
    %369 = vector.extract_strided_slice %364 {offsets = [0, 6], sizes = [2, 3], strides = [1, 1]} : vector<2x9xf32> to vector<2x3xf32>
    %370 = arith.mulf %368, %337 : vector<2x3xf32>
    %371 = arith.mulf %367, %366 : vector<2x3xf32>
    %372 = arith.addf %370, %371 : vector<2x3xf32>
    %373 = math.tanh %372 : vector<2x3xf32>
    %374 = arith.mulf %369, %373 : vector<2x3xf32>
    %375 = vector.extract_strided_slice %302 {offsets = [4, 0], sizes = [2, 12], strides = [1, 1]} : vector<16x12xf32> to vector<2x12xf32>
    %376 = vector.extract_strided_slice %374 {offsets = [0, 0], sizes = [2, 1], strides = [1, 1]} : vector<2x3xf32> to vector<2x1xf32>
    %377 = vector.extract_strided_slice %297 {offsets = [0, 0], sizes = [1, 12], strides = [1, 1]} : vector<3x12xf32> to vector<1x12xf32>
    %378 = vector.broadcast %376 : vector<2x1xf32> to vector<2x12xf32>
    %379 = vector.broadcast %377 : vector<1x12xf32> to vector<2x12xf32>
    %380 = arith.mulf %378, %379 : vector<2x12xf32>
    %381 = vector.extract_strided_slice %374 {offsets = [0, 1], sizes = [2, 1], strides = [1, 1]} : vector<2x3xf32> to vector<2x1xf32>
    %382 = vector.extract_strided_slice %297 {offsets = [1, 0], sizes = [1, 12], strides = [1, 1]} : vector<3x12xf32> to vector<1x12xf32>
    %383 = vector.broadcast %381 : vector<2x1xf32> to vector<2x12xf32>
    %384 = vector.broadcast %382 : vector<1x12xf32> to vector<2x12xf32>
    %385 = arith.mulf %383, %384 : vector<2x12xf32>
    %386 = arith.addf %380, %385 : vector<2x12xf32>
    %387 = vector.extract_strided_slice %374 {offsets = [0, 2], sizes = [2, 1], strides = [1, 1]} : vector<2x3xf32> to vector<2x1xf32>
    %388 = vector.extract_strided_slice %297 {offsets = [2, 0], sizes = [1, 12], strides = [1, 1]} : vector<3x12xf32> to vector<1x12xf32>
    %389 = vector.broadcast %387 : vector<2x1xf32> to vector<2x12xf32>
    %390 = vector.broadcast %388 : vector<1x12xf32> to vector<2x12xf32>
    %391 = arith.mulf %389, %390 : vector<2x12xf32>
    %392 = arith.addf %386, %391 : vector<2x12xf32>
    %393 = arith.addf %375, %392 : vector<2x12xf32>
    %394 = vector.extract_strided_slice %393 {offsets = [0, 0], sizes = [2, 9], strides = [1, 1]} : vector<2x12xf32> to vector<2x9xf32>
    %395 = arith.negf %394 : vector<2x9xf32>
    %396 = math.exp %395 : vector<2x9xf32>
    %cst_33 = arith.constant 1.000000e+00 : f32
    %397 = vector.broadcast %cst_33 : f32 to vector<2x9xf32>
    %398 = arith.addf %397, %396 : vector<2x9xf32>
    %399 = arith.divf %397, %398 : vector<2x9xf32>
    %400 = vector.extract_strided_slice %393 {offsets = [0, 9], sizes = [2, 3], strides = [1, 1]} : vector<2x12xf32> to vector<2x3xf32>
    %401 = math.tanh %400 : vector<2x3xf32>
    %402 = vector.extract_strided_slice %399 {offsets = [0, 0], sizes = [2, 3], strides = [1, 1]} : vector<2x9xf32> to vector<2x3xf32>
    %403 = vector.extract_strided_slice %399 {offsets = [0, 3], sizes = [2, 3], strides = [1, 1]} : vector<2x9xf32> to vector<2x3xf32>
    %404 = vector.extract_strided_slice %399 {offsets = [0, 6], sizes = [2, 3], strides = [1, 1]} : vector<2x9xf32> to vector<2x3xf32>
    %405 = arith.mulf %403, %372 : vector<2x3xf32>
    %406 = arith.mulf %402, %401 : vector<2x3xf32>
    %407 = arith.addf %405, %406 : vector<2x3xf32>
    %408 = math.tanh %407 : vector<2x3xf32>
    %409 = arith.mulf %404, %408 : vector<2x3xf32>
    %410 = vector.extract_strided_slice %302 {offsets = [6, 0], sizes = [2, 12], strides = [1, 1]} : vector<16x12xf32> to vector<2x12xf32>
    %411 = vector.extract_strided_slice %409 {offsets = [0, 0], sizes = [2, 1], strides = [1, 1]} : vector<2x3xf32> to vector<2x1xf32>
    %412 = vector.extract_strided_slice %297 {offsets = [0, 0], sizes = [1, 12], strides = [1, 1]} : vector<3x12xf32> to vector<1x12xf32>
    %413 = vector.broadcast %411 : vector<2x1xf32> to vector<2x12xf32>
    %414 = vector.broadcast %412 : vector<1x12xf32> to vector<2x12xf32>
    %415 = arith.mulf %413, %414 : vector<2x12xf32>
    %416 = vector.extract_strided_slice %409 {offsets = [0, 1], sizes = [2, 1], strides = [1, 1]} : vector<2x3xf32> to vector<2x1xf32>
    %417 = vector.extract_strided_slice %297 {offsets = [1, 0], sizes = [1, 12], strides = [1, 1]} : vector<3x12xf32> to vector<1x12xf32>
    %418 = vector.broadcast %416 : vector<2x1xf32> to vector<2x12xf32>
    %419 = vector.broadcast %417 : vector<1x12xf32> to vector<2x12xf32>
    %420 = arith.mulf %418, %419 : vector<2x12xf32>
    %421 = arith.addf %415, %420 : vector<2x12xf32>
    %422 = vector.extract_strided_slice %409 {offsets = [0, 2], sizes = [2, 1], strides = [1, 1]} : vector<2x3xf32> to vector<2x1xf32>
    %423 = vector.extract_strided_slice %297 {offsets = [2, 0], sizes = [1, 12], strides = [1, 1]} : vector<3x12xf32> to vector<1x12xf32>
    %424 = vector.broadcast %422 : vector<2x1xf32> to vector<2x12xf32>
    %425 = vector.broadcast %423 : vector<1x12xf32> to vector<2x12xf32>
    %426 = arith.mulf %424, %425 : vector<2x12xf32>
    %427 = arith.addf %421, %426 : vector<2x12xf32>
    %428 = arith.addf %410, %427 : vector<2x12xf32>
    %429 = vector.extract_strided_slice %428 {offsets = [0, 0], sizes = [2, 9], strides = [1, 1]} : vector<2x12xf32> to vector<2x9xf32>
    %430 = arith.negf %429 : vector<2x9xf32>
    %431 = math.exp %430 : vector<2x9xf32>
    %cst_34 = arith.constant 1.000000e+00 : f32
    %432 = vector.broadcast %cst_34 : f32 to vector<2x9xf32>
    %433 = arith.addf %432, %431 : vector<2x9xf32>
    %434 = arith.divf %432, %433 : vector<2x9xf32>
    %435 = vector.extract_strided_slice %428 {offsets = [0, 9], sizes = [2, 3], strides = [1, 1]} : vector<2x12xf32> to vector<2x3xf32>
    %436 = math.tanh %435 : vector<2x3xf32>
    %437 = vector.extract_strided_slice %434 {offsets = [0, 0], sizes = [2, 3], strides = [1, 1]} : vector<2x9xf32> to vector<2x3xf32>
    %438 = vector.extract_strided_slice %434 {offsets = [0, 3], sizes = [2, 3], strides = [1, 1]} : vector<2x9xf32> to vector<2x3xf32>
    %439 = vector.extract_strided_slice %434 {offsets = [0, 6], sizes = [2, 3], strides = [1, 1]} : vector<2x9xf32> to vector<2x3xf32>
    %440 = arith.mulf %438, %407 : vector<2x3xf32>
    %441 = arith.mulf %437, %436 : vector<2x3xf32>
    %442 = arith.addf %440, %441 : vector<2x3xf32>
    %443 = math.tanh %442 : vector<2x3xf32>
    %444 = arith.mulf %439, %443 : vector<2x3xf32>
    %445 = vector.extract_strided_slice %302 {offsets = [8, 0], sizes = [2, 12], strides = [1, 1]} : vector<16x12xf32> to vector<2x12xf32>
    %446 = vector.extract_strided_slice %444 {offsets = [0, 0], sizes = [2, 1], strides = [1, 1]} : vector<2x3xf32> to vector<2x1xf32>
    %447 = vector.extract_strided_slice %297 {offsets = [0, 0], sizes = [1, 12], strides = [1, 1]} : vector<3x12xf32> to vector<1x12xf32>
    %448 = vector.broadcast %446 : vector<2x1xf32> to vector<2x12xf32>
    %449 = vector.broadcast %447 : vector<1x12xf32> to vector<2x12xf32>
    %450 = arith.mulf %448, %449 : vector<2x12xf32>
    %451 = vector.extract_strided_slice %444 {offsets = [0, 1], sizes = [2, 1], strides = [1, 1]} : vector<2x3xf32> to vector<2x1xf32>
    %452 = vector.extract_strided_slice %297 {offsets = [1, 0], sizes = [1, 12], strides = [1, 1]} : vector<3x12xf32> to vector<1x12xf32>
    %453 = vector.broadcast %451 : vector<2x1xf32> to vector<2x12xf32>
    %454 = vector.broadcast %452 : vector<1x12xf32> to vector<2x12xf32>
    %455 = arith.mulf %453, %454 : vector<2x12xf32>
    %456 = arith.addf %450, %455 : vector<2x12xf32>
    %457 = vector.extract_strided_slice %444 {offsets = [0, 2], sizes = [2, 1], strides = [1, 1]} : vector<2x3xf32> to vector<2x1xf32>
    %458 = vector.extract_strided_slice %297 {offsets = [2, 0], sizes = [1, 12], strides = [1, 1]} : vector<3x12xf32> to vector<1x12xf32>
    %459 = vector.broadcast %457 : vector<2x1xf32> to vector<2x12xf32>
    %460 = vector.broadcast %458 : vector<1x12xf32> to vector<2x12xf32>
    %461 = arith.mulf %459, %460 : vector<2x12xf32>
    %462 = arith.addf %456, %461 : vector<2x12xf32>
    %463 = arith.addf %445, %462 : vector<2x12xf32>
    %464 = vector.extract_strided_slice %463 {offsets = [0, 0], sizes = [2, 9], strides = [1, 1]} : vector<2x12xf32> to vector<2x9xf32>
    %465 = arith.negf %464 : vector<2x9xf32>
    %466 = math.exp %465 : vector<2x9xf32>
    %cst_35 = arith.constant 1.000000e+00 : f32
    %467 = vector.broadcast %cst_35 : f32 to vector<2x9xf32>
    %468 = arith.addf %467, %466 : vector<2x9xf32>
    %469 = arith.divf %467, %468 : vector<2x9xf32>
    %470 = vector.extract_strided_slice %463 {offsets = [0, 9], sizes = [2, 3], strides = [1, 1]} : vector<2x12xf32> to vector<2x3xf32>
    %471 = math.tanh %470 : vector<2x3xf32>
    %472 = vector.extract_strided_slice %469 {offsets = [0, 0], sizes = [2, 3], strides = [1, 1]} : vector<2x9xf32> to vector<2x3xf32>
    %473 = vector.extract_strided_slice %469 {offsets = [0, 3], sizes = [2, 3], strides = [1, 1]} : vector<2x9xf32> to vector<2x3xf32>
    %474 = vector.extract_strided_slice %469 {offsets = [0, 6], sizes = [2, 3], strides = [1, 1]} : vector<2x9xf32> to vector<2x3xf32>
    %475 = arith.mulf %473, %442 : vector<2x3xf32>
    %476 = arith.mulf %472, %471 : vector<2x3xf32>
    %477 = arith.addf %475, %476 : vector<2x3xf32>
    %478 = math.tanh %477 : vector<2x3xf32>
    %479 = arith.mulf %474, %478 : vector<2x3xf32>
    %480 = vector.extract_strided_slice %302 {offsets = [10, 0], sizes = [2, 12], strides = [1, 1]} : vector<16x12xf32> to vector<2x12xf32>
    %481 = vector.extract_strided_slice %479 {offsets = [0, 0], sizes = [2, 1], strides = [1, 1]} : vector<2x3xf32> to vector<2x1xf32>
    %482 = vector.extract_strided_slice %297 {offsets = [0, 0], sizes = [1, 12], strides = [1, 1]} : vector<3x12xf32> to vector<1x12xf32>
    %483 = vector.broadcast %481 : vector<2x1xf32> to vector<2x12xf32>
    %484 = vector.broadcast %482 : vector<1x12xf32> to vector<2x12xf32>
    %485 = arith.mulf %483, %484 : vector<2x12xf32>
    %486 = vector.extract_strided_slice %479 {offsets = [0, 1], sizes = [2, 1], strides = [1, 1]} : vector<2x3xf32> to vector<2x1xf32>
    %487 = vector.extract_strided_slice %297 {offsets = [1, 0], sizes = [1, 12], strides = [1, 1]} : vector<3x12xf32> to vector<1x12xf32>
    %488 = vector.broadcast %486 : vector<2x1xf32> to vector<2x12xf32>
    %489 = vector.broadcast %487 : vector<1x12xf32> to vector<2x12xf32>
    %490 = arith.mulf %488, %489 : vector<2x12xf32>
    %491 = arith.addf %485, %490 : vector<2x12xf32>
    %492 = vector.extract_strided_slice %479 {offsets = [0, 2], sizes = [2, 1], strides = [1, 1]} : vector<2x3xf32> to vector<2x1xf32>
    %493 = vector.extract_strided_slice %297 {offsets = [2, 0], sizes = [1, 12], strides = [1, 1]} : vector<3x12xf32> to vector<1x12xf32>
    %494 = vector.broadcast %492 : vector<2x1xf32> to vector<2x12xf32>
    %495 = vector.broadcast %493 : vector<1x12xf32> to vector<2x12xf32>
    %496 = arith.mulf %494, %495 : vector<2x12xf32>
    %497 = arith.addf %491, %496 : vector<2x12xf32>
    %498 = arith.addf %480, %497 : vector<2x12xf32>
    %499 = vector.extract_strided_slice %498 {offsets = [0, 0], sizes = [2, 9], strides = [1, 1]} : vector<2x12xf32> to vector<2x9xf32>
    %500 = arith.negf %499 : vector<2x9xf32>
    %501 = math.exp %500 : vector<2x9xf32>
    %cst_36 = arith.constant 1.000000e+00 : f32
    %502 = vector.broadcast %cst_36 : f32 to vector<2x9xf32>
    %503 = arith.addf %502, %501 : vector<2x9xf32>
    %504 = arith.divf %502, %503 : vector<2x9xf32>
    %505 = vector.extract_strided_slice %498 {offsets = [0, 9], sizes = [2, 3], strides = [1, 1]} : vector<2x12xf32> to vector<2x3xf32>
    %506 = math.tanh %505 : vector<2x3xf32>
    %507 = vector.extract_strided_slice %504 {offsets = [0, 0], sizes = [2, 3], strides = [1, 1]} : vector<2x9xf32> to vector<2x3xf32>
    %508 = vector.extract_strided_slice %504 {offsets = [0, 3], sizes = [2, 3], strides = [1, 1]} : vector<2x9xf32> to vector<2x3xf32>
    %509 = vector.extract_strided_slice %504 {offsets = [0, 6], sizes = [2, 3], strides = [1, 1]} : vector<2x9xf32> to vector<2x3xf32>
    %510 = arith.mulf %508, %477 : vector<2x3xf32>
    %511 = arith.mulf %507, %506 : vector<2x3xf32>
    %512 = arith.addf %510, %511 : vector<2x3xf32>
    %513 = math.tanh %512 : vector<2x3xf32>
    %514 = arith.mulf %509, %513 : vector<2x3xf32>
    %515 = vector.extract_strided_slice %302 {offsets = [12, 0], sizes = [2, 12], strides = [1, 1]} : vector<16x12xf32> to vector<2x12xf32>
    %516 = vector.extract_strided_slice %514 {offsets = [0, 0], sizes = [2, 1], strides = [1, 1]} : vector<2x3xf32> to vector<2x1xf32>
    %517 = vector.extract_strided_slice %297 {offsets = [0, 0], sizes = [1, 12], strides = [1, 1]} : vector<3x12xf32> to vector<1x12xf32>
    %518 = vector.broadcast %516 : vector<2x1xf32> to vector<2x12xf32>
    %519 = vector.broadcast %517 : vector<1x12xf32> to vector<2x12xf32>
    %520 = arith.mulf %518, %519 : vector<2x12xf32>
    %521 = vector.extract_strided_slice %514 {offsets = [0, 1], sizes = [2, 1], strides = [1, 1]} : vector<2x3xf32> to vector<2x1xf32>
    %522 = vector.extract_strided_slice %297 {offsets = [1, 0], sizes = [1, 12], strides = [1, 1]} : vector<3x12xf32> to vector<1x12xf32>
    %523 = vector.broadcast %521 : vector<2x1xf32> to vector<2x12xf32>
    %524 = vector.broadcast %522 : vector<1x12xf32> to vector<2x12xf32>
    %525 = arith.mulf %523, %524 : vector<2x12xf32>
    %526 = arith.addf %520, %525 : vector<2x12xf32>
    %527 = vector.extract_strided_slice %514 {offsets = [0, 2], sizes = [2, 1], strides = [1, 1]} : vector<2x3xf32> to vector<2x1xf32>
    %528 = vector.extract_strided_slice %297 {offsets = [2, 0], sizes = [1, 12], strides = [1, 1]} : vector<3x12xf32> to vector<1x12xf32>
    %529 = vector.broadcast %527 : vector<2x1xf32> to vector<2x12xf32>
    %530 = vector.broadcast %528 : vector<1x12xf32> to vector<2x12xf32>
    %531 = arith.mulf %529, %530 : vector<2x12xf32>
    %532 = arith.addf %526, %531 : vector<2x12xf32>
    %533 = arith.addf %515, %532 : vector<2x12xf32>
    %534 = vector.extract_strided_slice %533 {offsets = [0, 0], sizes = [2, 9], strides = [1, 1]} : vector<2x12xf32> to vector<2x9xf32>
    %535 = arith.negf %534 : vector<2x9xf32>
    %536 = math.exp %535 : vector<2x9xf32>
    %cst_37 = arith.constant 1.000000e+00 : f32
    %537 = vector.broadcast %cst_37 : f32 to vector<2x9xf32>
    %538 = arith.addf %537, %536 : vector<2x9xf32>
    %539 = arith.divf %537, %538 : vector<2x9xf32>
    %540 = vector.extract_strided_slice %533 {offsets = [0, 9], sizes = [2, 3], strides = [1, 1]} : vector<2x12xf32> to vector<2x3xf32>
    %541 = math.tanh %540 : vector<2x3xf32>
    %542 = vector.extract_strided_slice %539 {offsets = [0, 0], sizes = [2, 3], strides = [1, 1]} : vector<2x9xf32> to vector<2x3xf32>
    %543 = vector.extract_strided_slice %539 {offsets = [0, 3], sizes = [2, 3], strides = [1, 1]} : vector<2x9xf32> to vector<2x3xf32>
    %544 = vector.extract_strided_slice %539 {offsets = [0, 6], sizes = [2, 3], strides = [1, 1]} : vector<2x9xf32> to vector<2x3xf32>
    %545 = arith.mulf %543, %512 : vector<2x3xf32>
    %546 = arith.mulf %542, %541 : vector<2x3xf32>
    %547 = arith.addf %545, %546 : vector<2x3xf32>
    %548 = math.tanh %547 : vector<2x3xf32>
    %549 = arith.mulf %544, %548 : vector<2x3xf32>
    %550 = vector.extract_strided_slice %302 {offsets = [14, 0], sizes = [2, 12], strides = [1, 1]} : vector<16x12xf32> to vector<2x12xf32>
    %551 = vector.extract_strided_slice %549 {offsets = [0, 0], sizes = [2, 1], strides = [1, 1]} : vector<2x3xf32> to vector<2x1xf32>
    %552 = vector.extract_strided_slice %297 {offsets = [0, 0], sizes = [1, 12], strides = [1, 1]} : vector<3x12xf32> to vector<1x12xf32>
    %553 = vector.broadcast %551 : vector<2x1xf32> to vector<2x12xf32>
    %554 = vector.broadcast %552 : vector<1x12xf32> to vector<2x12xf32>
    %555 = arith.mulf %553, %554 : vector<2x12xf32>
    %556 = vector.extract_strided_slice %549 {offsets = [0, 1], sizes = [2, 1], strides = [1, 1]} : vector<2x3xf32> to vector<2x1xf32>
    %557 = vector.extract_strided_slice %297 {offsets = [1, 0], sizes = [1, 12], strides = [1, 1]} : vector<3x12xf32> to vector<1x12xf32>
    %558 = vector.broadcast %556 : vector<2x1xf32> to vector<2x12xf32>
    %559 = vector.broadcast %557 : vector<1x12xf32> to vector<2x12xf32>
    %560 = arith.mulf %558, %559 : vector<2x12xf32>
    %561 = arith.addf %555, %560 : vector<2x12xf32>
    %562 = vector.extract_strided_slice %549 {offsets = [0, 2], sizes = [2, 1], strides = [1, 1]} : vector<2x3xf32> to vector<2x1xf32>
    %563 = vector.extract_strided_slice %297 {offsets = [2, 0], sizes = [1, 12], strides = [1, 1]} : vector<3x12xf32> to vector<1x12xf32>
    %564 = vector.broadcast %562 : vector<2x1xf32> to vector<2x12xf32>
    %565 = vector.broadcast %563 : vector<1x12xf32> to vector<2x12xf32>
    %566 = arith.mulf %564, %565 : vector<2x12xf32>
    %567 = arith.addf %561, %566 : vector<2x12xf32>
    %568 = arith.addf %550, %567 : vector<2x12xf32>
    %569 = vector.extract_strided_slice %568 {offsets = [0, 0], sizes = [2, 9], strides = [1, 1]} : vector<2x12xf32> to vector<2x9xf32>
    %570 = arith.negf %569 : vector<2x9xf32>
    %571 = math.exp %570 : vector<2x9xf32>
    %cst_38 = arith.constant 1.000000e+00 : f32
    %572 = vector.broadcast %cst_38 : f32 to vector<2x9xf32>
    %573 = arith.addf %572, %571 : vector<2x9xf32>
    %574 = arith.divf %572, %573 : vector<2x9xf32>
    %575 = vector.extract_strided_slice %568 {offsets = [0, 9], sizes = [2, 3], strides = [1, 1]} : vector<2x12xf32> to vector<2x3xf32>
    %576 = math.tanh %575 : vector<2x3xf32>
    %577 = vector.extract_strided_slice %574 {offsets = [0, 0], sizes = [2, 3], strides = [1, 1]} : vector<2x9xf32> to vector<2x3xf32>
    %578 = vector.extract_strided_slice %574 {offsets = [0, 3], sizes = [2, 3], strides = [1, 1]} : vector<2x9xf32> to vector<2x3xf32>
    %579 = vector.extract_strided_slice %574 {offsets = [0, 6], sizes = [2, 3], strides = [1, 1]} : vector<2x9xf32> to vector<2x3xf32>
    %580 = arith.mulf %578, %547 : vector<2x3xf32>
    %581 = arith.mulf %577, %576 : vector<2x3xf32>
    %582 = arith.addf %580, %581 : vector<2x3xf32>
    %583 = math.tanh %582 : vector<2x3xf32>
    %584 = arith.mulf %579, %583 : vector<2x3xf32>
    %585 = tpu.concatenate %339, %374, %409, %444, %479, %514, %549, %584 in 0 : vector<2x3xf32>, vector<2x3xf32>, vector<2x3xf32>, vector<2x3xf32>, vector<2x3xf32>, vector<2x3xf32>, vector<2x3xf32>, vector<2x3xf32> -> vector<16x3xf32>
    %c2 = arith.constant 2 : index
    %c0_39 = arith.constant 0 : index
    %c0_40 = arith.constant 0 : index
    %586 = vector.load %arg1[%c2, %c0_39, %c0_40] : memref<5x3x12xf32, #tpu.memory_space<vmem>>, vector<1x3x12xf32>
    %587 = vector.shape_cast %586 : vector<1x3x12xf32> to vector<3x12xf32>
    %c2_41 = arith.constant 2 : index
    %c0_42 = arith.constant 0 : index
    %c0_43 = arith.constant 0 : index
    %588 = vector.load %arg2[%c2_41, %c0_42, %c0_43] : memref<5x3x12xf32, #tpu.memory_space<vmem>>, vector<1x3x12xf32>
    %589 = vector.shape_cast %588 : vector<1x3x12xf32> to vector<3x12xf32>
    %c2_44 = arith.constant 2 : index
    %c0_45 = arith.constant 0 : index
    %c0_46 = arith.constant 0 : index
    %590 = vector.load %arg3[%c2_44, %c0_45, %c0_46] : memref<5x1x12xf32, #tpu.memory_space<vmem>>, vector<1x1x12xf32>
    %591 = vector.shape_cast %590 : vector<1x1x12xf32> to vector<1x12xf32>
    %cst_47 = arith.constant dense<0.000000e+00> : vector<16x12xf32>
    %592 = tpu.matmul %585, %587, %cst_47 {dimension_numbers = #tpu.dot_dimension_numbers<[1], [0], [0], [1], [0, 0, 1, 1], [], []>} : vector<16x3xf32>, vector<3x12xf32>, vector<16x12xf32> -> vector<16x12xf32>
    %593 = vector.broadcast %591 : vector<1x12xf32> to vector<16x12xf32>
    %594 = arith.addf %592, %593 : vector<16x12xf32>
    %cst_48 = arith.constant 0.000000e+00 : f32
    %595 = vector.broadcast %cst_48 : f32 to vector<2x3xf32>
    %cst_49 = arith.constant 0.000000e+00 : f32
    %596 = vector.broadcast %cst_49 : f32 to vector<2x3xf32>
    %597 = vector.extract_strided_slice %594 {offsets = [0, 0], sizes = [2, 12], strides = [1, 1]} : vector<16x12xf32> to vector<2x12xf32>
    %598 = vector.extract_strided_slice %595 {offsets = [0, 0], sizes = [2, 1], strides = [1, 1]} : vector<2x3xf32> to vector<2x1xf32>
    %599 = vector.extract_strided_slice %589 {offsets = [0, 0], sizes = [1, 12], strides = [1, 1]} : vector<3x12xf32> to vector<1x12xf32>
    %600 = vector.broadcast %598 : vector<2x1xf32> to vector<2x12xf32>
    %601 = vector.broadcast %599 : vector<1x12xf32> to vector<2x12xf32>
    %602 = arith.mulf %600, %601 : vector<2x12xf32>
    %603 = vector.extract_strided_slice %595 {offsets = [0, 1], sizes = [2, 1], strides = [1, 1]} : vector<2x3xf32> to vector<2x1xf32>
    %604 = vector.extract_strided_slice %589 {offsets = [1, 0], sizes = [1, 12], strides = [1, 1]} : vector<3x12xf32> to vector<1x12xf32>
    %605 = vector.broadcast %603 : vector<2x1xf32> to vector<2x12xf32>
    %606 = vector.broadcast %604 : vector<1x12xf32> to vector<2x12xf32>
    %607 = arith.mulf %605, %606 : vector<2x12xf32>
    %608 = arith.addf %602, %607 : vector<2x12xf32>
    %609 = vector.extract_strided_slice %595 {offsets = [0, 2], sizes = [2, 1], strides = [1, 1]} : vector<2x3xf32> to vector<2x1xf32>
    %610 = vector.extract_strided_slice %589 {offsets = [2, 0], sizes = [1, 12], strides = [1, 1]} : vector<3x12xf32> to vector<1x12xf32>
    %611 = vector.broadcast %609 : vector<2x1xf32> to vector<2x12xf32>
    %612 = vector.broadcast %610 : vector<1x12xf32> to vector<2x12xf32>
    %613 = arith.mulf %611, %612 : vector<2x12xf32>
    %614 = arith.addf %608, %613 : vector<2x12xf32>
    %615 = arith.addf %597, %614 : vector<2x12xf32>
    %616 = vector.extract_strided_slice %615 {offsets = [0, 0], sizes = [2, 9], strides = [1, 1]} : vector<2x12xf32> to vector<2x9xf32>
    %617 = arith.negf %616 : vector<2x9xf32>
    %618 = math.exp %617 : vector<2x9xf32>
    %cst_50 = arith.constant 1.000000e+00 : f32
    %619 = vector.broadcast %cst_50 : f32 to vector<2x9xf32>
    %620 = arith.addf %619, %618 : vector<2x9xf32>
    %621 = arith.divf %619, %620 : vector<2x9xf32>
    %622 = vector.extract_strided_slice %615 {offsets = [0, 9], sizes = [2, 3], strides = [1, 1]} : vector<2x12xf32> to vector<2x3xf32>
    %623 = math.tanh %622 : vector<2x3xf32>
    %624 = vector.extract_strided_slice %621 {offsets = [0, 0], sizes = [2, 3], strides = [1, 1]} : vector<2x9xf32> to vector<2x3xf32>
    %625 = vector.extract_strided_slice %621 {offsets = [0, 3], sizes = [2, 3], strides = [1, 1]} : vector<2x9xf32> to vector<2x3xf32>
    %626 = vector.extract_strided_slice %621 {offsets = [0, 6], sizes = [2, 3], strides = [1, 1]} : vector<2x9xf32> to vector<2x3xf32>
    %627 = arith.mulf %625, %596 : vector<2x3xf32>
    %628 = arith.mulf %624, %623 : vector<2x3xf32>
    %629 = arith.addf %627, %628 : vector<2x3xf32>
    %630 = math.tanh %629 : vector<2x3xf32>
    %631 = arith.mulf %626, %630 : vector<2x3xf32>
    %632 = vector.extract_strided_slice %594 {offsets = [2, 0], sizes = [2, 12], strides = [1, 1]} : vector<16x12xf32> to vector<2x12xf32>
    %633 = vector.extract_strided_slice %631 {offsets = [0, 0], sizes = [2, 1], strides = [1, 1]} : vector<2x3xf32> to vector<2x1xf32>
    %634 = vector.extract_strided_slice %589 {offsets = [0, 0], sizes = [1, 12], strides = [1, 1]} : vector<3x12xf32> to vector<1x12xf32>
    %635 = vector.broadcast %633 : vector<2x1xf32> to vector<2x12xf32>
    %636 = vector.broadcast %634 : vector<1x12xf32> to vector<2x12xf32>
    %637 = arith.mulf %635, %636 : vector<2x12xf32>
    %638 = vector.extract_strided_slice %631 {offsets = [0, 1], sizes = [2, 1], strides = [1, 1]} : vector<2x3xf32> to vector<2x1xf32>
    %639 = vector.extract_strided_slice %589 {offsets = [1, 0], sizes = [1, 12], strides = [1, 1]} : vector<3x12xf32> to vector<1x12xf32>
    %640 = vector.broadcast %638 : vector<2x1xf32> to vector<2x12xf32>
    %641 = vector.broadcast %639 : vector<1x12xf32> to vector<2x12xf32>
    %642 = arith.mulf %640, %641 : vector<2x12xf32>
    %643 = arith.addf %637, %642 : vector<2x12xf32>
    %644 = vector.extract_strided_slice %631 {offsets = [0, 2], sizes = [2, 1], strides = [1, 1]} : vector<2x3xf32> to vector<2x1xf32>
    %645 = vector.extract_strided_slice %589 {offsets = [2, 0], sizes = [1, 12], strides = [1, 1]} : vector<3x12xf32> to vector<1x12xf32>
    %646 = vector.broadcast %644 : vector<2x1xf32> to vector<2x12xf32>
    %647 = vector.broadcast %645 : vector<1x12xf32> to vector<2x12xf32>
    %648 = arith.mulf %646, %647 : vector<2x12xf32>
    %649 = arith.addf %643, %648 : vector<2x12xf32>
    %650 = arith.addf %632, %649 : vector<2x12xf32>
    %651 = vector.extract_strided_slice %650 {offsets = [0, 0], sizes = [2, 9], strides = [1, 1]} : vector<2x12xf32> to vector<2x9xf32>
    %652 = arith.negf %651 : vector<2x9xf32>
    %653 = math.exp %652 : vector<2x9xf32>
    %cst_51 = arith.constant 1.000000e+00 : f32
    %654 = vector.broadcast %cst_51 : f32 to vector<2x9xf32>
    %655 = arith.addf %654, %653 : vector<2x9xf32>
    %656 = arith.divf %654, %655 : vector<2x9xf32>
    %657 = vector.extract_strided_slice %650 {offsets = [0, 9], sizes = [2, 3], strides = [1, 1]} : vector<2x12xf32> to vector<2x3xf32>
    %658 = math.tanh %657 : vector<2x3xf32>
    %659 = vector.extract_strided_slice %656 {offsets = [0, 0], sizes = [2, 3], strides = [1, 1]} : vector<2x9xf32> to vector<2x3xf32>
    %660 = vector.extract_strided_slice %656 {offsets = [0, 3], sizes = [2, 3], strides = [1, 1]} : vector<2x9xf32> to vector<2x3xf32>
    %661 = vector.extract_strided_slice %656 {offsets = [0, 6], sizes = [2, 3], strides = [1, 1]} : vector<2x9xf32> to vector<2x3xf32>
    %662 = arith.mulf %660, %629 : vector<2x3xf32>
    %663 = arith.mulf %659, %658 : vector<2x3xf32>
    %664 = arith.addf %662, %663 : vector<2x3xf32>
    %665 = math.tanh %664 : vector<2x3xf32>
    %666 = arith.mulf %661, %665 : vector<2x3xf32>
    %667 = vector.extract_strided_slice %594 {offsets = [4, 0], sizes = [2, 12], strides = [1, 1]} : vector<16x12xf32> to vector<2x12xf32>
    %668 = vector.extract_strided_slice %666 {offsets = [0, 0], sizes = [2, 1], strides = [1, 1]} : vector<2x3xf32> to vector<2x1xf32>
    %669 = vector.extract_strided_slice %589 {offsets = [0, 0], sizes = [1, 12], strides = [1, 1]} : vector<3x12xf32> to vector<1x12xf32>
    %670 = vector.broadcast %668 : vector<2x1xf32> to vector<2x12xf32>
    %671 = vector.broadcast %669 : vector<1x12xf32> to vector<2x12xf32>
    %672 = arith.mulf %670, %671 : vector<2x12xf32>
    %673 = vector.extract_strided_slice %666 {offsets = [0, 1], sizes = [2, 1], strides = [1, 1]} : vector<2x3xf32> to vector<2x1xf32>
    %674 = vector.extract_strided_slice %589 {offsets = [1, 0], sizes = [1, 12], strides = [1, 1]} : vector<3x12xf32> to vector<1x12xf32>
    %675 = vector.broadcast %673 : vector<2x1xf32> to vector<2x12xf32>
    %676 = vector.broadcast %674 : vector<1x12xf32> to vector<2x12xf32>
    %677 = arith.mulf %675, %676 : vector<2x12xf32>
    %678 = arith.addf %672, %677 : vector<2x12xf32>
    %679 = vector.extract_strided_slice %666 {offsets = [0, 2], sizes = [2, 1], strides = [1, 1]} : vector<2x3xf32> to vector<2x1xf32>
    %680 = vector.extract_strided_slice %589 {offsets = [2, 0], sizes = [1, 12], strides = [1, 1]} : vector<3x12xf32> to vector<1x12xf32>
    %681 = vector.broadcast %679 : vector<2x1xf32> to vector<2x12xf32>
    %682 = vector.broadcast %680 : vector<1x12xf32> to vector<2x12xf32>
    %683 = arith.mulf %681, %682 : vector<2x12xf32>
    %684 = arith.addf %678, %683 : vector<2x12xf32>
    %685 = arith.addf %667, %684 : vector<2x12xf32>
    %686 = vector.extract_strided_slice %685 {offsets = [0, 0], sizes = [2, 9], strides = [1, 1]} : vector<2x12xf32> to vector<2x9xf32>
    %687 = arith.negf %686 : vector<2x9xf32>
    %688 = math.exp %687 : vector<2x9xf32>
    %cst_52 = arith.constant 1.000000e+00 : f32
    %689 = vector.broadcast %cst_52 : f32 to vector<2x9xf32>
    %690 = arith.addf %689, %688 : vector<2x9xf32>
    %691 = arith.divf %689, %690 : vector<2x9xf32>
    %692 = vector.extract_strided_slice %685 {offsets = [0, 9], sizes = [2, 3], strides = [1, 1]} : vector<2x12xf32> to vector<2x3xf32>
    %693 = math.tanh %692 : vector<2x3xf32>
    %694 = vector.extract_strided_slice %691 {offsets = [0, 0], sizes = [2, 3], strides = [1, 1]} : vector<2x9xf32> to vector<2x3xf32>
    %695 = vector.extract_strided_slice %691 {offsets = [0, 3], sizes = [2, 3], strides = [1, 1]} : vector<2x9xf32> to vector<2x3xf32>
    %696 = vector.extract_strided_slice %691 {offsets = [0, 6], sizes = [2, 3], strides = [1, 1]} : vector<2x9xf32> to vector<2x3xf32>
    %697 = arith.mulf %695, %664 : vector<2x3xf32>
    %698 = arith.mulf %694, %693 : vector<2x3xf32>
    %699 = arith.addf %697, %698 : vector<2x3xf32>
    %700 = math.tanh %699 : vector<2x3xf32>
    %701 = arith.mulf %696, %700 : vector<2x3xf32>
    %702 = vector.extract_strided_slice %594 {offsets = [6, 0], sizes = [2, 12], strides = [1, 1]} : vector<16x12xf32> to vector<2x12xf32>
    %703 = vector.extract_strided_slice %701 {offsets = [0, 0], sizes = [2, 1], strides = [1, 1]} : vector<2x3xf32> to vector<2x1xf32>
    %704 = vector.extract_strided_slice %589 {offsets = [0, 0], sizes = [1, 12], strides = [1, 1]} : vector<3x12xf32> to vector<1x12xf32>
    %705 = vector.broadcast %703 : vector<2x1xf32> to vector<2x12xf32>
    %706 = vector.broadcast %704 : vector<1x12xf32> to vector<2x12xf32>
    %707 = arith.mulf %705, %706 : vector<2x12xf32>
    %708 = vector.extract_strided_slice %701 {offsets = [0, 1], sizes = [2, 1], strides = [1, 1]} : vector<2x3xf32> to vector<2x1xf32>
    %709 = vector.extract_strided_slice %589 {offsets = [1, 0], sizes = [1, 12], strides = [1, 1]} : vector<3x12xf32> to vector<1x12xf32>
    %710 = vector.broadcast %708 : vector<2x1xf32> to vector<2x12xf32>
    %711 = vector.broadcast %709 : vector<1x12xf32> to vector<2x12xf32>
    %712 = arith.mulf %710, %711 : vector<2x12xf32>
    %713 = arith.addf %707, %712 : vector<2x12xf32>
    %714 = vector.extract_strided_slice %701 {offsets = [0, 2], sizes = [2, 1], strides = [1, 1]} : vector<2x3xf32> to vector<2x1xf32>
    %715 = vector.extract_strided_slice %589 {offsets = [2, 0], sizes = [1, 12], strides = [1, 1]} : vector<3x12xf32> to vector<1x12xf32>
    %716 = vector.broadcast %714 : vector<2x1xf32> to vector<2x12xf32>
    %717 = vector.broadcast %715 : vector<1x12xf32> to vector<2x12xf32>
    %718 = arith.mulf %716, %717 : vector<2x12xf32>
    %719 = arith.addf %713, %718 : vector<2x12xf32>
    %720 = arith.addf %702, %719 : vector<2x12xf32>
    %721 = vector.extract_strided_slice %720 {offsets = [0, 0], sizes = [2, 9], strides = [1, 1]} : vector<2x12xf32> to vector<2x9xf32>
    %722 = arith.negf %721 : vector<2x9xf32>
    %723 = math.exp %722 : vector<2x9xf32>
    %cst_53 = arith.constant 1.000000e+00 : f32
    %724 = vector.broadcast %cst_53 : f32 to vector<2x9xf32>
    %725 = arith.addf %724, %723 : vector<2x9xf32>
    %726 = arith.divf %724, %725 : vector<2x9xf32>
    %727 = vector.extract_strided_slice %720 {offsets = [0, 9], sizes = [2, 3], strides = [1, 1]} : vector<2x12xf32> to vector<2x3xf32>
    %728 = math.tanh %727 : vector<2x3xf32>
    %729 = vector.extract_strided_slice %726 {offsets = [0, 0], sizes = [2, 3], strides = [1, 1]} : vector<2x9xf32> to vector<2x3xf32>
    %730 = vector.extract_strided_slice %726 {offsets = [0, 3], sizes = [2, 3], strides = [1, 1]} : vector<2x9xf32> to vector<2x3xf32>
    %731 = vector.extract_strided_slice %726 {offsets = [0, 6], sizes = [2, 3], strides = [1, 1]} : vector<2x9xf32> to vector<2x3xf32>
    %732 = arith.mulf %730, %699 : vector<2x3xf32>
    %733 = arith.mulf %729, %728 : vector<2x3xf32>
    %734 = arith.addf %732, %733 : vector<2x3xf32>
    %735 = math.tanh %734 : vector<2x3xf32>
    %736 = arith.mulf %731, %735 : vector<2x3xf32>
    %737 = vector.extract_strided_slice %594 {offsets = [8, 0], sizes = [2, 12], strides = [1, 1]} : vector<16x12xf32> to vector<2x12xf32>
    %738 = vector.extract_strided_slice %736 {offsets = [0, 0], sizes = [2, 1], strides = [1, 1]} : vector<2x3xf32> to vector<2x1xf32>
    %739 = vector.extract_strided_slice %589 {offsets = [0, 0], sizes = [1, 12], strides = [1, 1]} : vector<3x12xf32> to vector<1x12xf32>
    %740 = vector.broadcast %738 : vector<2x1xf32> to vector<2x12xf32>
    %741 = vector.broadcast %739 : vector<1x12xf32> to vector<2x12xf32>
    %742 = arith.mulf %740, %741 : vector<2x12xf32>
    %743 = vector.extract_strided_slice %736 {offsets = [0, 1], sizes = [2, 1], strides = [1, 1]} : vector<2x3xf32> to vector<2x1xf32>
    %744 = vector.extract_strided_slice %589 {offsets = [1, 0], sizes = [1, 12], strides = [1, 1]} : vector<3x12xf32> to vector<1x12xf32>
    %745 = vector.broadcast %743 : vector<2x1xf32> to vector<2x12xf32>
    %746 = vector.broadcast %744 : vector<1x12xf32> to vector<2x12xf32>
    %747 = arith.mulf %745, %746 : vector<2x12xf32>
    %748 = arith.addf %742, %747 : vector<2x12xf32>
    %749 = vector.extract_strided_slice %736 {offsets = [0, 2], sizes = [2, 1], strides = [1, 1]} : vector<2x3xf32> to vector<2x1xf32>
    %750 = vector.extract_strided_slice %589 {offsets = [2, 0], sizes = [1, 12], strides = [1, 1]} : vector<3x12xf32> to vector<1x12xf32>
    %751 = vector.broadcast %749 : vector<2x1xf32> to vector<2x12xf32>
    %752 = vector.broadcast %750 : vector<1x12xf32> to vector<2x12xf32>
    %753 = arith.mulf %751, %752 : vector<2x12xf32>
    %754 = arith.addf %748, %753 : vector<2x12xf32>
    %755 = arith.addf %737, %754 : vector<2x12xf32>
    %756 = vector.extract_strided_slice %755 {offsets = [0, 0], sizes = [2, 9], strides = [1, 1]} : vector<2x12xf32> to vector<2x9xf32>
    %757 = arith.negf %756 : vector<2x9xf32>
    %758 = math.exp %757 : vector<2x9xf32>
    %cst_54 = arith.constant 1.000000e+00 : f32
    %759 = vector.broadcast %cst_54 : f32 to vector<2x9xf32>
    %760 = arith.addf %759, %758 : vector<2x9xf32>
    %761 = arith.divf %759, %760 : vector<2x9xf32>
    %762 = vector.extract_strided_slice %755 {offsets = [0, 9], sizes = [2, 3], strides = [1, 1]} : vector<2x12xf32> to vector<2x3xf32>
    %763 = math.tanh %762 : vector<2x3xf32>
    %764 = vector.extract_strided_slice %761 {offsets = [0, 0], sizes = [2, 3], strides = [1, 1]} : vector<2x9xf32> to vector<2x3xf32>
    %765 = vector.extract_strided_slice %761 {offsets = [0, 3], sizes = [2, 3], strides = [1, 1]} : vector<2x9xf32> to vector<2x3xf32>
    %766 = vector.extract_strided_slice %761 {offsets = [0, 6], sizes = [2, 3], strides = [1, 1]} : vector<2x9xf32> to vector<2x3xf32>
    %767 = arith.mulf %765, %734 : vector<2x3xf32>
    %768 = arith.mulf %764, %763 : vector<2x3xf32>
    %769 = arith.addf %767, %768 : vector<2x3xf32>
    %770 = math.tanh %769 : vector<2x3xf32>
    %771 = arith.mulf %766, %770 : vector<2x3xf32>
    %772 = vector.extract_strided_slice %594 {offsets = [10, 0], sizes = [2, 12], strides = [1, 1]} : vector<16x12xf32> to vector<2x12xf32>
    %773 = vector.extract_strided_slice %771 {offsets = [0, 0], sizes = [2, 1], strides = [1, 1]} : vector<2x3xf32> to vector<2x1xf32>
    %774 = vector.extract_strided_slice %589 {offsets = [0, 0], sizes = [1, 12], strides = [1, 1]} : vector<3x12xf32> to vector<1x12xf32>
    %775 = vector.broadcast %773 : vector<2x1xf32> to vector<2x12xf32>
    %776 = vector.broadcast %774 : vector<1x12xf32> to vector<2x12xf32>
    %777 = arith.mulf %775, %776 : vector<2x12xf32>
    %778 = vector.extract_strided_slice %771 {offsets = [0, 1], sizes = [2, 1], strides = [1, 1]} : vector<2x3xf32> to vector<2x1xf32>
    %779 = vector.extract_strided_slice %589 {offsets = [1, 0], sizes = [1, 12], strides = [1, 1]} : vector<3x12xf32> to vector<1x12xf32>
    %780 = vector.broadcast %778 : vector<2x1xf32> to vector<2x12xf32>
    %781 = vector.broadcast %779 : vector<1x12xf32> to vector<2x12xf32>
    %782 = arith.mulf %780, %781 : vector<2x12xf32>
    %783 = arith.addf %777, %782 : vector<2x12xf32>
    %784 = vector.extract_strided_slice %771 {offsets = [0, 2], sizes = [2, 1], strides = [1, 1]} : vector<2x3xf32> to vector<2x1xf32>
    %785 = vector.extract_strided_slice %589 {offsets = [2, 0], sizes = [1, 12], strides = [1, 1]} : vector<3x12xf32> to vector<1x12xf32>
    %786 = vector.broadcast %784 : vector<2x1xf32> to vector<2x12xf32>
    %787 = vector.broadcast %785 : vector<1x12xf32> to vector<2x12xf32>
    %788 = arith.mulf %786, %787 : vector<2x12xf32>
    %789 = arith.addf %783, %788 : vector<2x12xf32>
    %790 = arith.addf %772, %789 : vector<2x12xf32>
    %791 = vector.extract_strided_slice %790 {offsets = [0, 0], sizes = [2, 9], strides = [1, 1]} : vector<2x12xf32> to vector<2x9xf32>
    %792 = arith.negf %791 : vector<2x9xf32>
    %793 = math.exp %792 : vector<2x9xf32>
    %cst_55 = arith.constant 1.000000e+00 : f32
    %794 = vector.broadcast %cst_55 : f32 to vector<2x9xf32>
    %795 = arith.addf %794, %793 : vector<2x9xf32>
    %796 = arith.divf %794, %795 : vector<2x9xf32>
    %797 = vector.extract_strided_slice %790 {offsets = [0, 9], sizes = [2, 3], strides = [1, 1]} : vector<2x12xf32> to vector<2x3xf32>
    %798 = math.tanh %797 : vector<2x3xf32>
    %799 = vector.extract_strided_slice %796 {offsets = [0, 0], sizes = [2, 3], strides = [1, 1]} : vector<2x9xf32> to vector<2x3xf32>
    %800 = vector.extract_strided_slice %796 {offsets = [0, 3], sizes = [2, 3], strides = [1, 1]} : vector<2x9xf32> to vector<2x3xf32>
    %801 = vector.extract_strided_slice %796 {offsets = [0, 6], sizes = [2, 3], strides = [1, 1]} : vector<2x9xf32> to vector<2x3xf32>
    %802 = arith.mulf %800, %769 : vector<2x3xf32>
    %803 = arith.mulf %799, %798 : vector<2x3xf32>
    %804 = arith.addf %802, %803 : vector<2x3xf32>
    %805 = math.tanh %804 : vector<2x3xf32>
    %806 = arith.mulf %801, %805 : vector<2x3xf32>
    %807 = vector.extract_strided_slice %594 {offsets = [12, 0], sizes = [2, 12], strides = [1, 1]} : vector<16x12xf32> to vector<2x12xf32>
    %808 = vector.extract_strided_slice %806 {offsets = [0, 0], sizes = [2, 1], strides = [1, 1]} : vector<2x3xf32> to vector<2x1xf32>
    %809 = vector.extract_strided_slice %589 {offsets = [0, 0], sizes = [1, 12], strides = [1, 1]} : vector<3x12xf32> to vector<1x12xf32>
    %810 = vector.broadcast %808 : vector<2x1xf32> to vector<2x12xf32>
    %811 = vector.broadcast %809 : vector<1x12xf32> to vector<2x12xf32>
    %812 = arith.mulf %810, %811 : vector<2x12xf32>
    %813 = vector.extract_strided_slice %806 {offsets = [0, 1], sizes = [2, 1], strides = [1, 1]} : vector<2x3xf32> to vector<2x1xf32>
    %814 = vector.extract_strided_slice %589 {offsets = [1, 0], sizes = [1, 12], strides = [1, 1]} : vector<3x12xf32> to vector<1x12xf32>
    %815 = vector.broadcast %813 : vector<2x1xf32> to vector<2x12xf32>
    %816 = vector.broadcast %814 : vector<1x12xf32> to vector<2x12xf32>
    %817 = arith.mulf %815, %816 : vector<2x12xf32>
    %818 = arith.addf %812, %817 : vector<2x12xf32>
    %819 = vector.extract_strided_slice %806 {offsets = [0, 2], sizes = [2, 1], strides = [1, 1]} : vector<2x3xf32> to vector<2x1xf32>
    %820 = vector.extract_strided_slice %589 {offsets = [2, 0], sizes = [1, 12], strides = [1, 1]} : vector<3x12xf32> to vector<1x12xf32>
    %821 = vector.broadcast %819 : vector<2x1xf32> to vector<2x12xf32>
    %822 = vector.broadcast %820 : vector<1x12xf32> to vector<2x12xf32>
    %823 = arith.mulf %821, %822 : vector<2x12xf32>
    %824 = arith.addf %818, %823 : vector<2x12xf32>
    %825 = arith.addf %807, %824 : vector<2x12xf32>
    %826 = vector.extract_strided_slice %825 {offsets = [0, 0], sizes = [2, 9], strides = [1, 1]} : vector<2x12xf32> to vector<2x9xf32>
    %827 = arith.negf %826 : vector<2x9xf32>
    %828 = math.exp %827 : vector<2x9xf32>
    %cst_56 = arith.constant 1.000000e+00 : f32
    %829 = vector.broadcast %cst_56 : f32 to vector<2x9xf32>
    %830 = arith.addf %829, %828 : vector<2x9xf32>
    %831 = arith.divf %829, %830 : vector<2x9xf32>
    %832 = vector.extract_strided_slice %825 {offsets = [0, 9], sizes = [2, 3], strides = [1, 1]} : vector<2x12xf32> to vector<2x3xf32>
    %833 = math.tanh %832 : vector<2x3xf32>
    %834 = vector.extract_strided_slice %831 {offsets = [0, 0], sizes = [2, 3], strides = [1, 1]} : vector<2x9xf32> to vector<2x3xf32>
    %835 = vector.extract_strided_slice %831 {offsets = [0, 3], sizes = [2, 3], strides = [1, 1]} : vector<2x9xf32> to vector<2x3xf32>
    %836 = vector.extract_strided_slice %831 {offsets = [0, 6], sizes = [2, 3], strides = [1, 1]} : vector<2x9xf32> to vector<2x3xf32>
    %837 = arith.mulf %835, %804 : vector<2x3xf32>
    %838 = arith.mulf %834, %833 : vector<2x3xf32>
    %839 = arith.addf %837, %838 : vector<2x3xf32>
    %840 = math.tanh %839 : vector<2x3xf32>
    %841 = arith.mulf %836, %840 : vector<2x3xf32>
    %842 = vector.extract_strided_slice %594 {offsets = [14, 0], sizes = [2, 12], strides = [1, 1]} : vector<16x12xf32> to vector<2x12xf32>
    %843 = vector.extract_strided_slice %841 {offsets = [0, 0], sizes = [2, 1], strides = [1, 1]} : vector<2x3xf32> to vector<2x1xf32>
    %844 = vector.extract_strided_slice %589 {offsets = [0, 0], sizes = [1, 12], strides = [1, 1]} : vector<3x12xf32> to vector<1x12xf32>
    %845 = vector.broadcast %843 : vector<2x1xf32> to vector<2x12xf32>
    %846 = vector.broadcast %844 : vector<1x12xf32> to vector<2x12xf32>
    %847 = arith.mulf %845, %846 : vector<2x12xf32>
    %848 = vector.extract_strided_slice %841 {offsets = [0, 1], sizes = [2, 1], strides = [1, 1]} : vector<2x3xf32> to vector<2x1xf32>
    %849 = vector.extract_strided_slice %589 {offsets = [1, 0], sizes = [1, 12], strides = [1, 1]} : vector<3x12xf32> to vector<1x12xf32>
    %850 = vector.broadcast %848 : vector<2x1xf32> to vector<2x12xf32>
    %851 = vector.broadcast %849 : vector<1x12xf32> to vector<2x12xf32>
    %852 = arith.mulf %850, %851 : vector<2x12xf32>
    %853 = arith.addf %847, %852 : vector<2x12xf32>
    %854 = vector.extract_strided_slice %841 {offsets = [0, 2], sizes = [2, 1], strides = [1, 1]} : vector<2x3xf32> to vector<2x1xf32>
    %855 = vector.extract_strided_slice %589 {offsets = [2, 0], sizes = [1, 12], strides = [1, 1]} : vector<3x12xf32> to vector<1x12xf32>
    %856 = vector.broadcast %854 : vector<2x1xf32> to vector<2x12xf32>
    %857 = vector.broadcast %855 : vector<1x12xf32> to vector<2x12xf32>
    %858 = arith.mulf %856, %857 : vector<2x12xf32>
    %859 = arith.addf %853, %858 : vector<2x12xf32>
    %860 = arith.addf %842, %859 : vector<2x12xf32>
    %861 = vector.extract_strided_slice %860 {offsets = [0, 0], sizes = [2, 9], strides = [1, 1]} : vector<2x12xf32> to vector<2x9xf32>
    %862 = arith.negf %861 : vector<2x9xf32>
    %863 = math.exp %862 : vector<2x9xf32>
    %cst_57 = arith.constant 1.000000e+00 : f32
    %864 = vector.broadcast %cst_57 : f32 to vector<2x9xf32>
    %865 = arith.addf %864, %863 : vector<2x9xf32>
    %866 = arith.divf %864, %865 : vector<2x9xf32>
    %867 = vector.extract_strided_slice %860 {offsets = [0, 9], sizes = [2, 3], strides = [1, 1]} : vector<2x12xf32> to vector<2x3xf32>
    %868 = math.tanh %867 : vector<2x3xf32>
    %869 = vector.extract_strided_slice %866 {offsets = [0, 0], sizes = [2, 3], strides = [1, 1]} : vector<2x9xf32> to vector<2x3xf32>
    %870 = vector.extract_strided_slice %866 {offsets = [0, 3], sizes = [2, 3], strides = [1, 1]} : vector<2x9xf32> to vector<2x3xf32>
    %871 = vector.extract_strided_slice %866 {offsets = [0, 6], sizes = [2, 3], strides = [1, 1]} : vector<2x9xf32> to vector<2x3xf32>
    %872 = arith.mulf %870, %839 : vector<2x3xf32>
    %873 = arith.mulf %869, %868 : vector<2x3xf32>
    %874 = arith.addf %872, %873 : vector<2x3xf32>
    %875 = math.tanh %874 : vector<2x3xf32>
    %876 = arith.mulf %871, %875 : vector<2x3xf32>
    %877 = tpu.concatenate %631, %666, %701, %736, %771, %806, %841, %876 in 0 : vector<2x3xf32>, vector<2x3xf32>, vector<2x3xf32>, vector<2x3xf32>, vector<2x3xf32>, vector<2x3xf32>, vector<2x3xf32>, vector<2x3xf32> -> vector<16x3xf32>
    %c3 = arith.constant 3 : index
    %c0_58 = arith.constant 0 : index
    %c0_59 = arith.constant 0 : index
    %878 = vector.load %arg1[%c3, %c0_58, %c0_59] : memref<5x3x12xf32, #tpu.memory_space<vmem>>, vector<1x3x12xf32>
    %879 = vector.shape_cast %878 : vector<1x3x12xf32> to vector<3x12xf32>
    %c3_60 = arith.constant 3 : index
    %c0_61 = arith.constant 0 : index
    %c0_62 = arith.constant 0 : index
    %880 = vector.load %arg2[%c3_60, %c0_61, %c0_62] : memref<5x3x12xf32, #tpu.memory_space<vmem>>, vector<1x3x12xf32>
    %881 = vector.shape_cast %880 : vector<1x3x12xf32> to vector<3x12xf32>
    %c3_63 = arith.constant 3 : index
    %c0_64 = arith.constant 0 : index
    %c0_65 = arith.constant 0 : index
    %882 = vector.load %arg3[%c3_63, %c0_64, %c0_65] : memref<5x1x12xf32, #tpu.memory_space<vmem>>, vector<1x1x12xf32>
    %883 = vector.shape_cast %882 : vector<1x1x12xf32> to vector<1x12xf32>
    %cst_66 = arith.constant dense<0.000000e+00> : vector<16x12xf32>
    %884 = tpu.matmul %877, %879, %cst_66 {dimension_numbers = #tpu.dot_dimension_numbers<[1], [0], [0], [1], [0, 0, 1, 1], [], []>} : vector<16x3xf32>, vector<3x12xf32>, vector<16x12xf32> -> vector<16x12xf32>
    %885 = vector.broadcast %883 : vector<1x12xf32> to vector<16x12xf32>
    %886 = arith.addf %884, %885 : vector<16x12xf32>
    %cst_67 = arith.constant 0.000000e+00 : f32
    %887 = vector.broadcast %cst_67 : f32 to vector<2x3xf32>
    %cst_68 = arith.constant 0.000000e+00 : f32
    %888 = vector.broadcast %cst_68 : f32 to vector<2x3xf32>
    %889 = vector.extract_strided_slice %886 {offsets = [0, 0], sizes = [2, 12], strides = [1, 1]} : vector<16x12xf32> to vector<2x12xf32>
    %890 = vector.extract_strided_slice %887 {offsets = [0, 0], sizes = [2, 1], strides = [1, 1]} : vector<2x3xf32> to vector<2x1xf32>
    %891 = vector.extract_strided_slice %881 {offsets = [0, 0], sizes = [1, 12], strides = [1, 1]} : vector<3x12xf32> to vector<1x12xf32>
    %892 = vector.broadcast %890 : vector<2x1xf32> to vector<2x12xf32>
    %893 = vector.broadcast %891 : vector<1x12xf32> to vector<2x12xf32>
    %894 = arith.mulf %892, %893 : vector<2x12xf32>
    %895 = vector.extract_strided_slice %887 {offsets = [0, 1], sizes = [2, 1], strides = [1, 1]} : vector<2x3xf32> to vector<2x1xf32>
    %896 = vector.extract_strided_slice %881 {offsets = [1, 0], sizes = [1, 12], strides = [1, 1]} : vector<3x12xf32> to vector<1x12xf32>
    %897 = vector.broadcast %895 : vector<2x1xf32> to vector<2x12xf32>
    %898 = vector.broadcast %896 : vector<1x12xf32> to vector<2x12xf32>
    %899 = arith.mulf %897, %898 : vector<2x12xf32>
    %900 = arith.addf %894, %899 : vector<2x12xf32>
    %901 = vector.extract_strided_slice %887 {offsets = [0, 2], sizes = [2, 1], strides = [1, 1]} : vector<2x3xf32> to vector<2x1xf32>
    %902 = vector.extract_strided_slice %881 {offsets = [2, 0], sizes = [1, 12], strides = [1, 1]} : vector<3x12xf32> to vector<1x12xf32>
    %903 = vector.broadcast %901 : vector<2x1xf32> to vector<2x12xf32>
    %904 = vector.broadcast %902 : vector<1x12xf32> to vector<2x12xf32>
    %905 = arith.mulf %903, %904 : vector<2x12xf32>
    %906 = arith.addf %900, %905 : vector<2x12xf32>
    %907 = arith.addf %889, %906 : vector<2x12xf32>
    %908 = vector.extract_strided_slice %907 {offsets = [0, 0], sizes = [2, 9], strides = [1, 1]} : vector<2x12xf32> to vector<2x9xf32>
    %909 = arith.negf %908 : vector<2x9xf32>
    %910 = math.exp %909 : vector<2x9xf32>
    %cst_69 = arith.constant 1.000000e+00 : f32
    %911 = vector.broadcast %cst_69 : f32 to vector<2x9xf32>
    %912 = arith.addf %911, %910 : vector<2x9xf32>
    %913 = arith.divf %911, %912 : vector<2x9xf32>
    %914 = vector.extract_strided_slice %907 {offsets = [0, 9], sizes = [2, 3], strides = [1, 1]} : vector<2x12xf32> to vector<2x3xf32>
    %915 = math.tanh %914 : vector<2x3xf32>
    %916 = vector.extract_strided_slice %913 {offsets = [0, 0], sizes = [2, 3], strides = [1, 1]} : vector<2x9xf32> to vector<2x3xf32>
    %917 = vector.extract_strided_slice %913 {offsets = [0, 3], sizes = [2, 3], strides = [1, 1]} : vector<2x9xf32> to vector<2x3xf32>
    %918 = vector.extract_strided_slice %913 {offsets = [0, 6], sizes = [2, 3], strides = [1, 1]} : vector<2x9xf32> to vector<2x3xf32>
    %919 = arith.mulf %917, %888 : vector<2x3xf32>
    %920 = arith.mulf %916, %915 : vector<2x3xf32>
    %921 = arith.addf %919, %920 : vector<2x3xf32>
    %922 = math.tanh %921 : vector<2x3xf32>
    %923 = arith.mulf %918, %922 : vector<2x3xf32>
    %924 = vector.extract_strided_slice %886 {offsets = [2, 0], sizes = [2, 12], strides = [1, 1]} : vector<16x12xf32> to vector<2x12xf32>
    %925 = vector.extract_strided_slice %923 {offsets = [0, 0], sizes = [2, 1], strides = [1, 1]} : vector<2x3xf32> to vector<2x1xf32>
    %926 = vector.extract_strided_slice %881 {offsets = [0, 0], sizes = [1, 12], strides = [1, 1]} : vector<3x12xf32> to vector<1x12xf32>
    %927 = vector.broadcast %925 : vector<2x1xf32> to vector<2x12xf32>
    %928 = vector.broadcast %926 : vector<1x12xf32> to vector<2x12xf32>
    %929 = arith.mulf %927, %928 : vector<2x12xf32>
    %930 = vector.extract_strided_slice %923 {offsets = [0, 1], sizes = [2, 1], strides = [1, 1]} : vector<2x3xf32> to vector<2x1xf32>
    %931 = vector.extract_strided_slice %881 {offsets = [1, 0], sizes = [1, 12], strides = [1, 1]} : vector<3x12xf32> to vector<1x12xf32>
    %932 = vector.broadcast %930 : vector<2x1xf32> to vector<2x12xf32>
    %933 = vector.broadcast %931 : vector<1x12xf32> to vector<2x12xf32>
    %934 = arith.mulf %932, %933 : vector<2x12xf32>
    %935 = arith.addf %929, %934 : vector<2x12xf32>
    %936 = vector.extract_strided_slice %923 {offsets = [0, 2], sizes = [2, 1], strides = [1, 1]} : vector<2x3xf32> to vector<2x1xf32>
    %937 = vector.extract_strided_slice %881 {offsets = [2, 0], sizes = [1, 12], strides = [1, 1]} : vector<3x12xf32> to vector<1x12xf32>
    %938 = vector.broadcast %936 : vector<2x1xf32> to vector<2x12xf32>
    %939 = vector.broadcast %937 : vector<1x12xf32> to vector<2x12xf32>
    %940 = arith.mulf %938, %939 : vector<2x12xf32>
    %941 = arith.addf %935, %940 : vector<2x12xf32>
    %942 = arith.addf %924, %941 : vector<2x12xf32>
    %943 = vector.extract_strided_slice %942 {offsets = [0, 0], sizes = [2, 9], strides = [1, 1]} : vector<2x12xf32> to vector<2x9xf32>
    %944 = arith.negf %943 : vector<2x9xf32>
    %945 = math.exp %944 : vector<2x9xf32>
    %cst_70 = arith.constant 1.000000e+00 : f32
    %946 = vector.broadcast %cst_70 : f32 to vector<2x9xf32>
    %947 = arith.addf %946, %945 : vector<2x9xf32>
    %948 = arith.divf %946, %947 : vector<2x9xf32>
    %949 = vector.extract_strided_slice %942 {offsets = [0, 9], sizes = [2, 3], strides = [1, 1]} : vector<2x12xf32> to vector<2x3xf32>
    %950 = math.tanh %949 : vector<2x3xf32>
    %951 = vector.extract_strided_slice %948 {offsets = [0, 0], sizes = [2, 3], strides = [1, 1]} : vector<2x9xf32> to vector<2x3xf32>
    %952 = vector.extract_strided_slice %948 {offsets = [0, 3], sizes = [2, 3], strides = [1, 1]} : vector<2x9xf32> to vector<2x3xf32>
    %953 = vector.extract_strided_slice %948 {offsets = [0, 6], sizes = [2, 3], strides = [1, 1]} : vector<2x9xf32> to vector<2x3xf32>
    %954 = arith.mulf %952, %921 : vector<2x3xf32>
    %955 = arith.mulf %951, %950 : vector<2x3xf32>
    %956 = arith.addf %954, %955 : vector<2x3xf32>
    %957 = math.tanh %956 : vector<2x3xf32>
    %958 = arith.mulf %953, %957 : vector<2x3xf32>
    %959 = vector.extract_strided_slice %886 {offsets = [4, 0], sizes = [2, 12], strides = [1, 1]} : vector<16x12xf32> to vector<2x12xf32>
    %960 = vector.extract_strided_slice %958 {offsets = [0, 0], sizes = [2, 1], strides = [1, 1]} : vector<2x3xf32> to vector<2x1xf32>
    %961 = vector.extract_strided_slice %881 {offsets = [0, 0], sizes = [1, 12], strides = [1, 1]} : vector<3x12xf32> to vector<1x12xf32>
    %962 = vector.broadcast %960 : vector<2x1xf32> to vector<2x12xf32>
    %963 = vector.broadcast %961 : vector<1x12xf32> to vector<2x12xf32>
    %964 = arith.mulf %962, %963 : vector<2x12xf32>
    %965 = vector.extract_strided_slice %958 {offsets = [0, 1], sizes = [2, 1], strides = [1, 1]} : vector<2x3xf32> to vector<2x1xf32>
    %966 = vector.extract_strided_slice %881 {offsets = [1, 0], sizes = [1, 12], strides = [1, 1]} : vector<3x12xf32> to vector<1x12xf32>
    %967 = vector.broadcast %965 : vector<2x1xf32> to vector<2x12xf32>
    %968 = vector.broadcast %966 : vector<1x12xf32> to vector<2x12xf32>
    %969 = arith.mulf %967, %968 : vector<2x12xf32>
    %970 = arith.addf %964, %969 : vector<2x12xf32>
    %971 = vector.extract_strided_slice %958 {offsets = [0, 2], sizes = [2, 1], strides = [1, 1]} : vector<2x3xf32> to vector<2x1xf32>
    %972 = vector.extract_strided_slice %881 {offsets = [2, 0], sizes = [1, 12], strides = [1, 1]} : vector<3x12xf32> to vector<1x12xf32>
    %973 = vector.broadcast %971 : vector<2x1xf32> to vector<2x12xf32>
    %974 = vector.broadcast %972 : vector<1x12xf32> to vector<2x12xf32>
    %975 = arith.mulf %973, %974 : vector<2x12xf32>
    %976 = arith.addf %970, %975 : vector<2x12xf32>
    %977 = arith.addf %959, %976 : vector<2x12xf32>
    %978 = vector.extract_strided_slice %977 {offsets = [0, 0], sizes = [2, 9], strides = [1, 1]} : vector<2x12xf32> to vector<2x9xf32>
    %979 = arith.negf %978 : vector<2x9xf32>
    %980 = math.exp %979 : vector<2x9xf32>
    %cst_71 = arith.constant 1.000000e+00 : f32
    %981 = vector.broadcast %cst_71 : f32 to vector<2x9xf32>
    %982 = arith.addf %981, %980 : vector<2x9xf32>
    %983 = arith.divf %981, %982 : vector<2x9xf32>
    %984 = vector.extract_strided_slice %977 {offsets = [0, 9], sizes = [2, 3], strides = [1, 1]} : vector<2x12xf32> to vector<2x3xf32>
    %985 = math.tanh %984 : vector<2x3xf32>
    %986 = vector.extract_strided_slice %983 {offsets = [0, 0], sizes = [2, 3], strides = [1, 1]} : vector<2x9xf32> to vector<2x3xf32>
    %987 = vector.extract_strided_slice %983 {offsets = [0, 3], sizes = [2, 3], strides = [1, 1]} : vector<2x9xf32> to vector<2x3xf32>
    %988 = vector.extract_strided_slice %983 {offsets = [0, 6], sizes = [2, 3], strides = [1, 1]} : vector<2x9xf32> to vector<2x3xf32>
    %989 = arith.mulf %987, %956 : vector<2x3xf32>
    %990 = arith.mulf %986, %985 : vector<2x3xf32>
    %991 = arith.addf %989, %990 : vector<2x3xf32>
    %992 = math.tanh %991 : vector<2x3xf32>
    %993 = arith.mulf %988, %992 : vector<2x3xf32>
    %994 = vector.extract_strided_slice %886 {offsets = [6, 0], sizes = [2, 12], strides = [1, 1]} : vector<16x12xf32> to vector<2x12xf32>
    %995 = vector.extract_strided_slice %993 {offsets = [0, 0], sizes = [2, 1], strides = [1, 1]} : vector<2x3xf32> to vector<2x1xf32>
    %996 = vector.extract_strided_slice %881 {offsets = [0, 0], sizes = [1, 12], strides = [1, 1]} : vector<3x12xf32> to vector<1x12xf32>
    %997 = vector.broadcast %995 : vector<2x1xf32> to vector<2x12xf32>
    %998 = vector.broadcast %996 : vector<1x12xf32> to vector<2x12xf32>
    %999 = arith.mulf %997, %998 : vector<2x12xf32>
    %1000 = vector.extract_strided_slice %993 {offsets = [0, 1], sizes = [2, 1], strides = [1, 1]} : vector<2x3xf32> to vector<2x1xf32>
    %1001 = vector.extract_strided_slice %881 {offsets = [1, 0], sizes = [1, 12], strides = [1, 1]} : vector<3x12xf32> to vector<1x12xf32>
    %1002 = vector.broadcast %1000 : vector<2x1xf32> to vector<2x12xf32>
    %1003 = vector.broadcast %1001 : vector<1x12xf32> to vector<2x12xf32>
    %1004 = arith.mulf %1002, %1003 : vector<2x12xf32>
    %1005 = arith.addf %999, %1004 : vector<2x12xf32>
    %1006 = vector.extract_strided_slice %993 {offsets = [0, 2], sizes = [2, 1], strides = [1, 1]} : vector<2x3xf32> to vector<2x1xf32>
    %1007 = vector.extract_strided_slice %881 {offsets = [2, 0], sizes = [1, 12], strides = [1, 1]} : vector<3x12xf32> to vector<1x12xf32>
    %1008 = vector.broadcast %1006 : vector<2x1xf32> to vector<2x12xf32>
    %1009 = vector.broadcast %1007 : vector<1x12xf32> to vector<2x12xf32>
    %1010 = arith.mulf %1008, %1009 : vector<2x12xf32>
    %1011 = arith.addf %1005, %1010 : vector<2x12xf32>
    %1012 = arith.addf %994, %1011 : vector<2x12xf32>
    %1013 = vector.extract_strided_slice %1012 {offsets = [0, 0], sizes = [2, 9], strides = [1, 1]} : vector<2x12xf32> to vector<2x9xf32>
    %1014 = arith.negf %1013 : vector<2x9xf32>
    %1015 = math.exp %1014 : vector<2x9xf32>
    %cst_72 = arith.constant 1.000000e+00 : f32
    %1016 = vector.broadcast %cst_72 : f32 to vector<2x9xf32>
    %1017 = arith.addf %1016, %1015 : vector<2x9xf32>
    %1018 = arith.divf %1016, %1017 : vector<2x9xf32>
    %1019 = vector.extract_strided_slice %1012 {offsets = [0, 9], sizes = [2, 3], strides = [1, 1]} : vector<2x12xf32> to vector<2x3xf32>
    %1020 = math.tanh %1019 : vector<2x3xf32>
    %1021 = vector.extract_strided_slice %1018 {offsets = [0, 0], sizes = [2, 3], strides = [1, 1]} : vector<2x9xf32> to vector<2x3xf32>
    %1022 = vector.extract_strided_slice %1018 {offsets = [0, 3], sizes = [2, 3], strides = [1, 1]} : vector<2x9xf32> to vector<2x3xf32>
    %1023 = vector.extract_strided_slice %1018 {offsets = [0, 6], sizes = [2, 3], strides = [1, 1]} : vector<2x9xf32> to vector<2x3xf32>
    %1024 = arith.mulf %1022, %991 : vector<2x3xf32>
    %1025 = arith.mulf %1021, %1020 : vector<2x3xf32>
    %1026 = arith.addf %1024, %1025 : vector<2x3xf32>
    %1027 = math.tanh %1026 : vector<2x3xf32>
    %1028 = arith.mulf %1023, %1027 : vector<2x3xf32>
    %1029 = vector.extract_strided_slice %886 {offsets = [8, 0], sizes = [2, 12], strides = [1, 1]} : vector<16x12xf32> to vector<2x12xf32>
    %1030 = vector.extract_strided_slice %1028 {offsets = [0, 0], sizes = [2, 1], strides = [1, 1]} : vector<2x3xf32> to vector<2x1xf32>
    %1031 = vector.extract_strided_slice %881 {offsets = [0, 0], sizes = [1, 12], strides = [1, 1]} : vector<3x12xf32> to vector<1x12xf32>
    %1032 = vector.broadcast %1030 : vector<2x1xf32> to vector<2x12xf32>
    %1033 = vector.broadcast %1031 : vector<1x12xf32> to vector<2x12xf32>
    %1034 = arith.mulf %1032, %1033 : vector<2x12xf32>
    %1035 = vector.extract_strided_slice %1028 {offsets = [0, 1], sizes = [2, 1], strides = [1, 1]} : vector<2x3xf32> to vector<2x1xf32>
    %1036 = vector.extract_strided_slice %881 {offsets = [1, 0], sizes = [1, 12], strides = [1, 1]} : vector<3x12xf32> to vector<1x12xf32>
    %1037 = vector.broadcast %1035 : vector<2x1xf32> to vector<2x12xf32>
    %1038 = vector.broadcast %1036 : vector<1x12xf32> to vector<2x12xf32>
    %1039 = arith.mulf %1037, %1038 : vector<2x12xf32>
    %1040 = arith.addf %1034, %1039 : vector<2x12xf32>
    %1041 = vector.extract_strided_slice %1028 {offsets = [0, 2], sizes = [2, 1], strides = [1, 1]} : vector<2x3xf32> to vector<2x1xf32>
    %1042 = vector.extract_strided_slice %881 {offsets = [2, 0], sizes = [1, 12], strides = [1, 1]} : vector<3x12xf32> to vector<1x12xf32>
    %1043 = vector.broadcast %1041 : vector<2x1xf32> to vector<2x12xf32>
    %1044 = vector.broadcast %1042 : vector<1x12xf32> to vector<2x12xf32>
    %1045 = arith.mulf %1043, %1044 : vector<2x12xf32>
    %1046 = arith.addf %1040, %1045 : vector<2x12xf32>
    %1047 = arith.addf %1029, %1046 : vector<2x12xf32>
    %1048 = vector.extract_strided_slice %1047 {offsets = [0, 0], sizes = [2, 9], strides = [1, 1]} : vector<2x12xf32> to vector<2x9xf32>
    %1049 = arith.negf %1048 : vector<2x9xf32>
    %1050 = math.exp %1049 : vector<2x9xf32>
    %cst_73 = arith.constant 1.000000e+00 : f32
    %1051 = vector.broadcast %cst_73 : f32 to vector<2x9xf32>
    %1052 = arith.addf %1051, %1050 : vector<2x9xf32>
    %1053 = arith.divf %1051, %1052 : vector<2x9xf32>
    %1054 = vector.extract_strided_slice %1047 {offsets = [0, 9], sizes = [2, 3], strides = [1, 1]} : vector<2x12xf32> to vector<2x3xf32>
    %1055 = math.tanh %1054 : vector<2x3xf32>
    %1056 = vector.extract_strided_slice %1053 {offsets = [0, 0], sizes = [2, 3], strides = [1, 1]} : vector<2x9xf32> to vector<2x3xf32>
    %1057 = vector.extract_strided_slice %1053 {offsets = [0, 3], sizes = [2, 3], strides = [1, 1]} : vector<2x9xf32> to vector<2x3xf32>
    %1058 = vector.extract_strided_slice %1053 {offsets = [0, 6], sizes = [2, 3], strides = [1, 1]} : vector<2x9xf32> to vector<2x3xf32>
    %1059 = arith.mulf %1057, %1026 : vector<2x3xf32>
    %1060 = arith.mulf %1056, %1055 : vector<2x3xf32>
    %1061 = arith.addf %1059, %1060 : vector<2x3xf32>
    %1062 = math.tanh %1061 : vector<2x3xf32>
    %1063 = arith.mulf %1058, %1062 : vector<2x3xf32>
    %1064 = vector.extract_strided_slice %886 {offsets = [10, 0], sizes = [2, 12], strides = [1, 1]} : vector<16x12xf32> to vector<2x12xf32>
    %1065 = vector.extract_strided_slice %1063 {offsets = [0, 0], sizes = [2, 1], strides = [1, 1]} : vector<2x3xf32> to vector<2x1xf32>
    %1066 = vector.extract_strided_slice %881 {offsets = [0, 0], sizes = [1, 12], strides = [1, 1]} : vector<3x12xf32> to vector<1x12xf32>
    %1067 = vector.broadcast %1065 : vector<2x1xf32> to vector<2x12xf32>
    %1068 = vector.broadcast %1066 : vector<1x12xf32> to vector<2x12xf32>
    %1069 = arith.mulf %1067, %1068 : vector<2x12xf32>
    %1070 = vector.extract_strided_slice %1063 {offsets = [0, 1], sizes = [2, 1], strides = [1, 1]} : vector<2x3xf32> to vector<2x1xf32>
    %1071 = vector.extract_strided_slice %881 {offsets = [1, 0], sizes = [1, 12], strides = [1, 1]} : vector<3x12xf32> to vector<1x12xf32>
    %1072 = vector.broadcast %1070 : vector<2x1xf32> to vector<2x12xf32>
    %1073 = vector.broadcast %1071 : vector<1x12xf32> to vector<2x12xf32>
    %1074 = arith.mulf %1072, %1073 : vector<2x12xf32>
    %1075 = arith.addf %1069, %1074 : vector<2x12xf32>
    %1076 = vector.extract_strided_slice %1063 {offsets = [0, 2], sizes = [2, 1], strides = [1, 1]} : vector<2x3xf32> to vector<2x1xf32>
    %1077 = vector.extract_strided_slice %881 {offsets = [2, 0], sizes = [1, 12], strides = [1, 1]} : vector<3x12xf32> to vector<1x12xf32>
    %1078 = vector.broadcast %1076 : vector<2x1xf32> to vector<2x12xf32>
    %1079 = vector.broadcast %1077 : vector<1x12xf32> to vector<2x12xf32>
    %1080 = arith.mulf %1078, %1079 : vector<2x12xf32>
    %1081 = arith.addf %1075, %1080 : vector<2x12xf32>
    %1082 = arith.addf %1064, %1081 : vector<2x12xf32>
    %1083 = vector.extract_strided_slice %1082 {offsets = [0, 0], sizes = [2, 9], strides = [1, 1]} : vector<2x12xf32> to vector<2x9xf32>
    %1084 = arith.negf %1083 : vector<2x9xf32>
    %1085 = math.exp %1084 : vector<2x9xf32>
    %cst_74 = arith.constant 1.000000e+00 : f32
    %1086 = vector.broadcast %cst_74 : f32 to vector<2x9xf32>
    %1087 = arith.addf %1086, %1085 : vector<2x9xf32>
    %1088 = arith.divf %1086, %1087 : vector<2x9xf32>
    %1089 = vector.extract_strided_slice %1082 {offsets = [0, 9], sizes = [2, 3], strides = [1, 1]} : vector<2x12xf32> to vector<2x3xf32>
    %1090 = math.tanh %1089 : vector<2x3xf32>
    %1091 = vector.extract_strided_slice %1088 {offsets = [0, 0], sizes = [2, 3], strides = [1, 1]} : vector<2x9xf32> to vector<2x3xf32>
    %1092 = vector.extract_strided_slice %1088 {offsets = [0, 3], sizes = [2, 3], strides = [1, 1]} : vector<2x9xf32> to vector<2x3xf32>
    %1093 = vector.extract_strided_slice %1088 {offsets = [0, 6], sizes = [2, 3], strides = [1, 1]} : vector<2x9xf32> to vector<2x3xf32>
    %1094 = arith.mulf %1092, %1061 : vector<2x3xf32>
    %1095 = arith.mulf %1091, %1090 : vector<2x3xf32>
    %1096 = arith.addf %1094, %1095 : vector<2x3xf32>
    %1097 = math.tanh %1096 : vector<2x3xf32>
    %1098 = arith.mulf %1093, %1097 : vector<2x3xf32>
    %1099 = vector.extract_strided_slice %886 {offsets = [12, 0], sizes = [2, 12], strides = [1, 1]} : vector<16x12xf32> to vector<2x12xf32>
    %1100 = vector.extract_strided_slice %1098 {offsets = [0, 0], sizes = [2, 1], strides = [1, 1]} : vector<2x3xf32> to vector<2x1xf32>
    %1101 = vector.extract_strided_slice %881 {offsets = [0, 0], sizes = [1, 12], strides = [1, 1]} : vector<3x12xf32> to vector<1x12xf32>
    %1102 = vector.broadcast %1100 : vector<2x1xf32> to vector<2x12xf32>
    %1103 = vector.broadcast %1101 : vector<1x12xf32> to vector<2x12xf32>
    %1104 = arith.mulf %1102, %1103 : vector<2x12xf32>
    %1105 = vector.extract_strided_slice %1098 {offsets = [0, 1], sizes = [2, 1], strides = [1, 1]} : vector<2x3xf32> to vector<2x1xf32>
    %1106 = vector.extract_strided_slice %881 {offsets = [1, 0], sizes = [1, 12], strides = [1, 1]} : vector<3x12xf32> to vector<1x12xf32>
    %1107 = vector.broadcast %1105 : vector<2x1xf32> to vector<2x12xf32>
    %1108 = vector.broadcast %1106 : vector<1x12xf32> to vector<2x12xf32>
    %1109 = arith.mulf %1107, %1108 : vector<2x12xf32>
    %1110 = arith.addf %1104, %1109 : vector<2x12xf32>
    %1111 = vector.extract_strided_slice %1098 {offsets = [0, 2], sizes = [2, 1], strides = [1, 1]} : vector<2x3xf32> to vector<2x1xf32>
    %1112 = vector.extract_strided_slice %881 {offsets = [2, 0], sizes = [1, 12], strides = [1, 1]} : vector<3x12xf32> to vector<1x12xf32>
    %1113 = vector.broadcast %1111 : vector<2x1xf32> to vector<2x12xf32>
    %1114 = vector.broadcast %1112 : vector<1x12xf32> to vector<2x12xf32>
    %1115 = arith.mulf %1113, %1114 : vector<2x12xf32>
    %1116 = arith.addf %1110, %1115 : vector<2x12xf32>
    %1117 = arith.addf %1099, %1116 : vector<2x12xf32>
    %1118 = vector.extract_strided_slice %1117 {offsets = [0, 0], sizes = [2, 9], strides = [1, 1]} : vector<2x12xf32> to vector<2x9xf32>
    %1119 = arith.negf %1118 : vector<2x9xf32>
    %1120 = math.exp %1119 : vector<2x9xf32>
    %cst_75 = arith.constant 1.000000e+00 : f32
    %1121 = vector.broadcast %cst_75 : f32 to vector<2x9xf32>
    %1122 = arith.addf %1121, %1120 : vector<2x9xf32>
    %1123 = arith.divf %1121, %1122 : vector<2x9xf32>
    %1124 = vector.extract_strided_slice %1117 {offsets = [0, 9], sizes = [2, 3], strides = [1, 1]} : vector<2x12xf32> to vector<2x3xf32>
    %1125 = math.tanh %1124 : vector<2x3xf32>
    %1126 = vector.extract_strided_slice %1123 {offsets = [0, 0], sizes = [2, 3], strides = [1, 1]} : vector<2x9xf32> to vector<2x3xf32>
    %1127 = vector.extract_strided_slice %1123 {offsets = [0, 3], sizes = [2, 3], strides = [1, 1]} : vector<2x9xf32> to vector<2x3xf32>
    %1128 = vector.extract_strided_slice %1123 {offsets = [0, 6], sizes = [2, 3], strides = [1, 1]} : vector<2x9xf32> to vector<2x3xf32>
    %1129 = arith.mulf %1127, %1096 : vector<2x3xf32>
    %1130 = arith.mulf %1126, %1125 : vector<2x3xf32>
    %1131 = arith.addf %1129, %1130 : vector<2x3xf32>
    %1132 = math.tanh %1131 : vector<2x3xf32>
    %1133 = arith.mulf %1128, %1132 : vector<2x3xf32>
    %1134 = vector.extract_strided_slice %886 {offsets = [14, 0], sizes = [2, 12], strides = [1, 1]} : vector<16x12xf32> to vector<2x12xf32>
    %1135 = vector.extract_strided_slice %1133 {offsets = [0, 0], sizes = [2, 1], strides = [1, 1]} : vector<2x3xf32> to vector<2x1xf32>
    %1136 = vector.extract_strided_slice %881 {offsets = [0, 0], sizes = [1, 12], strides = [1, 1]} : vector<3x12xf32> to vector<1x12xf32>
    %1137 = vector.broadcast %1135 : vector<2x1xf32> to vector<2x12xf32>
    %1138 = vector.broadcast %1136 : vector<1x12xf32> to vector<2x12xf32>
    %1139 = arith.mulf %1137, %1138 : vector<2x12xf32>
    %1140 = vector.extract_strided_slice %1133 {offsets = [0, 1], sizes = [2, 1], strides = [1, 1]} : vector<2x3xf32> to vector<2x1xf32>
    %1141 = vector.extract_strided_slice %881 {offsets = [1, 0], sizes = [1, 12], strides = [1, 1]} : vector<3x12xf32> to vector<1x12xf32>
    %1142 = vector.broadcast %1140 : vector<2x1xf32> to vector<2x12xf32>
    %1143 = vector.broadcast %1141 : vector<1x12xf32> to vector<2x12xf32>
    %1144 = arith.mulf %1142, %1143 : vector<2x12xf32>
    %1145 = arith.addf %1139, %1144 : vector<2x12xf32>
    %1146 = vector.extract_strided_slice %1133 {offsets = [0, 2], sizes = [2, 1], strides = [1, 1]} : vector<2x3xf32> to vector<2x1xf32>
    %1147 = vector.extract_strided_slice %881 {offsets = [2, 0], sizes = [1, 12], strides = [1, 1]} : vector<3x12xf32> to vector<1x12xf32>
    %1148 = vector.broadcast %1146 : vector<2x1xf32> to vector<2x12xf32>
    %1149 = vector.broadcast %1147 : vector<1x12xf32> to vector<2x12xf32>
    %1150 = arith.mulf %1148, %1149 : vector<2x12xf32>
    %1151 = arith.addf %1145, %1150 : vector<2x12xf32>
    %1152 = arith.addf %1134, %1151 : vector<2x12xf32>
    %1153 = vector.extract_strided_slice %1152 {offsets = [0, 0], sizes = [2, 9], strides = [1, 1]} : vector<2x12xf32> to vector<2x9xf32>
    %1154 = arith.negf %1153 : vector<2x9xf32>
    %1155 = math.exp %1154 : vector<2x9xf32>
    %cst_76 = arith.constant 1.000000e+00 : f32
    %1156 = vector.broadcast %cst_76 : f32 to vector<2x9xf32>
    %1157 = arith.addf %1156, %1155 : vector<2x9xf32>
    %1158 = arith.divf %1156, %1157 : vector<2x9xf32>
    %1159 = vector.extract_strided_slice %1152 {offsets = [0, 9], sizes = [2, 3], strides = [1, 1]} : vector<2x12xf32> to vector<2x3xf32>
    %1160 = math.tanh %1159 : vector<2x3xf32>
    %1161 = vector.extract_strided_slice %1158 {offsets = [0, 0], sizes = [2, 3], strides = [1, 1]} : vector<2x9xf32> to vector<2x3xf32>
    %1162 = vector.extract_strided_slice %1158 {offsets = [0, 3], sizes = [2, 3], strides = [1, 1]} : vector<2x9xf32> to vector<2x3xf32>
    %1163 = vector.extract_strided_slice %1158 {offsets = [0, 6], sizes = [2, 3], strides = [1, 1]} : vector<2x9xf32> to vector<2x3xf32>
    %1164 = arith.mulf %1162, %1131 : vector<2x3xf32>
    %1165 = arith.mulf %1161, %1160 : vector<2x3xf32>
    %1166 = arith.addf %1164, %1165 : vector<2x3xf32>
    %1167 = math.tanh %1166 : vector<2x3xf32>
    %1168 = arith.mulf %1163, %1167 : vector<2x3xf32>
    %1169 = tpu.concatenate %923, %958, %993, %1028, %1063, %1098, %1133, %1168 in 0 : vector<2x3xf32>, vector<2x3xf32>, vector<2x3xf32>, vector<2x3xf32>, vector<2x3xf32>, vector<2x3xf32>, vector<2x3xf32>, vector<2x3xf32> -> vector<16x3xf32>
    %c4 = arith.constant 4 : index
    %c0_77 = arith.constant 0 : index
    %c0_78 = arith.constant 0 : index
    %1170 = vector.load %arg1[%c4, %c0_77, %c0_78] : memref<5x3x12xf32, #tpu.memory_space<vmem>>, vector<1x3x12xf32>
    %1171 = vector.shape_cast %1170 : vector<1x3x12xf32> to vector<3x12xf32>
    %c4_79 = arith.constant 4 : index
    %c0_80 = arith.constant 0 : index
    %c0_81 = arith.constant 0 : index
    %1172 = vector.load %arg2[%c4_79, %c0_80, %c0_81] : memref<5x3x12xf32, #tpu.memory_space<vmem>>, vector<1x3x12xf32>
    %1173 = vector.shape_cast %1172 : vector<1x3x12xf32> to vector<3x12xf32>
    %c4_82 = arith.constant 4 : index
    %c0_83 = arith.constant 0 : index
    %c0_84 = arith.constant 0 : index
    %1174 = vector.load %arg3[%c4_82, %c0_83, %c0_84] : memref<5x1x12xf32, #tpu.memory_space<vmem>>, vector<1x1x12xf32>
    %1175 = vector.shape_cast %1174 : vector<1x1x12xf32> to vector<1x12xf32>
    %cst_85 = arith.constant dense<0.000000e+00> : vector<16x12xf32>
    %1176 = tpu.matmul %1169, %1171, %cst_85 {dimension_numbers = #tpu.dot_dimension_numbers<[1], [0], [0], [1], [0, 0, 1, 1], [], []>} : vector<16x3xf32>, vector<3x12xf32>, vector<16x12xf32> -> vector<16x12xf32>
    %1177 = vector.broadcast %1175 : vector<1x12xf32> to vector<16x12xf32>
    %1178 = arith.addf %1176, %1177 : vector<16x12xf32>
    %cst_86 = arith.constant 0.000000e+00 : f32
    %1179 = vector.broadcast %cst_86 : f32 to vector<2x3xf32>
    %cst_87 = arith.constant 0.000000e+00 : f32
    %1180 = vector.broadcast %cst_87 : f32 to vector<2x3xf32>
    %1181 = vector.extract_strided_slice %1178 {offsets = [0, 0], sizes = [2, 12], strides = [1, 1]} : vector<16x12xf32> to vector<2x12xf32>
    %1182 = vector.extract_strided_slice %1179 {offsets = [0, 0], sizes = [2, 1], strides = [1, 1]} : vector<2x3xf32> to vector<2x1xf32>
    %1183 = vector.extract_strided_slice %1173 {offsets = [0, 0], sizes = [1, 12], strides = [1, 1]} : vector<3x12xf32> to vector<1x12xf32>
    %1184 = vector.broadcast %1182 : vector<2x1xf32> to vector<2x12xf32>
    %1185 = vector.broadcast %1183 : vector<1x12xf32> to vector<2x12xf32>
    %1186 = arith.mulf %1184, %1185 : vector<2x12xf32>
    %1187 = vector.extract_strided_slice %1179 {offsets = [0, 1], sizes = [2, 1], strides = [1, 1]} : vector<2x3xf32> to vector<2x1xf32>
    %1188 = vector.extract_strided_slice %1173 {offsets = [1, 0], sizes = [1, 12], strides = [1, 1]} : vector<3x12xf32> to vector<1x12xf32>
    %1189 = vector.broadcast %1187 : vector<2x1xf32> to vector<2x12xf32>
    %1190 = vector.broadcast %1188 : vector<1x12xf32> to vector<2x12xf32>
    %1191 = arith.mulf %1189, %1190 : vector<2x12xf32>
    %1192 = arith.addf %1186, %1191 : vector<2x12xf32>
    %1193 = vector.extract_strided_slice %1179 {offsets = [0, 2], sizes = [2, 1], strides = [1, 1]} : vector<2x3xf32> to vector<2x1xf32>
    %1194 = vector.extract_strided_slice %1173 {offsets = [2, 0], sizes = [1, 12], strides = [1, 1]} : vector<3x12xf32> to vector<1x12xf32>
    %1195 = vector.broadcast %1193 : vector<2x1xf32> to vector<2x12xf32>
    %1196 = vector.broadcast %1194 : vector<1x12xf32> to vector<2x12xf32>
    %1197 = arith.mulf %1195, %1196 : vector<2x12xf32>
    %1198 = arith.addf %1192, %1197 : vector<2x12xf32>
    %1199 = arith.addf %1181, %1198 : vector<2x12xf32>
    %1200 = vector.extract_strided_slice %1199 {offsets = [0, 0], sizes = [2, 9], strides = [1, 1]} : vector<2x12xf32> to vector<2x9xf32>
    %1201 = arith.negf %1200 : vector<2x9xf32>
    %1202 = math.exp %1201 : vector<2x9xf32>
    %cst_88 = arith.constant 1.000000e+00 : f32
    %1203 = vector.broadcast %cst_88 : f32 to vector<2x9xf32>
    %1204 = arith.addf %1203, %1202 : vector<2x9xf32>
    %1205 = arith.divf %1203, %1204 : vector<2x9xf32>
    %1206 = vector.extract_strided_slice %1199 {offsets = [0, 9], sizes = [2, 3], strides = [1, 1]} : vector<2x12xf32> to vector<2x3xf32>
    %1207 = math.tanh %1206 : vector<2x3xf32>
    %1208 = vector.extract_strided_slice %1205 {offsets = [0, 0], sizes = [2, 3], strides = [1, 1]} : vector<2x9xf32> to vector<2x3xf32>
    %1209 = vector.extract_strided_slice %1205 {offsets = [0, 3], sizes = [2, 3], strides = [1, 1]} : vector<2x9xf32> to vector<2x3xf32>
    %1210 = vector.extract_strided_slice %1205 {offsets = [0, 6], sizes = [2, 3], strides = [1, 1]} : vector<2x9xf32> to vector<2x3xf32>
    %1211 = arith.mulf %1209, %1180 : vector<2x3xf32>
    %1212 = arith.mulf %1208, %1207 : vector<2x3xf32>
    %1213 = arith.addf %1211, %1212 : vector<2x3xf32>
    %1214 = math.tanh %1213 : vector<2x3xf32>
    %1215 = arith.mulf %1210, %1214 : vector<2x3xf32>
    %1216 = vector.extract_strided_slice %1178 {offsets = [2, 0], sizes = [2, 12], strides = [1, 1]} : vector<16x12xf32> to vector<2x12xf32>
    %1217 = vector.extract_strided_slice %1215 {offsets = [0, 0], sizes = [2, 1], strides = [1, 1]} : vector<2x3xf32> to vector<2x1xf32>
    %1218 = vector.extract_strided_slice %1173 {offsets = [0, 0], sizes = [1, 12], strides = [1, 1]} : vector<3x12xf32> to vector<1x12xf32>
    %1219 = vector.broadcast %1217 : vector<2x1xf32> to vector<2x12xf32>
    %1220 = vector.broadcast %1218 : vector<1x12xf32> to vector<2x12xf32>
    %1221 = arith.mulf %1219, %1220 : vector<2x12xf32>
    %1222 = vector.extract_strided_slice %1215 {offsets = [0, 1], sizes = [2, 1], strides = [1, 1]} : vector<2x3xf32> to vector<2x1xf32>
    %1223 = vector.extract_strided_slice %1173 {offsets = [1, 0], sizes = [1, 12], strides = [1, 1]} : vector<3x12xf32> to vector<1x12xf32>
    %1224 = vector.broadcast %1222 : vector<2x1xf32> to vector<2x12xf32>
    %1225 = vector.broadcast %1223 : vector<1x12xf32> to vector<2x12xf32>
    %1226 = arith.mulf %1224, %1225 : vector<2x12xf32>
    %1227 = arith.addf %1221, %1226 : vector<2x12xf32>
    %1228 = vector.extract_strided_slice %1215 {offsets = [0, 2], sizes = [2, 1], strides = [1, 1]} : vector<2x3xf32> to vector<2x1xf32>
    %1229 = vector.extract_strided_slice %1173 {offsets = [2, 0], sizes = [1, 12], strides = [1, 1]} : vector<3x12xf32> to vector<1x12xf32>
    %1230 = vector.broadcast %1228 : vector<2x1xf32> to vector<2x12xf32>
    %1231 = vector.broadcast %1229 : vector<1x12xf32> to vector<2x12xf32>
    %1232 = arith.mulf %1230, %1231 : vector<2x12xf32>
    %1233 = arith.addf %1227, %1232 : vector<2x12xf32>
    %1234 = arith.addf %1216, %1233 : vector<2x12xf32>
    %1235 = vector.extract_strided_slice %1234 {offsets = [0, 0], sizes = [2, 9], strides = [1, 1]} : vector<2x12xf32> to vector<2x9xf32>
    %1236 = arith.negf %1235 : vector<2x9xf32>
    %1237 = math.exp %1236 : vector<2x9xf32>
    %cst_89 = arith.constant 1.000000e+00 : f32
    %1238 = vector.broadcast %cst_89 : f32 to vector<2x9xf32>
    %1239 = arith.addf %1238, %1237 : vector<2x9xf32>
    %1240 = arith.divf %1238, %1239 : vector<2x9xf32>
    %1241 = vector.extract_strided_slice %1234 {offsets = [0, 9], sizes = [2, 3], strides = [1, 1]} : vector<2x12xf32> to vector<2x3xf32>
    %1242 = math.tanh %1241 : vector<2x3xf32>
    %1243 = vector.extract_strided_slice %1240 {offsets = [0, 0], sizes = [2, 3], strides = [1, 1]} : vector<2x9xf32> to vector<2x3xf32>
    %1244 = vector.extract_strided_slice %1240 {offsets = [0, 3], sizes = [2, 3], strides = [1, 1]} : vector<2x9xf32> to vector<2x3xf32>
    %1245 = vector.extract_strided_slice %1240 {offsets = [0, 6], sizes = [2, 3], strides = [1, 1]} : vector<2x9xf32> to vector<2x3xf32>
    %1246 = arith.mulf %1244, %1213 : vector<2x3xf32>
    %1247 = arith.mulf %1243, %1242 : vector<2x3xf32>
    %1248 = arith.addf %1246, %1247 : vector<2x3xf32>
    %1249 = math.tanh %1248 : vector<2x3xf32>
    %1250 = arith.mulf %1245, %1249 : vector<2x3xf32>
    %1251 = vector.extract_strided_slice %1178 {offsets = [4, 0], sizes = [2, 12], strides = [1, 1]} : vector<16x12xf32> to vector<2x12xf32>
    %1252 = vector.extract_strided_slice %1250 {offsets = [0, 0], sizes = [2, 1], strides = [1, 1]} : vector<2x3xf32> to vector<2x1xf32>
    %1253 = vector.extract_strided_slice %1173 {offsets = [0, 0], sizes = [1, 12], strides = [1, 1]} : vector<3x12xf32> to vector<1x12xf32>
    %1254 = vector.broadcast %1252 : vector<2x1xf32> to vector<2x12xf32>
    %1255 = vector.broadcast %1253 : vector<1x12xf32> to vector<2x12xf32>
    %1256 = arith.mulf %1254, %1255 : vector<2x12xf32>
    %1257 = vector.extract_strided_slice %1250 {offsets = [0, 1], sizes = [2, 1], strides = [1, 1]} : vector<2x3xf32> to vector<2x1xf32>
    %1258 = vector.extract_strided_slice %1173 {offsets = [1, 0], sizes = [1, 12], strides = [1, 1]} : vector<3x12xf32> to vector<1x12xf32>
    %1259 = vector.broadcast %1257 : vector<2x1xf32> to vector<2x12xf32>
    %1260 = vector.broadcast %1258 : vector<1x12xf32> to vector<2x12xf32>
    %1261 = arith.mulf %1259, %1260 : vector<2x12xf32>
    %1262 = arith.addf %1256, %1261 : vector<2x12xf32>
    %1263 = vector.extract_strided_slice %1250 {offsets = [0, 2], sizes = [2, 1], strides = [1, 1]} : vector<2x3xf32> to vector<2x1xf32>
    %1264 = vector.extract_strided_slice %1173 {offsets = [2, 0], sizes = [1, 12], strides = [1, 1]} : vector<3x12xf32> to vector<1x12xf32>
    %1265 = vector.broadcast %1263 : vector<2x1xf32> to vector<2x12xf32>
    %1266 = vector.broadcast %1264 : vector<1x12xf32> to vector<2x12xf32>
    %1267 = arith.mulf %1265, %1266 : vector<2x12xf32>
    %1268 = arith.addf %1262, %1267 : vector<2x12xf32>
    %1269 = arith.addf %1251, %1268 : vector<2x12xf32>
    %1270 = vector.extract_strided_slice %1269 {offsets = [0, 0], sizes = [2, 9], strides = [1, 1]} : vector<2x12xf32> to vector<2x9xf32>
    %1271 = arith.negf %1270 : vector<2x9xf32>
    %1272 = math.exp %1271 : vector<2x9xf32>
    %cst_90 = arith.constant 1.000000e+00 : f32
    %1273 = vector.broadcast %cst_90 : f32 to vector<2x9xf32>
    %1274 = arith.addf %1273, %1272 : vector<2x9xf32>
    %1275 = arith.divf %1273, %1274 : vector<2x9xf32>
    %1276 = vector.extract_strided_slice %1269 {offsets = [0, 9], sizes = [2, 3], strides = [1, 1]} : vector<2x12xf32> to vector<2x3xf32>
    %1277 = math.tanh %1276 : vector<2x3xf32>
    %1278 = vector.extract_strided_slice %1275 {offsets = [0, 0], sizes = [2, 3], strides = [1, 1]} : vector<2x9xf32> to vector<2x3xf32>
    %1279 = vector.extract_strided_slice %1275 {offsets = [0, 3], sizes = [2, 3], strides = [1, 1]} : vector<2x9xf32> to vector<2x3xf32>
    %1280 = vector.extract_strided_slice %1275 {offsets = [0, 6], sizes = [2, 3], strides = [1, 1]} : vector<2x9xf32> to vector<2x3xf32>
    %1281 = arith.mulf %1279, %1248 : vector<2x3xf32>
    %1282 = arith.mulf %1278, %1277 : vector<2x3xf32>
    %1283 = arith.addf %1281, %1282 : vector<2x3xf32>
    %1284 = math.tanh %1283 : vector<2x3xf32>
    %1285 = arith.mulf %1280, %1284 : vector<2x3xf32>
    %1286 = vector.extract_strided_slice %1178 {offsets = [6, 0], sizes = [2, 12], strides = [1, 1]} : vector<16x12xf32> to vector<2x12xf32>
    %1287 = vector.extract_strided_slice %1285 {offsets = [0, 0], sizes = [2, 1], strides = [1, 1]} : vector<2x3xf32> to vector<2x1xf32>
    %1288 = vector.extract_strided_slice %1173 {offsets = [0, 0], sizes = [1, 12], strides = [1, 1]} : vector<3x12xf32> to vector<1x12xf32>
    %1289 = vector.broadcast %1287 : vector<2x1xf32> to vector<2x12xf32>
    %1290 = vector.broadcast %1288 : vector<1x12xf32> to vector<2x12xf32>
    %1291 = arith.mulf %1289, %1290 : vector<2x12xf32>
    %1292 = vector.extract_strided_slice %1285 {offsets = [0, 1], sizes = [2, 1], strides = [1, 1]} : vector<2x3xf32> to vector<2x1xf32>
    %1293 = vector.extract_strided_slice %1173 {offsets = [1, 0], sizes = [1, 12], strides = [1, 1]} : vector<3x12xf32> to vector<1x12xf32>
    %1294 = vector.broadcast %1292 : vector<2x1xf32> to vector<2x12xf32>
    %1295 = vector.broadcast %1293 : vector<1x12xf32> to vector<2x12xf32>
    %1296 = arith.mulf %1294, %1295 : vector<2x12xf32>
    %1297 = arith.addf %1291, %1296 : vector<2x12xf32>
    %1298 = vector.extract_strided_slice %1285 {offsets = [0, 2], sizes = [2, 1], strides = [1, 1]} : vector<2x3xf32> to vector<2x1xf32>
    %1299 = vector.extract_strided_slice %1173 {offsets = [2, 0], sizes = [1, 12], strides = [1, 1]} : vector<3x12xf32> to vector<1x12xf32>
    %1300 = vector.broadcast %1298 : vector<2x1xf32> to vector<2x12xf32>
    %1301 = vector.broadcast %1299 : vector<1x12xf32> to vector<2x12xf32>
    %1302 = arith.mulf %1300, %1301 : vector<2x12xf32>
    %1303 = arith.addf %1297, %1302 : vector<2x12xf32>
    %1304 = arith.addf %1286, %1303 : vector<2x12xf32>
    %1305 = vector.extract_strided_slice %1304 {offsets = [0, 0], sizes = [2, 9], strides = [1, 1]} : vector<2x12xf32> to vector<2x9xf32>
    %1306 = arith.negf %1305 : vector<2x9xf32>
    %1307 = math.exp %1306 : vector<2x9xf32>
    %cst_91 = arith.constant 1.000000e+00 : f32
    %1308 = vector.broadcast %cst_91 : f32 to vector<2x9xf32>
    %1309 = arith.addf %1308, %1307 : vector<2x9xf32>
    %1310 = arith.divf %1308, %1309 : vector<2x9xf32>
    %1311 = vector.extract_strided_slice %1304 {offsets = [0, 9], sizes = [2, 3], strides = [1, 1]} : vector<2x12xf32> to vector<2x3xf32>
    %1312 = math.tanh %1311 : vector<2x3xf32>
    %1313 = vector.extract_strided_slice %1310 {offsets = [0, 0], sizes = [2, 3], strides = [1, 1]} : vector<2x9xf32> to vector<2x3xf32>
    %1314 = vector.extract_strided_slice %1310 {offsets = [0, 3], sizes = [2, 3], strides = [1, 1]} : vector<2x9xf32> to vector<2x3xf32>
    %1315 = vector.extract_strided_slice %1310 {offsets = [0, 6], sizes = [2, 3], strides = [1, 1]} : vector<2x9xf32> to vector<2x3xf32>
    %1316 = arith.mulf %1314, %1283 : vector<2x3xf32>
    %1317 = arith.mulf %1313, %1312 : vector<2x3xf32>
    %1318 = arith.addf %1316, %1317 : vector<2x3xf32>
    %1319 = math.tanh %1318 : vector<2x3xf32>
    %1320 = arith.mulf %1315, %1319 : vector<2x3xf32>
    %1321 = vector.extract_strided_slice %1178 {offsets = [8, 0], sizes = [2, 12], strides = [1, 1]} : vector<16x12xf32> to vector<2x12xf32>
    %1322 = vector.extract_strided_slice %1320 {offsets = [0, 0], sizes = [2, 1], strides = [1, 1]} : vector<2x3xf32> to vector<2x1xf32>
    %1323 = vector.extract_strided_slice %1173 {offsets = [0, 0], sizes = [1, 12], strides = [1, 1]} : vector<3x12xf32> to vector<1x12xf32>
    %1324 = vector.broadcast %1322 : vector<2x1xf32> to vector<2x12xf32>
    %1325 = vector.broadcast %1323 : vector<1x12xf32> to vector<2x12xf32>
    %1326 = arith.mulf %1324, %1325 : vector<2x12xf32>
    %1327 = vector.extract_strided_slice %1320 {offsets = [0, 1], sizes = [2, 1], strides = [1, 1]} : vector<2x3xf32> to vector<2x1xf32>
    %1328 = vector.extract_strided_slice %1173 {offsets = [1, 0], sizes = [1, 12], strides = [1, 1]} : vector<3x12xf32> to vector<1x12xf32>
    %1329 = vector.broadcast %1327 : vector<2x1xf32> to vector<2x12xf32>
    %1330 = vector.broadcast %1328 : vector<1x12xf32> to vector<2x12xf32>
    %1331 = arith.mulf %1329, %1330 : vector<2x12xf32>
    %1332 = arith.addf %1326, %1331 : vector<2x12xf32>
    %1333 = vector.extract_strided_slice %1320 {offsets = [0, 2], sizes = [2, 1], strides = [1, 1]} : vector<2x3xf32> to vector<2x1xf32>
    %1334 = vector.extract_strided_slice %1173 {offsets = [2, 0], sizes = [1, 12], strides = [1, 1]} : vector<3x12xf32> to vector<1x12xf32>
    %1335 = vector.broadcast %1333 : vector<2x1xf32> to vector<2x12xf32>
    %1336 = vector.broadcast %1334 : vector<1x12xf32> to vector<2x12xf32>
    %1337 = arith.mulf %1335, %1336 : vector<2x12xf32>
    %1338 = arith.addf %1332, %1337 : vector<2x12xf32>
    %1339 = arith.addf %1321, %1338 : vector<2x12xf32>
    %1340 = vector.extract_strided_slice %1339 {offsets = [0, 0], sizes = [2, 9], strides = [1, 1]} : vector<2x12xf32> to vector<2x9xf32>
    %1341 = arith.negf %1340 : vector<2x9xf32>
    %1342 = math.exp %1341 : vector<2x9xf32>
    %cst_92 = arith.constant 1.000000e+00 : f32
    %1343 = vector.broadcast %cst_92 : f32 to vector<2x9xf32>
    %1344 = arith.addf %1343, %1342 : vector<2x9xf32>
    %1345 = arith.divf %1343, %1344 : vector<2x9xf32>
    %1346 = vector.extract_strided_slice %1339 {offsets = [0, 9], sizes = [2, 3], strides = [1, 1]} : vector<2x12xf32> to vector<2x3xf32>
    %1347 = math.tanh %1346 : vector<2x3xf32>
    %1348 = vector.extract_strided_slice %1345 {offsets = [0, 0], sizes = [2, 3], strides = [1, 1]} : vector<2x9xf32> to vector<2x3xf32>
    %1349 = vector.extract_strided_slice %1345 {offsets = [0, 3], sizes = [2, 3], strides = [1, 1]} : vector<2x9xf32> to vector<2x3xf32>
    %1350 = vector.extract_strided_slice %1345 {offsets = [0, 6], sizes = [2, 3], strides = [1, 1]} : vector<2x9xf32> to vector<2x3xf32>
    %1351 = arith.mulf %1349, %1318 : vector<2x3xf32>
    %1352 = arith.mulf %1348, %1347 : vector<2x3xf32>
    %1353 = arith.addf %1351, %1352 : vector<2x3xf32>
    %1354 = math.tanh %1353 : vector<2x3xf32>
    %1355 = arith.mulf %1350, %1354 : vector<2x3xf32>
    %1356 = vector.extract_strided_slice %1178 {offsets = [10, 0], sizes = [2, 12], strides = [1, 1]} : vector<16x12xf32> to vector<2x12xf32>
    %1357 = vector.extract_strided_slice %1355 {offsets = [0, 0], sizes = [2, 1], strides = [1, 1]} : vector<2x3xf32> to vector<2x1xf32>
    %1358 = vector.extract_strided_slice %1173 {offsets = [0, 0], sizes = [1, 12], strides = [1, 1]} : vector<3x12xf32> to vector<1x12xf32>
    %1359 = vector.broadcast %1357 : vector<2x1xf32> to vector<2x12xf32>
    %1360 = vector.broadcast %1358 : vector<1x12xf32> to vector<2x12xf32>
    %1361 = arith.mulf %1359, %1360 : vector<2x12xf32>
    %1362 = vector.extract_strided_slice %1355 {offsets = [0, 1], sizes = [2, 1], strides = [1, 1]} : vector<2x3xf32> to vector<2x1xf32>
    %1363 = vector.extract_strided_slice %1173 {offsets = [1, 0], sizes = [1, 12], strides = [1, 1]} : vector<3x12xf32> to vector<1x12xf32>
    %1364 = vector.broadcast %1362 : vector<2x1xf32> to vector<2x12xf32>
    %1365 = vector.broadcast %1363 : vector<1x12xf32> to vector<2x12xf32>
    %1366 = arith.mulf %1364, %1365 : vector<2x12xf32>
    %1367 = arith.addf %1361, %1366 : vector<2x12xf32>
    %1368 = vector.extract_strided_slice %1355 {offsets = [0, 2], sizes = [2, 1], strides = [1, 1]} : vector<2x3xf32> to vector<2x1xf32>
    %1369 = vector.extract_strided_slice %1173 {offsets = [2, 0], sizes = [1, 12], strides = [1, 1]} : vector<3x12xf32> to vector<1x12xf32>
    %1370 = vector.broadcast %1368 : vector<2x1xf32> to vector<2x12xf32>
    %1371 = vector.broadcast %1369 : vector<1x12xf32> to vector<2x12xf32>
    %1372 = arith.mulf %1370, %1371 : vector<2x12xf32>
    %1373 = arith.addf %1367, %1372 : vector<2x12xf32>
    %1374 = arith.addf %1356, %1373 : vector<2x12xf32>
    %1375 = vector.extract_strided_slice %1374 {offsets = [0, 0], sizes = [2, 9], strides = [1, 1]} : vector<2x12xf32> to vector<2x9xf32>
    %1376 = arith.negf %1375 : vector<2x9xf32>
    %1377 = math.exp %1376 : vector<2x9xf32>
    %cst_93 = arith.constant 1.000000e+00 : f32
    %1378 = vector.broadcast %cst_93 : f32 to vector<2x9xf32>
    %1379 = arith.addf %1378, %1377 : vector<2x9xf32>
    %1380 = arith.divf %1378, %1379 : vector<2x9xf32>
    %1381 = vector.extract_strided_slice %1374 {offsets = [0, 9], sizes = [2, 3], strides = [1, 1]} : vector<2x12xf32> to vector<2x3xf32>
    %1382 = math.tanh %1381 : vector<2x3xf32>
    %1383 = vector.extract_strided_slice %1380 {offsets = [0, 0], sizes = [2, 3], strides = [1, 1]} : vector<2x9xf32> to vector<2x3xf32>
    %1384 = vector.extract_strided_slice %1380 {offsets = [0, 3], sizes = [2, 3], strides = [1, 1]} : vector<2x9xf32> to vector<2x3xf32>
    %1385 = vector.extract_strided_slice %1380 {offsets = [0, 6], sizes = [2, 3], strides = [1, 1]} : vector<2x9xf32> to vector<2x3xf32>
    %1386 = arith.mulf %1384, %1353 : vector<2x3xf32>
    %1387 = arith.mulf %1383, %1382 : vector<2x3xf32>
    %1388 = arith.addf %1386, %1387 : vector<2x3xf32>
    %1389 = math.tanh %1388 : vector<2x3xf32>
    %1390 = arith.mulf %1385, %1389 : vector<2x3xf32>
    %1391 = vector.extract_strided_slice %1178 {offsets = [12, 0], sizes = [2, 12], strides = [1, 1]} : vector<16x12xf32> to vector<2x12xf32>
    %1392 = vector.extract_strided_slice %1390 {offsets = [0, 0], sizes = [2, 1], strides = [1, 1]} : vector<2x3xf32> to vector<2x1xf32>
    %1393 = vector.extract_strided_slice %1173 {offsets = [0, 0], sizes = [1, 12], strides = [1, 1]} : vector<3x12xf32> to vector<1x12xf32>
    %1394 = vector.broadcast %1392 : vector<2x1xf32> to vector<2x12xf32>
    %1395 = vector.broadcast %1393 : vector<1x12xf32> to vector<2x12xf32>
    %1396 = arith.mulf %1394, %1395 : vector<2x12xf32>
    %1397 = vector.extract_strided_slice %1390 {offsets = [0, 1], sizes = [2, 1], strides = [1, 1]} : vector<2x3xf32> to vector<2x1xf32>
    %1398 = vector.extract_strided_slice %1173 {offsets = [1, 0], sizes = [1, 12], strides = [1, 1]} : vector<3x12xf32> to vector<1x12xf32>
    %1399 = vector.broadcast %1397 : vector<2x1xf32> to vector<2x12xf32>
    %1400 = vector.broadcast %1398 : vector<1x12xf32> to vector<2x12xf32>
    %1401 = arith.mulf %1399, %1400 : vector<2x12xf32>
    %1402 = arith.addf %1396, %1401 : vector<2x12xf32>
    %1403 = vector.extract_strided_slice %1390 {offsets = [0, 2], sizes = [2, 1], strides = [1, 1]} : vector<2x3xf32> to vector<2x1xf32>
    %1404 = vector.extract_strided_slice %1173 {offsets = [2, 0], sizes = [1, 12], strides = [1, 1]} : vector<3x12xf32> to vector<1x12xf32>
    %1405 = vector.broadcast %1403 : vector<2x1xf32> to vector<2x12xf32>
    %1406 = vector.broadcast %1404 : vector<1x12xf32> to vector<2x12xf32>
    %1407 = arith.mulf %1405, %1406 : vector<2x12xf32>
    %1408 = arith.addf %1402, %1407 : vector<2x12xf32>
    %1409 = arith.addf %1391, %1408 : vector<2x12xf32>
    %1410 = vector.extract_strided_slice %1409 {offsets = [0, 0], sizes = [2, 9], strides = [1, 1]} : vector<2x12xf32> to vector<2x9xf32>
    %1411 = arith.negf %1410 : vector<2x9xf32>
    %1412 = math.exp %1411 : vector<2x9xf32>
    %cst_94 = arith.constant 1.000000e+00 : f32
    %1413 = vector.broadcast %cst_94 : f32 to vector<2x9xf32>
    %1414 = arith.addf %1413, %1412 : vector<2x9xf32>
    %1415 = arith.divf %1413, %1414 : vector<2x9xf32>
    %1416 = vector.extract_strided_slice %1409 {offsets = [0, 9], sizes = [2, 3], strides = [1, 1]} : vector<2x12xf32> to vector<2x3xf32>
    %1417 = math.tanh %1416 : vector<2x3xf32>
    %1418 = vector.extract_strided_slice %1415 {offsets = [0, 0], sizes = [2, 3], strides = [1, 1]} : vector<2x9xf32> to vector<2x3xf32>
    %1419 = vector.extract_strided_slice %1415 {offsets = [0, 3], sizes = [2, 3], strides = [1, 1]} : vector<2x9xf32> to vector<2x3xf32>
    %1420 = vector.extract_strided_slice %1415 {offsets = [0, 6], sizes = [2, 3], strides = [1, 1]} : vector<2x9xf32> to vector<2x3xf32>
    %1421 = arith.mulf %1419, %1388 : vector<2x3xf32>
    %1422 = arith.mulf %1418, %1417 : vector<2x3xf32>
    %1423 = arith.addf %1421, %1422 : vector<2x3xf32>
    %1424 = math.tanh %1423 : vector<2x3xf32>
    %1425 = arith.mulf %1420, %1424 : vector<2x3xf32>
    %1426 = vector.extract_strided_slice %1178 {offsets = [14, 0], sizes = [2, 12], strides = [1, 1]} : vector<16x12xf32> to vector<2x12xf32>
    %1427 = vector.extract_strided_slice %1425 {offsets = [0, 0], sizes = [2, 1], strides = [1, 1]} : vector<2x3xf32> to vector<2x1xf32>
    %1428 = vector.extract_strided_slice %1173 {offsets = [0, 0], sizes = [1, 12], strides = [1, 1]} : vector<3x12xf32> to vector<1x12xf32>
    %1429 = vector.broadcast %1427 : vector<2x1xf32> to vector<2x12xf32>
    %1430 = vector.broadcast %1428 : vector<1x12xf32> to vector<2x12xf32>
    %1431 = arith.mulf %1429, %1430 : vector<2x12xf32>
    %1432 = vector.extract_strided_slice %1425 {offsets = [0, 1], sizes = [2, 1], strides = [1, 1]} : vector<2x3xf32> to vector<2x1xf32>
    %1433 = vector.extract_strided_slice %1173 {offsets = [1, 0], sizes = [1, 12], strides = [1, 1]} : vector<3x12xf32> to vector<1x12xf32>
    %1434 = vector.broadcast %1432 : vector<2x1xf32> to vector<2x12xf32>
    %1435 = vector.broadcast %1433 : vector<1x12xf32> to vector<2x12xf32>
    %1436 = arith.mulf %1434, %1435 : vector<2x12xf32>
    %1437 = arith.addf %1431, %1436 : vector<2x12xf32>
    %1438 = vector.extract_strided_slice %1425 {offsets = [0, 2], sizes = [2, 1], strides = [1, 1]} : vector<2x3xf32> to vector<2x1xf32>
    %1439 = vector.extract_strided_slice %1173 {offsets = [2, 0], sizes = [1, 12], strides = [1, 1]} : vector<3x12xf32> to vector<1x12xf32>
    %1440 = vector.broadcast %1438 : vector<2x1xf32> to vector<2x12xf32>
    %1441 = vector.broadcast %1439 : vector<1x12xf32> to vector<2x12xf32>
    %1442 = arith.mulf %1440, %1441 : vector<2x12xf32>
    %1443 = arith.addf %1437, %1442 : vector<2x12xf32>
    %1444 = arith.addf %1426, %1443 : vector<2x12xf32>
    %1445 = vector.extract_strided_slice %1444 {offsets = [0, 0], sizes = [2, 9], strides = [1, 1]} : vector<2x12xf32> to vector<2x9xf32>
    %1446 = arith.negf %1445 : vector<2x9xf32>
    %1447 = math.exp %1446 : vector<2x9xf32>
    %cst_95 = arith.constant 1.000000e+00 : f32
    %1448 = vector.broadcast %cst_95 : f32 to vector<2x9xf32>
    %1449 = arith.addf %1448, %1447 : vector<2x9xf32>
    %1450 = arith.divf %1448, %1449 : vector<2x9xf32>
    %1451 = vector.extract_strided_slice %1444 {offsets = [0, 9], sizes = [2, 3], strides = [1, 1]} : vector<2x12xf32> to vector<2x3xf32>
    %1452 = math.tanh %1451 : vector<2x3xf32>
    %1453 = vector.extract_strided_slice %1450 {offsets = [0, 0], sizes = [2, 3], strides = [1, 1]} : vector<2x9xf32> to vector<2x3xf32>
    %1454 = vector.extract_strided_slice %1450 {offsets = [0, 3], sizes = [2, 3], strides = [1, 1]} : vector<2x9xf32> to vector<2x3xf32>
    %1455 = vector.extract_strided_slice %1450 {offsets = [0, 6], sizes = [2, 3], strides = [1, 1]} : vector<2x9xf32> to vector<2x3xf32>
    %1456 = arith.mulf %1454, %1423 : vector<2x3xf32>
    %1457 = arith.mulf %1453, %1452 : vector<2x3xf32>
    %1458 = arith.addf %1456, %1457 : vector<2x3xf32>
    %1459 = math.tanh %1458 : vector<2x3xf32>
    %1460 = arith.mulf %1455, %1459 : vector<2x3xf32>
    %c0_96 = arith.constant 0 : index
    %c0_97 = arith.constant 0 : index
    %1461 = vector.load %arg4[%c0_96, %c0_97] : memref<3x3xf32, #tpu.memory_space<vmem>>, vector<3x3xf32>
    %cst_98 = arith.constant dense<0.000000e+00> : vector<2x3xf32>
    %1462 = tpu.matmul %1460, %1461, %cst_98 {dimension_numbers = #tpu.dot_dimension_numbers<[1], [0], [0], [1], [0, 0, 1, 1], [], []>} : vector<2x3xf32>, vector<3x3xf32>, vector<2x3xf32> -> vector<2x3xf32>
    %c0_99 = arith.constant 0 : index
    %c0_100 = arith.constant 0 : index
    %1463 = vector.load %arg5[%c0_99, %c0_100] : memref<1x3xf32, #tpu.memory_space<vmem>>, vector<1x3xf32>
    %1464 = vector.broadcast %1463 : vector<1x3xf32> to vector<2x3xf32>
    %1465 = arith.addf %1462, %1464 : vector<2x3xf32>
    %cst_101 = arith.constant 1.000000e+00 : f32
    %1466 = vector.broadcast %cst_101 : f32 to vector<2x3xf32>
    %1467 = arith.addf %1466, %1465 : vector<2x3xf32>
    %1468 = arith.mulf %1467, %1 : vector<2x3xf32>
    %cst_102 = arith.constant 0.000000e+00 : f32
    %1469 = vector.broadcast %cst_102 : f32 to vector<2x3xf32>
    %1470 = arith.maximumf %1468, %1469 : vector<2x3xf32>
    %c0_103 = arith.constant 0 : index
    %c0_104 = arith.constant 0 : index
    %1471 = vector.load %arg6[%c0_103, %c0_104] : memref<2x3xf32, #tpu.memory_space<vmem>>, vector<2x3xf32>
    tpu.vector_store %arg6[%c0_103, %c0_104], %1470 {strides = array<i32>} : memref<2x3xf32, #tpu.memory_space<vmem>>, vector<2x3xf32>,
    return
  }
}

</mosaic_0001>

<llo_original>
// kernel: tpu_custom_call.1
$region0: #{tpu_custom_call.1}
  #allocation0 [shape = 'u32[]', space=smem, size = 0x4, offset = 0x4, fixed_abs, tag = 'smem constant byte address 0x4 - core index']
  #allocation1 [shape = 'u32[144,128]{1,0:T(1,128)}', space=vmem, size = 0x12000, scoped, tag = 'internal scratch']
  %s0 = inlined_call_operand.vmem [shape: f32[16,3], index: 0, kind: input, shape index: {}]
  %s1 = inlined_call_operand.vmem [shape: f32[5,3,12], index: 1, kind: input, shape index: {}]
  %s2 = inlined_call_operand.hbm [shape: f32[5,3,12], index: 2, kind: input, shape index: {}]
  %s3 = inlined_call_operand.vmem [shape: f32[5,1,12], index: 3, kind: input, shape index: {}]
  %s4 = inlined_call_operand.hbm [shape: f32[3,3], index: 4, kind: input, shape index: {}]
  %s5 = inlined_call_operand.vmem [shape: f32[1,3], index: 5, kind: input, shape index: {}]
  %s6 = inlined_call_operand.hbm [shape: f32[2,3], index: 6, kind: output, shape index: {}]
  %s7 = sld [smem:[#allocation0]]
  $region42: #{tpu_custom_call.1} parent=0
    _
  %s9 = ssub.s32 1, %s7
  %s10 = scalar_select 0, %s9, %s7
  $region1: #{tpu_custom_call.1} parent=0
    #allocation2 [shape = 'u8[10240]{0}', space=vmem, size = 0x2800, scoped, tag = 'input window, operand 2, single buffered']
    #allocation3 [shape = 's32[1]{0}', space=sflag, size = 0x4, scoped, tag = 'scoped memory for tpu_custom_call.1']
    #allocation4 [shape = 's32[1]{0}', space=sflag, size = 0x4, scoped, tag = 'scoped memory for tpu_custom_call.1']
    #allocation5 [shape = 'u8[2048]{0}', space=vmem, size = 0x800, scoped, tag = 'input window, operand 4, single buffered']
    #allocation6 [shape = 's32[1]{0}', space=sflag, size = 0x4, scoped, tag = 'scoped memory for tpu_custom_call.1']
    #allocation7 [shape = 'u8[1024]{0}', space=vmem, size = 0x400, scoped, tag = 'output window, operand 0, single buffered']
    %11 = vsyncpa [#allocation3], 0
    %12 = vsyncpa [#allocation6], 0
    %13 = vsyncpa [#allocation4], 0
    // Predicated region
    $region2: #{tpu_custom_call.1} parent=1 // pred_check
      _
    $region3: #{tpu_custom_call.1} parent=1 // pred_check_branch
      %15 = sbr.rel (0) target = $region5
    $region4: #{tpu_custom_call.1} parent=1 // pred_region
      _
    $region5: #{tpu_custom_call.1} parent=1 // pred_fallthru
      _
    // Predicated region
    $region6: #{tpu_custom_call.1} parent=1 // pred_check
      _
    $region7: #{tpu_custom_call.1} parent=1 // pred_check_branch
      %17 = sbr.rel (0) target = $region9
    $region8: #{tpu_custom_call.1} parent=1 // pred_region
      _
    $region9: #{tpu_custom_call.1} parent=1 // pred_fallthru
      _
    // Predicated region
    $region10: #{tpu_custom_call.1} parent=1 // pred_check
      _
    $region11: #{tpu_custom_call.1} parent=1 // pred_check_branch
      %19 = sbr.rel (0) target = $region13
    $region12: #{tpu_custom_call.1} parent=1 // pred_region
      %s21 = ssub.s32 320, 320
      %22 = vsyncadd [#allocation3], %s21
      %s23 = sshll.u32 [#allocation2], 4
      %s24 = int_to_ptr.vmem [resolvable:$true] %s23
      %29 = dma.hbm_to_vmem [thread:$0]  %s2, 320, %s24, [#allocation3], 64, 64, 4
    $region13: #{tpu_custom_call.1} parent=1 // pred_fallthru
      _
    // Predicated region
    $region14: #{tpu_custom_call.1} parent=1 // pred_check
      _
    $region15: #{tpu_custom_call.1} parent=1 // pred_check_branch
      %31 = sbr.rel (0) target = $region17
    $region16: #{tpu_custom_call.1} parent=1 // pred_region
      _
    $region17: #{tpu_custom_call.1} parent=1 // pred_fallthru
      _
    // Predicated region
    $region18: #{tpu_custom_call.1} parent=1 // pred_check
      _
    $region19: #{tpu_custom_call.1} parent=1 // pred_check_branch
      %33 = sbr.rel (0) target = $region21
    $region20: #{tpu_custom_call.1} parent=1 // pred_region
      %s35 = ssub.s32 64, 64
      %36 = vsyncadd [#allocation6], %s35
      %s38 = sshll.u32 [#allocation5], 4
      %s39 = int_to_ptr.vmem [resolvable:$true] %s38
      %41 = dma.hbm_to_vmem [thread:$0]  %s4, 64, %s39, [#allocation6]
    $region21: #{tpu_custom_call.1} parent=1 // pred_fallthru
      _
    // Predicated region
    $region22: #{tpu_custom_call.1} parent=1 // pred_check
      _
    $region23: #{tpu_custom_call.1} parent=1 // pred_check_branch
      %43 = sbr.rel (0) target = $region25
    $region24: #{tpu_custom_call.1} parent=1 // pred_region
      _
    $region25: #{tpu_custom_call.1} parent=1 // pred_fallthru
      _
    // Predicated region
    $region26: #{tpu_custom_call.1} parent=1 // pred_check
      _
    $region27: #{tpu_custom_call.1} parent=1 // pred_check_branch
      %45 = sbr.rel (0) target = $region29
    $region28: #{tpu_custom_call.1} parent=1 // pred_region
      %46 = dma.done [#allocation3], 320
    $region29: #{tpu_custom_call.1} parent=1 // pred_fallthru
      _
    // Predicated region
    $region30: #{tpu_custom_call.1} parent=1 // pred_check
      _
    $region31: #{tpu_custom_call.1} parent=1 // pred_check_branch
      %48 = sbr.rel (0) target = $region33
    $region32: #{tpu_custom_call.1} parent=1 // pred_region
      %49 = dma.done [#allocation6], 64
    $region33: #{tpu_custom_call.1} parent=1 // pred_fallthru
      _
    %v50 = vld [vmem:[%s0] sm:$0xff]
    %v51 = vld [vmem:[%s0 + $0x8] sm:$0xff]
    %v52 = vld [vmem:[%s1] sm:$0x7]
    %v53 = vld [vmem:[#allocation2] sm:$0x7]
    %v54 = vld [vmem:[%s3] sm:$0x1]
    %v56 = vlaneseq
    %v57 = vshrl.u32 %v56, 7
    %v58 = vsub.s32 0, %v57
    %v59 = vrot.slane %v54, %v58
    %vm61 = vcmask 23552
    %v63 = vsel %vm61, %v50, 0
    %v66 = vsel %vm61, %v51, 0
    %vm68 = vcmask 1042432
    %v70 = vsel %vm68, %v52, 0
    %72 = vmatprep.subr.mxu0 0.0
    %73 = vmatpush1.msra.mxu0 0.0
    %74 = vmatprep.subr.mxu0 0.0
    %75 = vmatpush1.msra.mxu0 0.0
    %76 = vmatprep.subr.mxu0 0.0
    %77 = vmatpush1.msra.mxu0 0.0
    %78 = vmatprep.subr.mxu0 0.0
    %79 = vmatpush1.msra.mxu0 0.0
    %80 = vmatprep.subr.mxu0 0.0
    %81 = vmatpush1.msra.mxu0 0.0
    %82 = vmatprep.subr.mxu0 0.0
    %83 = vmatpush1.msra.mxu0 0.0
    %84 = vmatprep.subr.mxu0 0.0
    %85 = vmatpush1.msra.mxu0 0.0
    %86 = vmatprep.subr.mxu0 0.0
    %87 = vmatpush1.msra.mxu0 0.0
    %88 = vmatprep.subr.mxu0 0.0
    %89 = vmatpush1.msra.mxu0 0.0
    %90 = vmatprep.subr.mxu0 0.0
    %91 = vmatpush1.msra.mxu0 0.0
    %92 = vmatprep.subr.mxu0 0.0
    %93 = vmatpush1.msra.mxu0 0.0
    %94 = vmatprep.subr.mxu0 0.0
    %95 = vmatpush1.msra.mxu0 0.0
    %96 = vmatprep.subr.mxu0 0.0
    %97 = vmatpush1.msra.mxu0 0.0
    %98 = vmatprep.subr.mxu0 0.0
    %99 = vmatpush1.msra.mxu0 0.0
    %100 = vmatprep.subr.mxu0 0.0
    %101 = vmatpush1.msra.mxu0 0.0
    %102 = vmatprep.subr.mxu0 0.0
    %103 = vmatpush1.msra.mxu0 %v70
    %104 = vmatprep.subr.mxu0 0.0
    %105 = vmatpush2.msra.mxu0 0.0
    %106 = vmatprep.subr.mxu0 0.0
    %107 = vmatpush2.msra.mxu0 0.0
    %108 = vmatprep.subr.mxu0 0.0
    %109 = vmatpush2.msra.mxu0 0.0
    %110 = vmatprep.subr.mxu0 0.0
    %111 = vmatpush2.msra.mxu0 0.0
    %112 = vmatprep.subr.mxu0 0.0
    %113 = vmatpush2.msra.mxu0 0.0
    %114 = vmatprep.subr.mxu0 0.0
    %115 = vmatpush2.msra.mxu0 0.0
    %116 = vmatprep.subr.mxu0 0.0
    %117 = vmatpush2.msra.mxu0 0.0
    %118 = vmatprep.subr.mxu0 0.0
    %119 = vmatpush2.msra.mxu0 0.0
    %120 = vmatprep.subr.mxu0 0.0
    %121 = vmatpush2.msra.mxu0 0.0
    %122 = vmatprep.subr.mxu0 0.0
    %123 = vmatpush2.msra.mxu0 0.0
    %124 = vmatprep.subr.mxu0 0.0
    %125 = vmatpush2.msra.mxu0 0.0
    %126 = vmatprep.subr.mxu0 0.0
    %127 = vmatpush2.msra.mxu0 0.0
    %128 = vmatprep.subr.mxu0 0.0
    %129 = vmatpush2.msra.mxu0 0.0
    %130 = vmatprep.subr.mxu0 0.0
    %131 = vmatpush2.msra.mxu0 0.0
    %132 = vmatprep.subr.mxu0 0.0
    %133 = vmatpush2.msra.mxu0 0.0
    %134 = vmatprep.subr.mxu0 0.0
    %135 = vmatpush2.msra.mxu0 0.0
    %136 = vmatprep.mubr.f32.mxu0 0.0
    %137 = vmatmul.mubr.f32.gmra.mxu0 %v63
    %v138 = vpop.f32.mrf.mxu0
    %v139 = vadd.f32 %v59, %v138
    %v140 = vpop.f32.mrf.mxu0
    %141 = vmatprep.mubr.f32.mxu0 0.0
    %142 = vmatmul.mubr.f32.gmra.mxu0 %v66
    %v143 = vpop.f32.mrf.mxu0
    %v144 = vadd.f32 %v59, %v143
    %v145 = vpop.f32.mrf.mxu0
    %146 = vdwg.mxu0
    %v147 = vlaneseq
    %v148 = vshrl.u32 %v147, 7
    %v149 = vsub.s32 0, %v148
    %v150 = vrot.slane %v53, %v149
    %v151 = vmul.f32 %v150, 0.0
    %v152 = vlaneseq
    %v153 = vshrl.u32 %v152, 7
    %v154 = vsub.s32 1, %v153
    %v155 = vrot.slane %v53, %v154
    %v156 = vmul.f32 %v155, 0.0
    %v157 = vadd.f32 %v151, %v156
    %v158 = vlaneseq
    %v159 = vshrl.u32 %v158, 7
    %v160 = vsub.s32 2, %v159
    %v161 = vrot.slane %v53, %v160
    %v162 = vmul.f32 %v161, 0.0
    %v163 = vadd.f32 %v157, %v162
    %v164 = vadd.f32 %v139, %v163
    %v165 = vxor.u32 %v164, 2147483648
    %v166 = vmul.f32 %v165, 1.442695
    %v167 = vpow.pop %v166
    %v168 = vadd.f32 %v167, 1.0
    %v169 = vrcp.pop %v168
    %v170 = vmul.f32 1.0, %v169
    %v171 = vtanh.pop %v164
    %v172 = vmul.f32 %v170, 0.0
    %174 = vrot.lane.b32.xlu0 %v171, 119
    %v175 = vpop.permute.xlu0 %174
    %v177 = vmul.f32 %v170, %v175
    %179 = vrot.lane.b32.xlu0 %v177, 3
    %v180 = vpop.permute.xlu0 %179
    %v182 = vadd.f32 %v172, %v180
    %v183 = vtanh.pop %v182
    %185 = vrot.lane.b32.xlu0 %v183, 3
    %v186 = vpop.permute.xlu0 %185
    %v188 = vmul.f32 %v170, %v186
    %190 = vset.pattern.permute.xlu0 6
    %191 = vperm.xlu0 %190, %v188
    %v192 = vpop.permute.xlu0 %191
    %v194 = vmul.f32 %v192, %v150
    %195 = vset.pattern.permute.xlu0 7
    %196 = vperm.xlu0 %195, %v188
    %v197 = vpop.permute.xlu0 %196
    %v199 = vmul.f32 %v197, %v155
    %v200 = vadd.f32 %v194, %v199
    %201 = vset.pattern.permute.xlu0 8
    %202 = vperm.xlu0 %201, %v188
    %v203 = vpop.permute.xlu0 %202
    %v205 = vmul.f32 %v203, %v161
    %v206 = vadd.f32 %v200, %v205
    %v208 = vrot.slane %v206, 6
    %v210 = vadd.f32 %v139, %v208
    %v211 = vxor.u32 %v210, 2147483648
    %v212 = vmul.f32 %v211, 1.442695
    %v213 = vpow.pop %v212
    %v214 = vadd.f32 %v213, 1.0
    %v215 = vrcp.pop %v214
    %v216 = vmul.f32 1.0, %v215
    %v217 = vtanh.pop %v210
    %v219 = vrot.slane %v182, 6
    %v221 = vmul.f32 %v216, %v219
    %223 = vrot.lane.b32.xlu0 %v217, 119
    %v224 = vpop.permute.xlu0 %223
    %v226 = vmul.f32 %v216, %v224
    %228 = vrot.lane.b32.xlu0 %v226, 3
    %v229 = vpop.permute.xlu0 %228
    %v231 = vadd.f32 %v221, %v229
    %v232 = vtanh.pop %v231
    %234 = vrot.lane.b32.xlu0 %v232, 3
    %v235 = vpop.permute.xlu0 %234
    %v237 = vmul.f32 %v216, %v235
    %239 = vset.pattern.permute.xlu0 6
    %240 = vperm.xlu0 %239, %v237
    %v241 = vpop.permute.xlu0 %240
    %v243 = vmul.f32 %v241, %v150
    %244 = vset.pattern.permute.xlu0 7
    %245 = vperm.xlu0 %244, %v237
    %v246 = vpop.permute.xlu0 %245
    %v248 = vmul.f32 %v246, %v155
    %v249 = vadd.f32 %v243, %v248
    %250 = vset.pattern.permute.xlu0 8
    %251 = vperm.xlu0 %250, %v237
    %v252 = vpop.permute.xlu0 %251
    %v254 = vmul.f32 %v252, %v161
    %v255 = vadd.f32 %v249, %v254
    %v257 = vrot.slane %v255, 6
    %v259 = vadd.f32 %v139, %v257
    %v260 = vxor.u32 %v259, 2147483648
    %v261 = vmul.f32 %v260, 1.442695
    %v262 = vpow.pop %v261
    %v263 = vadd.f32 %v262, 1.0
    %v264 = vrcp.pop %v263
    %v265 = vmul.f32 1.0, %v264
    %v266 = vtanh.pop %v259
    %v268 = vrot.slane %v231, 6
    %v270 = vmul.f32 %v265, %v268
    %272 = vrot.lane.b32.xlu0 %v266, 119
    %v273 = vpop.permute.xlu0 %272
    %v275 = vmul.f32 %v265, %v273
    %277 = vrot.lane.b32.xlu0 %v275, 3
    %v278 = vpop.permute.xlu0 %277
    %v280 = vadd.f32 %v270, %v278
    %v281 = vtanh.pop %v280
    %283 = vrot.lane.b32.xlu0 %v281, 3
    %v284 = vpop.permute.xlu0 %283
    %v286 = vmul.f32 %v265, %v284
    %288 = vset.pattern.permute.xlu0 6
    %289 = vperm.xlu0 %288, %v286
    %v290 = vpop.permute.xlu0 %289
    %v292 = vmul.f32 %v290, %v150
    %293 = vset.pattern.permute.xlu0 7
    %294 = vperm.xlu0 %293, %v286
    %v295 = vpop.permute.xlu0 %294
    %v297 = vmul.f32 %v295, %v155
    %v298 = vadd.f32 %v292, %v297
    %299 = vset.pattern.permute.xlu0 8
    %300 = vperm.xlu0 %299, %v286
    %v301 = vpop.permute.xlu0 %300
    %v303 = vmul.f32 %v301, %v161
    %v304 = vadd.f32 %v298, %v303
    %v306 = vrot.slane %v304, 6
    %v308 = vadd.f32 %v139, %v306
    %v309 = vxor.u32 %v308, 2147483648
    %v310 = vmul.f32 %v309, 1.442695
    %v311 = vpow.pop %v310
    %v312 = vadd.f32 %v311, 1.0
    %v313 = vrcp.pop %v312
    %v314 = vmul.f32 1.0, %v313
    %v315 = vtanh.pop %v308
    %v317 = vrot.slane %v280, 6
    %v319 = vmul.f32 %v314, %v317
    %321 = vrot.lane.b32.xlu0 %v315, 119
    %v322 = vpop.permute.xlu0 %321
    %v324 = vmul.f32 %v314, %v322
    %326 = vrot.lane.b32.xlu0 %v324, 3
    %v327 = vpop.permute.xlu0 %326
    %v329 = vadd.f32 %v319, %v327
    %v330 = vtanh.pop %v329
    %332 = vrot.lane.b32.xlu0 %v330, 3
    %v333 = vpop.permute.xlu0 %332
    %v335 = vmul.f32 %v314, %v333
    %337 = vset.pattern.permute.xlu0 6
    %338 = vperm.xlu0 %337, %v335
    %v339 = vpop.permute.xlu0 %338
    %v341 = vmul.f32 %v339, %v150
    %342 = vset.pattern.permute.xlu0 7
    %343 = vperm.xlu0 %342, %v335
    %v344 = vpop.permute.xlu0 %343
    %v346 = vmul.f32 %v344, %v155
    %v347 = vadd.f32 %v341, %v346
    %348 = vset.pattern.permute.xlu0 8
    %349 = vperm.xlu0 %348, %v335
    %v350 = vpop.permute.xlu0 %349
    %v352 = vmul.f32 %v350, %v161
    %v353 = vadd.f32 %v347, %v352
    %v355 = vrot.slane %v353, 6
    %v357 = vadd.f32 %v144, %v355
    %v358 = vxor.u32 %v357, 2147483648
    %v359 = vmul.f32 %v358, 1.442695
    %v360 = vpow.pop %v359
    %v361 = vadd.f32 %v360, 1.0
    %v362 = vrcp.pop %v361
    %v363 = vmul.f32 1.0, %v362
    %v364 = vtanh.pop %v357
    %v366 = vrot.slane %v329, 6
    %v368 = vmul.f32 %v363, %v366
    %370 = vrot.lane.b32.xlu0 %v364, 119
    %v371 = vpop.permute.xlu0 %370
    %v373 = vmul.f32 %v363, %v371
    %375 = vrot.lane.b32.xlu0 %v373, 3
    %v376 = vpop.permute.xlu0 %375
    %v378 = vadd.f32 %v368, %v376
    %v379 = vtanh.pop %v378
    %381 = vrot.lane.b32.xlu0 %v379, 3
    %v382 = vpop.permute.xlu0 %381
    %v384 = vmul.f32 %v363, %v382
    %386 = vset.pattern.permute.xlu0 6
    %387 = vperm.xlu0 %386, %v384
    %v388 = vpop.permute.xlu0 %387
    %v390 = vmul.f32 %v388, %v150
    %391 = vset.pattern.permute.xlu0 7
    %392 = vperm.xlu0 %391, %v384
    %v393 = vpop.permute.xlu0 %392
    %v395 = vmul.f32 %v393, %v155
    %v396 = vadd.f32 %v390, %v395
    %397 = vset.pattern.permute.xlu0 8
    %398 = vperm.xlu0 %397, %v384
    %v399 = vpop.permute.xlu0 %398
    %v401 = vmul.f32 %v399, %v161
    %v402 = vadd.f32 %v396, %v401
    %v404 = vrot.slane %v402, 6
    %v406 = vadd.f32 %v144, %v404
    %v407 = vxor.u32 %v406, 2147483648
    %v408 = vmul.f32 %v407, 1.442695
    %v409 = vpow.pop %v408
    %v410 = vadd.f32 %v409, 1.0
    %v411 = vrcp.pop %v410
    %v412 = vmul.f32 1.0, %v411
    %v413 = vtanh.pop %v406
    %v415 = vrot.slane %v378, 6
    %v417 = vmul.f32 %v412, %v415
    %419 = vrot.lane.b32.xlu0 %v413, 119
    %v420 = vpop.permute.xlu0 %419
    %v422 = vmul.f32 %v412, %v420
    %424 = vrot.lane.b32.xlu0 %v422, 3
    %v425 = vpop.permute.xlu0 %424
    %v427 = vadd.f32 %v417, %v425
    %v428 = vtanh.pop %v427
    %430 = vrot.lane.b32.xlu0 %v428, 3
    %v431 = vpop.permute.xlu0 %430
    %v433 = vmul.f32 %v412, %v431
    %435 = vset.pattern.permute.xlu0 6
    %436 = vperm.xlu0 %435, %v433
    %v437 = vpop.permute.xlu0 %436
    %v439 = vmul.f32 %v437, %v150
    %440 = vset.pattern.permute.xlu0 7
    %441 = vperm.xlu0 %440, %v433
    %v442 = vpop.permute.xlu0 %441
    %v444 = vmul.f32 %v442, %v155
    %v445 = vadd.f32 %v439, %v444
    %446 = vset.pattern.permute.xlu0 8
    %447 = vperm.xlu0 %446, %v433
    %v448 = vpop.permute.xlu0 %447
    %v450 = vmul.f32 %v448, %v161
    %v451 = vadd.f32 %v445, %v450
    %v453 = vrot.slane %v451, 6
    %v455 = vadd.f32 %v144, %v453
    %v456 = vxor.u32 %v455, 2147483648
    %v457 = vmul.f32 %v456, 1.442695
    %v458 = vpow.pop %v457
    %v459 = vadd.f32 %v458, 1.0
    %v460 = vrcp.pop %v459
    %v461 = vmul.f32 1.0, %v460
    %v462 = vtanh.pop %v455
    %v464 = vrot.slane %v427, 6
    %v466 = vmul.f32 %v461, %v464
    %468 = vrot.lane.b32.xlu0 %v462, 119
    %v469 = vpop.permute.xlu0 %468
    %v471 = vmul.f32 %v461, %v469
    %473 = vrot.lane.b32.xlu0 %v471, 3
    %v474 = vpop.permute.xlu0 %473
    %v476 = vadd.f32 %v466, %v474
    %v477 = vtanh.pop %v476
    %479 = vrot.lane.b32.xlu0 %v477, 3
    %v480 = vpop.permute.xlu0 %479
    %v482 = vmul.f32 %v461, %v480
    %484 = vset.pattern.permute.xlu0 6
    %485 = vperm.xlu0 %484, %v482
    %v486 = vpop.permute.xlu0 %485
    %v488 = vmul.f32 %v486, %v150
    %489 = vset.pattern.permute.xlu0 7
    %490 = vperm.xlu0 %489, %v482
    %v491 = vpop.permute.xlu0 %490
    %v493 = vmul.f32 %v491, %v155
    %v494 = vadd.f32 %v488, %v493
    %495 = vset.pattern.permute.xlu0 8
    %496 = vperm.xlu0 %495, %v482
    %v497 = vpop.permute.xlu0 %496
    %v499 = vmul.f32 %v497, %v161
    %v500 = vadd.f32 %v494, %v499
    %v502 = vrot.slane %v500, 6
    %v504 = vadd.f32 %v144, %v502
    %v505 = vxor.u32 %v504, 2147483648
    %v506 = vmul.f32 %v505, 1.442695
    %v507 = vpow.pop %v506
    %v508 = vadd.f32 %v507, 1.0
    %v509 = vrcp.pop %v508
    %v510 = vmul.f32 1.0, %v509
    %v511 = vtanh.pop %v504
    %v513 = vrot.slane %v476, 6
    %v515 = vmul.f32 %v510, %v513
    %517 = vrot.lane.b32.xlu0 %v511, 119
    %v518 = vpop.permute.xlu0 %517
    %v520 = vmul.f32 %v510, %v518
    %522 = vrot.lane.b32.xlu0 %v520, 3
    %v523 = vpop.permute.xlu0 %522
    %v525 = vadd.f32 %v515, %v523
    %v526 = vtanh.pop %v525
    %528 = vrot.lane.b32.xlu0 %v526, 3
    %v529 = vpop.permute.xlu0 %528
    %v531 = vmul.f32 %v510, %v529
    %vm532 = vcmask 1041408
    %v533 = vsel %vm532, %v188, %v237
    %vm534 = vcmask 1043456
    %v535 = vsel %vm534, %v533, %v286
    %vm536 = vcmask 1045504
    %v537 = vsel %vm536, %v535, %v335
    %v538 = vsel %vm532, %v384, %v433
    %v539 = vsel %vm534, %v538, %v482
    %v540 = vsel %vm536, %v539, %v531
    %s541 = scalar_lea.vmem %s1, 4
    %v542 = vld [vmem:[%s541] sm:$0x7]
    %s543 = scalar_lea.vmem [#allocation2], 4
    %v544 = vld [vmem:[%s543] sm:$0x7]
    %s545 = scalar_lea.vmem %s3, 1
    %v546 = vld [vmem:[%s545] sm:$0x1]
    %v548 = vlaneseq
    %v549 = vshrl.u32 %v548, 7
    %v550 = vsub.s32 0, %v549
    %v551 = vrot.slane %v546, %v550
    %555 = vrot.lane.b32.xlu0 %v537, 122
    %v556 = vpop.permute.xlu0 %555
    %557 = vrot.lane.b32.xlu0 %v540, 122
    %v558 = vpop.permute.xlu0 %557
    %v559 = vsel %vm61, %v556, 0
    %v561 = vsel %vm61, %v558, 0
    %v564 = vsel %vm68, %v542, 0
    %566 = vmatprep.subr.mxu0 0.0
    %567 = vmatpush1.msra.mxu0 0.0
    %568 = vmatprep.subr.mxu0 0.0
    %569 = vmatpush1.msra.mxu0 0.0
    %570 = vmatprep.subr.mxu0 0.0
    %571 = vmatpush1.msra.mxu0 0.0
    %572 = vmatprep.subr.mxu0 0.0
    %573 = vmatpush1.msra.mxu0 0.0
    %574 = vmatprep.subr.mxu0 0.0
    %575 = vmatpush1.msra.mxu0 0.0
    %576 = vmatprep.subr.mxu0 0.0
    %577 = vmatpush1.msra.mxu0 0.0
    %578 = vmatprep.subr.mxu0 0.0
    %579 = vmatpush1.msra.mxu0 0.0
    %580 = vmatprep.subr.mxu0 0.0
    %581 = vmatpush1.msra.mxu0 0.0
    %582 = vmatprep.subr.mxu0 0.0
    %583 = vmatpush1.msra.mxu0 0.0
    %584 = vmatprep.subr.mxu0 0.0
    %585 = vmatpush1.msra.mxu0 0.0
    %586 = vmatprep.subr.mxu0 0.0
    %587 = vmatpush1.msra.mxu0 0.0
    %588 = vmatprep.subr.mxu0 0.0
    %589 = vmatpush1.msra.mxu0 0.0
    %590 = vmatprep.subr.mxu0 0.0
    %591 = vmatpush1.msra.mxu0 0.0
    %592 = vmatprep.subr.mxu0 0.0
    %593 = vmatpush1.msra.mxu0 0.0
    %594 = vmatprep.subr.mxu0 0.0
    %595 = vmatpush1.msra.mxu0 0.0
    %596 = vmatprep.subr.mxu0 0.0
    %597 = vmatpush1.msra.mxu0 %v564
    %598 = vmatprep.subr.mxu0 0.0
    %599 = vmatpush2.msra.mxu0 0.0
    %600 = vmatprep.subr.mxu0 0.0
    %601 = vmatpush2.msra.mxu0 0.0
    %602 = vmatprep.subr.mxu0 0.0
    %603 = vmatpush2.msra.mxu0 0.0
    %604 = vmatprep.subr.mxu0 0.0
    %605 = vmatpush2.msra.mxu0 0.0
    %606 = vmatprep.subr.mxu0 0.0
    %607 = vmatpush2.msra.mxu0 0.0
    %608 = vmatprep.subr.mxu0 0.0
    %609 = vmatpush2.msra.mxu0 0.0
    %610 = vmatprep.subr.mxu0 0.0
    %611 = vmatpush2.msra.mxu0 0.0
    %612 = vmatprep.subr.mxu0 0.0
    %613 = vmatpush2.msra.mxu0 0.0
    %614 = vmatprep.subr.mxu0 0.0
    %615 = vmatpush2.msra.mxu0 0.0
    %616 = vmatprep.subr.mxu0 0.0
    %617 = vmatpush2.msra.mxu0 0.0
    %618 = vmatprep.subr.mxu0 0.0
    %619 = vmatpush2.msra.mxu0 0.0
    %620 = vmatprep.subr.mxu0 0.0
    %621 = vmatpush2.msra.mxu0 0.0
    %622 = vmatprep.subr.mxu0 0.0
    %623 = vmatpush2.msra.mxu0 0.0
    %624 = vmatprep.subr.mxu0 0.0
    %625 = vmatpush2.msra.mxu0 0.0
    %626 = vmatprep.subr.mxu0 0.0
    %627 = vmatpush2.msra.mxu0 0.0
    %628 = vmatprep.subr.mxu0 0.0
    %629 = vmatpush2.msra.mxu0 0.0
    %630 = vmatprep.mubr.f32.mxu0 0.0
    %631 = vmatmul.mubr.f32.gmra.mxu0 %v559
    %v632 = vpop.f32.mrf.mxu0
    %v633 = vadd.f32 %v551, %v632
    %v634 = vpop.f32.mrf.mxu0
    %635 = vmatprep.mubr.f32.mxu0 0.0
    %636 = vmatmul.mubr.f32.gmra.mxu0 %v561
    %v637 = vpop.f32.mrf.mxu0
    %v638 = vadd.f32 %v551, %v637
    %v639 = vpop.f32.mrf.mxu0
    %640 = vdwg.mxu0
    %v641 = vlaneseq
    %v642 = vshrl.u32 %v641, 7
    %v643 = vsub.s32 0, %v642
    %v644 = vrot.slane %v544, %v643
    %v645 = vmul.f32 %v644, 0.0
    %v646 = vlaneseq
    %v647 = vshrl.u32 %v646, 7
    %v648 = vsub.s32 1, %v647
    %v649 = vrot.slane %v544, %v648
    %v650 = vmul.f32 %v649, 0.0
    %v651 = vadd.f32 %v645, %v650
    %v652 = vlaneseq
    %v653 = vshrl.u32 %v652, 7
    %v654 = vsub.s32 2, %v653
    %v655 = vrot.slane %v544, %v654
    %v656 = vmul.f32 %v655, 0.0
    %v657 = vadd.f32 %v651, %v656
    %v658 = vadd.f32 %v633, %v657
    %v659 = vxor.u32 %v658, 2147483648
    %v660 = vmul.f32 %v659, 1.442695
    %v661 = vpow.pop %v660
    %v662 = vadd.f32 %v661, 1.0
    %v663 = vrcp.pop %v662
    %v664 = vmul.f32 1.0, %v663
    %v665 = vtanh.pop %v658
    %v666 = vmul.f32 %v664, 0.0
    %668 = vrot.lane.b32.xlu0 %v665, 119
    %v669 = vpop.permute.xlu0 %668
    %v671 = vmul.f32 %v664, %v669
    %673 = vrot.lane.b32.xlu0 %v671, 3
    %v674 = vpop.permute.xlu0 %673
    %v676 = vadd.f32 %v666, %v674
    %v677 = vtanh.pop %v676
    %679 = vrot.lane.b32.xlu0 %v677, 3
    %v680 = vpop.permute.xlu0 %679
    %v682 = vmul.f32 %v664, %v680
    %684 = vset.pattern.permute.xlu0 6
    %685 = vperm.xlu0 %684, %v682
    %v686 = vpop.permute.xlu0 %685
    %v688 = vmul.f32 %v686, %v644
    %689 = vset.pattern.permute.xlu0 7
    %690 = vperm.xlu0 %689, %v682
    %v691 = vpop.permute.xlu0 %690
    %v693 = vmul.f32 %v691, %v649
    %v694 = vadd.f32 %v688, %v693
    %695 = vset.pattern.permute.xlu0 8
    %696 = vperm.xlu0 %695, %v682
    %v697 = vpop.permute.xlu0 %696
    %v699 = vmul.f32 %v697, %v655
    %v700 = vadd.f32 %v694, %v699
    %v702 = vrot.slane %v700, 6
    %v704 = vadd.f32 %v633, %v702
    %v705 = vxor.u32 %v704, 2147483648
    %v706 = vmul.f32 %v705, 1.442695
    %v707 = vpow.pop %v706
    %v708 = vadd.f32 %v707, 1.0
    %v709 = vrcp.pop %v708
    %v710 = vmul.f32 1.0, %v709
    %v711 = vtanh.pop %v704
    %v713 = vrot.slane %v676, 6
    %v715 = vmul.f32 %v710, %v713
    %717 = vrot.lane.b32.xlu0 %v711, 119
    %v718 = vpop.permute.xlu0 %717
    %v720 = vmul.f32 %v710, %v718
    %722 = vrot.lane.b32.xlu0 %v720, 3
    %v723 = vpop.permute.xlu0 %722
    %v725 = vadd.f32 %v715, %v723
    %v726 = vtanh.pop %v725
    %728 = vrot.lane.b32.xlu0 %v726, 3
    %v729 = vpop.permute.xlu0 %728
    %v731 = vmul.f32 %v710, %v729
    %733 = vset.pattern.permute.xlu0 6
    %734 = vperm.xlu0 %733, %v731
    %v735 = vpop.permute.xlu0 %734
    %v737 = vmul.f32 %v735, %v644
    %738 = vset.pattern.permute.xlu0 7
    %739 = vperm.xlu0 %738, %v731
    %v740 = vpop.permute.xlu0 %739
    %v742 = vmul.f32 %v740, %v649
    %v743 = vadd.f32 %v737, %v742
    %744 = vset.pattern.permute.xlu0 8
    %745 = vperm.xlu0 %744, %v731
    %v746 = vpop.permute.xlu0 %745
    %v748 = vmul.f32 %v746, %v655
    %v749 = vadd.f32 %v743, %v748
    %v751 = vrot.slane %v749, 6
    %v753 = vadd.f32 %v633, %v751
    %v754 = vxor.u32 %v753, 2147483648
    %v755 = vmul.f32 %v754, 1.442695
    %v756 = vpow.pop %v755
    %v757 = vadd.f32 %v756, 1.0
    %v758 = vrcp.pop %v757
    %v759 = vmul.f32 1.0, %v758
    %v760 = vtanh.pop %v753
    %v762 = vrot.slane %v725, 6
    %v764 = vmul.f32 %v759, %v762
    %766 = vrot.lane.b32.xlu0 %v760, 119
    %v767 = vpop.permute.xlu0 %766
    %v769 = vmul.f32 %v759, %v767
    %771 = vrot.lane.b32.xlu0 %v769, 3
    %v772 = vpop.permute.xlu0 %771
    %v774 = vadd.f32 %v764, %v772
    %v775 = vtanh.pop %v774
    %777 = vrot.lane.b32.xlu0 %v775, 3
    %v778 = vpop.permute.xlu0 %777
    %v780 = vmul.f32 %v759, %v778
    %782 = vset.pattern.permute.xlu0 6
    %783 = vperm.xlu0 %782, %v780
    %v784 = vpop.permute.xlu0 %783
    %v786 = vmul.f32 %v784, %v644
    %787 = vset.pattern.permute.xlu0 7
    %788 = vperm.xlu0 %787, %v780
    %v789 = vpop.permute.xlu0 %788
    %v791 = vmul.f32 %v789, %v649
    %v792 = vadd.f32 %v786, %v791
    %793 = vset.pattern.permute.xlu0 8
    %794 = vperm.xlu0 %793, %v780
    %v795 = vpop.permute.xlu0 %794
    %v797 = vmul.f32 %v795, %v655
    %v798 = vadd.f32 %v792, %v797
    %v800 = vrot.slane %v798, 6
    %v802 = vadd.f32 %v633, %v800
    %v803 = vxor.u32 %v802, 2147483648
    %v804 = vmul.f32 %v803, 1.442695
    %v805 = vpow.pop %v804
    %v806 = vadd.f32 %v805, 1.0
    %v807 = vrcp.pop %v806
    %v808 = vmul.f32 1.0, %v807
    %v809 = vtanh.pop %v802
    %v811 = vrot.slane %v774, 6
    %v813 = vmul.f32 %v808, %v811
    %815 = vrot.lane.b32.xlu0 %v809, 119
    %v816 = vpop.permute.xlu0 %815
    %v818 = vmul.f32 %v808, %v816
    %820 = vrot.lane.b32.xlu0 %v818, 3
    %v821 = vpop.permute.xlu0 %820
    %v823 = vadd.f32 %v813, %v821
    %v824 = vtanh.pop %v823
    %826 = vrot.lane.b32.xlu0 %v824, 3
    %v827 = vpop.permute.xlu0 %826
    %v829 = vmul.f32 %v808, %v827
    %831 = vset.pattern.permute.xlu0 6
    %832 = vperm.xlu0 %831, %v829
    %v833 = vpop.permute.xlu0 %832
    %v835 = vmul.f32 %v833, %v644
    %836 = vset.pattern.permute.xlu0 7
    %837 = vperm.xlu0 %836, %v829
    %v838 = vpop.permute.xlu0 %837
    %v840 = vmul.f32 %v838, %v649
    %v841 = vadd.f32 %v835, %v840
    %842 = vset.pattern.permute.xlu0 8
    %843 = vperm.xlu0 %842, %v829
    %v844 = vpop.permute.xlu0 %843
    %v846 = vmul.f32 %v844, %v655
    %v847 = vadd.f32 %v841, %v846
    %v849 = vrot.slane %v847, 6
    %v851 = vadd.f32 %v638, %v849
    %v852 = vxor.u32 %v851, 2147483648
    %v853 = vmul.f32 %v852, 1.442695
    %v854 = vpow.pop %v853
    %v855 = vadd.f32 %v854, 1.0
    %v856 = vrcp.pop %v855
    %v857 = vmul.f32 1.0, %v856
    %v858 = vtanh.pop %v851
    %v860 = vrot.slane %v823, 6
    %v862 = vmul.f32 %v857, %v860
    %864 = vrot.lane.b32.xlu0 %v858, 119
    %v865 = vpop.permute.xlu0 %864
    %v867 = vmul.f32 %v857, %v865
    %869 = vrot.lane.b32.xlu0 %v867, 3
    %v870 = vpop.permute.xlu0 %869
    %v872 = vadd.f32 %v862, %v870
    %v873 = vtanh.pop %v872
    %875 = vrot.lane.b32.xlu0 %v873, 3
    %v876 = vpop.permute.xlu0 %875
    %v878 = vmul.f32 %v857, %v876
    %880 = vset.pattern.permute.xlu0 6
    %881 = vperm.xlu0 %880, %v878
    %v882 = vpop.permute.xlu0 %881
    %v884 = vmul.f32 %v882, %v644
    %885 = vset.pattern.permute.xlu0 7
    %886 = vperm.xlu0 %885, %v878
    %v887 = vpop.permute.xlu0 %886
    %v889 = vmul.f32 %v887, %v649
    %v890 = vadd.f32 %v884, %v889
    %891 = vset.pattern.permute.xlu0 8
    %892 = vperm.xlu0 %891, %v878
    %v893 = vpop.permute.xlu0 %892
    %v895 = vmul.f32 %v893, %v655
    %v896 = vadd.f32 %v890, %v895
    %v898 = vrot.slane %v896, 6
    %v900 = vadd.f32 %v638, %v898
    %v901 = vxor.u32 %v900, 2147483648
    %v902 = vmul.f32 %v901, 1.442695
    %v903 = vpow.pop %v902
    %v904 = vadd.f32 %v903, 1.0
    %v905 = vrcp.pop %v904
    %v906 = vmul.f32 1.0, %v905
    %v907 = vtanh.pop %v900
    %v909 = vrot.slane %v872, 6
    %v911 = vmul.f32 %v906, %v909
    %913 = vrot.lane.b32.xlu0 %v907, 119
    %v914 = vpop.permute.xlu0 %913
    %v916 = vmul.f32 %v906, %v914
    %918 = vrot.lane.b32.xlu0 %v916, 3
    %v919 = vpop.permute.xlu0 %918
    %v921 = vadd.f32 %v911, %v919
    %v922 = vtanh.pop %v921
    %924 = vrot.lane.b32.xlu0 %v922, 3
    %v925 = vpop.permute.xlu0 %924
    %v927 = vmul.f32 %v906, %v925
    %929 = vset.pattern.permute.xlu0 6
    %930 = vperm.xlu0 %929, %v927
    %v931 = vpop.permute.xlu0 %930
    %v933 = vmul.f32 %v931, %v644
    %934 = vset.pattern.permute.xlu0 7
    %935 = vperm.xlu0 %934, %v927
    %v936 = vpop.permute.xlu0 %935
    %v938 = vmul.f32 %v936, %v649
    %v939 = vadd.f32 %v933, %v938
    %940 = vset.pattern.permute.xlu0 8
    %941 = vperm.xlu0 %940, %v927
    %v942 = vpop.permute.xlu0 %941
    %v944 = vmul.f32 %v942, %v655
    %v945 = vadd.f32 %v939, %v944
    %v947 = vrot.slane %v945, 6
    %v949 = vadd.f32 %v638, %v947
    %v950 = vxor.u32 %v949, 2147483648
    %v951 = vmul.f32 %v950, 1.442695
    %v952 = vpow.pop %v951
    %v953 = vadd.f32 %v952, 1.0
    %v954 = vrcp.pop %v953
    %v955 = vmul.f32 1.0, %v954
    %v956 = vtanh.pop %v949
    %v958 = vrot.slane %v921, 6
    %v960 = vmul.f32 %v955, %v958
    %962 = vrot.lane.b32.xlu0 %v956, 119
    %v963 = vpop.permute.xlu0 %962
    %v965 = vmul.f32 %v955, %v963
    %967 = vrot.lane.b32.xlu0 %v965, 3
    %v968 = vpop.permute.xlu0 %967
    %v970 = vadd.f32 %v960, %v968
    %v971 = vtanh.pop %v970
    %973 = vrot.lane.b32.xlu0 %v971, 3
    %v974 = vpop.permute.xlu0 %973
    %v976 = vmul.f32 %v955, %v974
    %978 = vset.pattern.permute.xlu0 6
    %979 = vperm.xlu0 %978, %v976
    %v980 = vpop.permute.xlu0 %979
    %v982 = vmul.f32 %v980, %v644
    %983 = vset.pattern.permute.xlu0 7
    %984 = vperm.xlu0 %983, %v976
    %v985 = vpop.permute.xlu0 %984
    %v987 = vmul.f32 %v985, %v649
    %v988 = vadd.f32 %v982, %v987
    %989 = vset.pattern.permute.xlu0 8
    %990 = vperm.xlu0 %989, %v976
    %v991 = vpop.permute.xlu0 %990
    %v993 = vmul.f32 %v991, %v655
    %v994 = vadd.f32 %v988, %v993
    %v996 = vrot.slane %v994, 6
    %v998 = vadd.f32 %v638, %v996
    %v999 = vxor.u32 %v998, 2147483648
    %v1000 = vmul.f32 %v999, 1.442695
    %v1001 = vpow.pop %v1000
    %v1002 = vadd.f32 %v1001, 1.0
    %v1003 = vrcp.pop %v1002
    %v1004 = vmul.f32 1.0, %v1003
    %v1005 = vtanh.pop %v998
    %v1007 = vrot.slane %v970, 6
    %v1009 = vmul.f32 %v1004, %v1007
    %1011 = vrot.lane.b32.xlu0 %v1005, 119
    %v1012 = vpop.permute.xlu0 %1011
    %v1014 = vmul.f32 %v1004, %v1012
    %1016 = vrot.lane.b32.xlu0 %v1014, 3
    %v1017 = vpop.permute.xlu0 %1016
    %v1019 = vadd.f32 %v1009, %v1017
    %v1020 = vtanh.pop %v1019
    %1022 = vrot.lane.b32.xlu0 %v1020, 3
    %v1023 = vpop.permute.xlu0 %1022
    %v1025 = vmul.f32 %v1004, %v1023
    %v1026 = vsel %vm532, %v682, %v731
    %v1027 = vsel %vm534, %v1026, %v780
    %v1028 = vsel %vm536, %v1027, %v829
    %v1029 = vsel %vm532, %v878, %v927
    %v1030 = vsel %vm534, %v1029, %v976
    %v1031 = vsel %vm536, %v1030, %v1025
    %s1032 = scalar_lea.vmem %s1, 8
    %v1033 = vld [vmem:[%s1032] sm:$0x7]
    %s1034 = scalar_lea.vmem [#allocation2], 8
    %v1035 = vld [vmem:[%s1034] sm:$0x7]
    %s1036 = scalar_lea.vmem %s3, 2
    %v1037 = vld [vmem:[%s1036] sm:$0x1]
    %v1039 = vlaneseq
    %v1040 = vshrl.u32 %v1039, 7
    %v1041 = vsub.s32 0, %v1040
    %v1042 = vrot.slane %v1037, %v1041
    %1046 = vrot.lane.b32.xlu0 %v1028, 122
    %v1047 = vpop.permute.xlu0 %1046
    %1048 = vrot.lane.b32.xlu0 %v1031, 122
    %v1049 = vpop.permute.xlu0 %1048
    %v1050 = vsel %vm61, %v1047, 0
    %v1052 = vsel %vm61, %v1049, 0
    %v1055 = vsel %vm68, %v1033, 0
    %1057 = vmatprep.subr.mxu0 0.0
    %1058 = vmatpush1.msra.mxu0 0.0
    %1059 = vmatprep.subr.mxu0 0.0
    %1060 = vmatpush1.msra.mxu0 0.0
    %1061 = vmatprep.subr.mxu0 0.0
    %1062 = vmatpush1.msra.mxu0 0.0
    %1063 = vmatprep.subr.mxu0 0.0
    %1064 = vmatpush1.msra.mxu0 0.0
    %1065 = vmatprep.subr.mxu0 0.0
    %1066 = vmatpush1.msra.mxu0 0.0
    %1067 = vmatprep.subr.mxu0 0.0
    %1068 = vmatpush1.msra.mxu0 0.0
    %1069 = vmatprep.subr.mxu0 0.0
    %1070 = vmatpush1.msra.mxu0 0.0
    %1071 = vmatprep.subr.mxu0 0.0
    %1072 = vmatpush1.msra.mxu0 0.0
    %1073 = vmatprep.subr.mxu0 0.0
    %1074 = vmatpush1.msra.mxu0 0.0
    %1075 = vmatprep.subr.mxu0 0.0
    %1076 = vmatpush1.msra.mxu0 0.0
    %1077 = vmatprep.subr.mxu0 0.0
    %1078 = vmatpush1.msra.mxu0 0.0
    %1079 = vmatprep.subr.mxu0 0.0
    %1080 = vmatpush1.msra.mxu0 0.0
    %1081 = vmatprep.subr.mxu0 0.0
    %1082 = vmatpush1.msra.mxu0 0.0
    %1083 = vmatprep.subr.mxu0 0.0
    %1084 = vmatpush1.msra.mxu0 0.0
    %1085 = vmatprep.subr.mxu0 0.0
    %1086 = vmatpush1.msra.mxu0 0.0
    %1087 = vmatprep.subr.mxu0 0.0
    %1088 = vmatpush1.msra.mxu0 %v1055
    %1089 = vmatprep.subr.mxu0 0.0
    %1090 = vmatpush2.msra.mxu0 0.0
    %1091 = vmatprep.subr.mxu0 0.0
    %1092 = vmatpush2.msra.mxu0 0.0
    %1093 = vmatprep.subr.mxu0 0.0
    %1094 = vmatpush2.msra.mxu0 0.0
    %1095 = vmatprep.subr.mxu0 0.0
    %1096 = vmatpush2.msra.mxu0 0.0
    %1097 = vmatprep.subr.mxu0 0.0
    %1098 = vmatpush2.msra.mxu0 0.0
    %1099 = vmatprep.subr.mxu0 0.0
    %1100 = vmatpush2.msra.mxu0 0.0
    %1101 = vmatprep.subr.mxu0 0.0
    %1102 = vmatpush2.msra.mxu0 0.0
    %1103 = vmatprep.subr.mxu0 0.0
    %1104 = vmatpush2.msra.mxu0 0.0
    %1105 = vmatprep.subr.mxu0 0.0
    %1106 = vmatpush2.msra.mxu0 0.0
    %1107 = vmatprep.subr.mxu0 0.0
    %1108 = vmatpush2.msra.mxu0 0.0
    %1109 = vmatprep.subr.mxu0 0.0
    %1110 = vmatpush2.msra.mxu0 0.0
    %1111 = vmatprep.subr.mxu0 0.0
    %1112 = vmatpush2.msra.mxu0 0.0
    %1113 = vmatprep.subr.mxu0 0.0
    %1114 = vmatpush2.msra.mxu0 0.0
    %1115 = vmatprep.subr.mxu0 0.0
    %1116 = vmatpush2.msra.mxu0 0.0
    %1117 = vmatprep.subr.mxu0 0.0
    %1118 = vmatpush2.msra.mxu0 0.0
    %1119 = vmatprep.subr.mxu0 0.0
    %1120 = vmatpush2.msra.mxu0 0.0
    %1121 = vmatprep.mubr.f32.mxu0 0.0
    %1122 = vmatmul.mubr.f32.gmra.mxu0 %v1050
    %v1123 = vpop.f32.mrf.mxu0
    %v1124 = vadd.f32 %v1042, %v1123
    %v1125 = vpop.f32.mrf.mxu0
    %1126 = vmatprep.mubr.f32.mxu0 0.0
    %1127 = vmatmul.mubr.f32.gmra.mxu0 %v1052
    %v1128 = vpop.f32.mrf.mxu0
    %v1129 = vadd.f32 %v1042, %v1128
    %v1130 = vpop.f32.mrf.mxu0
    %1131 = vdwg.mxu0
    %v1132 = vlaneseq
    %v1133 = vshrl.u32 %v1132, 7
    %v1134 = vsub.s32 0, %v1133
    %v1135 = vrot.slane %v1035, %v1134
    %v1136 = vmul.f32 %v1135, 0.0
    %v1137 = vlaneseq
    %v1138 = vshrl.u32 %v1137, 7
    %v1139 = vsub.s32 1, %v1138
    %v1140 = vrot.slane %v1035, %v1139
    %v1141 = vmul.f32 %v1140, 0.0
    %v1142 = vadd.f32 %v1136, %v1141
    %v1143 = vlaneseq
    %v1144 = vshrl.u32 %v1143, 7
    %v1145 = vsub.s32 2, %v1144
    %v1146 = vrot.slane %v1035, %v1145
    %v1147 = vmul.f32 %v1146, 0.0
    %v1148 = vadd.f32 %v1142, %v1147
    %v1149 = vadd.f32 %v1124, %v1148
    %v1150 = vxor.u32 %v1149, 2147483648
    %v1151 = vmul.f32 %v1150, 1.442695
    %v1152 = vpow.pop %v1151
    %v1153 = vadd.f32 %v1152, 1.0
    %v1154 = vrcp.pop %v1153
    %v1155 = vmul.f32 1.0, %v1154
    %v1156 = vtanh.pop %v1149
    %v1157 = vmul.f32 %v1155, 0.0
    %1159 = vrot.lane.b32.xlu0 %v1156, 119
    %v1160 = vpop.permute.xlu0 %1159
    %v1162 = vmul.f32 %v1155, %v1160
    %1164 = vrot.lane.b32.xlu0 %v1162, 3
    %v1165 = vpop.permute.xlu0 %1164
    %v1167 = vadd.f32 %v1157, %v1165
    %v1168 = vtanh.pop %v1167
    %1170 = vrot.lane.b32.xlu0 %v1168, 3
    %v1171 = vpop.permute.xlu0 %1170
    %v1173 = vmul.f32 %v1155, %v1171
    %1175 = vset.pattern.permute.xlu0 6
    %1176 = vperm.xlu0 %1175, %v1173
    %v1177 = vpop.permute.xlu0 %1176
    %v1179 = vmul.f32 %v1177, %v1135
    %1180 = vset.pattern.permute.xlu0 7
    %1181 = vperm.xlu0 %1180, %v1173
    %v1182 = vpop.permute.xlu0 %1181
    %v1184 = vmul.f32 %v1182, %v1140
    %v1185 = vadd.f32 %v1179, %v1184
    %1186 = vset.pattern.permute.xlu0 8
    %1187 = vperm.xlu0 %1186, %v1173
    %v1188 = vpop.permute.xlu0 %1187
    %v1190 = vmul.f32 %v1188, %v1146
    %v1191 = vadd.f32 %v1185, %v1190
    %v1193 = vrot.slane %v1191, 6
    %v1195 = vadd.f32 %v1124, %v1193
    %v1196 = vxor.u32 %v1195, 2147483648
    %v1197 = vmul.f32 %v1196, 1.442695
    %v1198 = vpow.pop %v1197
    %v1199 = vadd.f32 %v1198, 1.0
    %v1200 = vrcp.pop %v1199
    %v1201 = vmul.f32 1.0, %v1200
    %v1202 = vtanh.pop %v1195
    %v1204 = vrot.slane %v1167, 6
    %v1206 = vmul.f32 %v1201, %v1204
    %1208 = vrot.lane.b32.xlu0 %v1202, 119
    %v1209 = vpop.permute.xlu0 %1208
    %v1211 = vmul.f32 %v1201, %v1209
    %1213 = vrot.lane.b32.xlu0 %v1211, 3
    %v1214 = vpop.permute.xlu0 %1213
    %v1216 = vadd.f32 %v1206, %v1214
    %v1217 = vtanh.pop %v1216
    %1219 = vrot.lane.b32.xlu0 %v1217, 3
    %v1220 = vpop.permute.xlu0 %1219
    %v1222 = vmul.f32 %v1201, %v1220
    %1224 = vset.pattern.permute.xlu0 6
    %1225 = vperm.xlu0 %1224, %v1222
    %v1226 = vpop.permute.xlu0 %1225
    %v1228 = vmul.f32 %v1226, %v1135
    %1229 = vset.pattern.permute.xlu0 7
    %1230 = vperm.xlu0 %1229, %v1222
    %v1231 = vpop.permute.xlu0 %1230
    %v1233 = vmul.f32 %v1231, %v1140
    %v1234 = vadd.f32 %v1228, %v1233
    %1235 = vset.pattern.permute.xlu0 8
    %1236 = vperm.xlu0 %1235, %v1222
    %v1237 = vpop.permute.xlu0 %1236
    %v1239 = vmul.f32 %v1237, %v1146
    %v1240 = vadd.f32 %v1234, %v1239
    %v1242 = vrot.slane %v1240, 6
    %v1244 = vadd.f32 %v1124, %v1242
    %v1245 = vxor.u32 %v1244, 2147483648
    %v1246 = vmul.f32 %v1245, 1.442695
    %v1247 = vpow.pop %v1246
    %v1248 = vadd.f32 %v1247, 1.0
    %v1249 = vrcp.pop %v1248
    %v1250 = vmul.f32 1.0, %v1249
    %v1251 = vtanh.pop %v1244
    %v1253 = vrot.slane %v1216, 6
    %v1255 = vmul.f32 %v1250, %v1253
    %1257 = vrot.lane.b32.xlu0 %v1251, 119
    %v1258 = vpop.permute.xlu0 %1257
    %v1260 = vmul.f32 %v1250, %v1258
    %1262 = vrot.lane.b32.xlu0 %v1260, 3
    %v1263 = vpop.permute.xlu0 %1262
    %v1265 = vadd.f32 %v1255, %v1263
    %v1266 = vtanh.pop %v1265
    %1268 = vrot.lane.b32.xlu0 %v1266, 3
    %v1269 = vpop.permute.xlu0 %1268
    %v1271 = vmul.f32 %v1250, %v1269
    %1273 = vset.pattern.permute.xlu0 6
    %1274 = vperm.xlu0 %1273, %v1271
    %v1275 = vpop.permute.xlu0 %1274
    %v1277 = vmul.f32 %v1275, %v1135
    %1278 = vset.pattern.permute.xlu0 7
    %1279 = vperm.xlu0 %1278, %v1271
    %v1280 = vpop.permute.xlu0 %1279
    %v1282 = vmul.f32 %v1280, %v1140
    %v1283 = vadd.f32 %v1277, %v1282
    %1284 = vset.pattern.permute.xlu0 8
    %1285 = vperm.xlu0 %1284, %v1271
    %v1286 = vpop.permute.xlu0 %1285
    %v1288 = vmul.f32 %v1286, %v1146
    %v1289 = vadd.f32 %v1283, %v1288
    %v1291 = vrot.slane %v1289, 6
    %v1293 = vadd.f32 %v1124, %v1291
    %v1294 = vxor.u32 %v1293, 2147483648
    %v1295 = vmul.f32 %v1294, 1.442695
    %v1296 = vpow.pop %v1295
    %v1297 = vadd.f32 %v1296, 1.0
    %v1298 = vrcp.pop %v1297
    %v1299 = vmul.f32 1.0, %v1298
    %v1300 = vtanh.pop %v1293
    %v1302 = vrot.slane %v1265, 6
    %v1304 = vmul.f32 %v1299, %v1302
    %1306 = vrot.lane.b32.xlu0 %v1300, 119
    %v1307 = vpop.permute.xlu0 %1306
    %v1309 = vmul.f32 %v1299, %v1307
    %1311 = vrot.lane.b32.xlu0 %v1309, 3
    %v1312 = vpop.permute.xlu0 %1311
    %v1314 = vadd.f32 %v1304, %v1312
    %v1315 = vtanh.pop %v1314
    %1317 = vrot.lane.b32.xlu0 %v1315, 3
    %v1318 = vpop.permute.xlu0 %1317
    %v1320 = vmul.f32 %v1299, %v1318
    %1322 = vset.pattern.permute.xlu0 6
    %1323 = vperm.xlu0 %1322, %v1320
    %v1324 = vpop.permute.xlu0 %1323
    %v1326 = vmul.f32 %v1324, %v1135
    %1327 = vset.pattern.permute.xlu0 7
    %1328 = vperm.xlu0 %1327, %v1320
    %v1329 = vpop.permute.xlu0 %1328
    %v1331 = vmul.f32 %v1329, %v1140
    %v1332 = vadd.f32 %v1326, %v1331
    %1333 = vset.pattern.permute.xlu0 8
    %1334 = vperm.xlu0 %1333, %v1320
    %v1335 = vpop.permute.xlu0 %1334
    %v1337 = vmul.f32 %v1335, %v1146
    %v1338 = vadd.f32 %v1332, %v1337
    %v1340 = vrot.slane %v1338, 6
    %v1342 = vadd.f32 %v1129, %v1340
    %v1343 = vxor.u32 %v1342, 2147483648
    %v1344 = vmul.f32 %v1343, 1.442695
    %v1345 = vpow.pop %v1344
    %v1346 = vadd.f32 %v1345, 1.0
    %v1347 = vrcp.pop %v1346
    %v1348 = vmul.f32 1.0, %v1347
    %v1349 = vtanh.pop %v1342
    %v1351 = vrot.slane %v1314, 6
    %v1353 = vmul.f32 %v1348, %v1351
    %1355 = vrot.lane.b32.xlu0 %v1349, 119
    %v1356 = vpop.permute.xlu0 %1355
    %v1358 = vmul.f32 %v1348, %v1356
    %1360 = vrot.lane.b32.xlu0 %v1358, 3
    %v1361 = vpop.permute.xlu0 %1360
    %v1363 = vadd.f32 %v1353, %v1361
    %v1364 = vtanh.pop %v1363
    %1366 = vrot.lane.b32.xlu0 %v1364, 3
    %v1367 = vpop.permute.xlu0 %1366
    %v1369 = vmul.f32 %v1348, %v1367
    %1371 = vset.pattern.permute.xlu0 6
    %1372 = vperm.xlu0 %1371, %v1369
    %v1373 = vpop.permute.xlu0 %1372
    %v1375 = vmul.f32 %v1373, %v1135
    %1376 = vset.pattern.permute.xlu0 7
    %1377 = vperm.xlu0 %1376, %v1369
    %v1378 = vpop.permute.xlu0 %1377
    %v1380 = vmul.f32 %v1378, %v1140
    %v1381 = vadd.f32 %v1375, %v1380
    %1382 = vset.pattern.permute.xlu0 8
    %1383 = vperm.xlu0 %1382, %v1369
    %v1384 = vpop.permute.xlu0 %1383
    %v1386 = vmul.f32 %v1384, %v1146
    %v1387 = vadd.f32 %v1381, %v1386
    %v1389 = vrot.slane %v1387, 6
    %v1391 = vadd.f32 %v1129, %v1389
    %v1392 = vxor.u32 %v1391, 2147483648
    %v1393 = vmul.f32 %v1392, 1.442695
    %v1394 = vpow.pop %v1393
    %v1395 = vadd.f32 %v1394, 1.0
    %v1396 = vrcp.pop %v1395
    %v1397 = vmul.f32 1.0, %v1396
    %v1398 = vtanh.pop %v1391
    %v1400 = vrot.slane %v1363, 6
    %v1402 = vmul.f32 %v1397, %v1400
    %1404 = vrot.lane.b32.xlu0 %v1398, 119
    %v1405 = vpop.permute.xlu0 %1404
    %v1407 = vmul.f32 %v1397, %v1405
    %1409 = vrot.lane.b32.xlu0 %v1407, 3
    %v1410 = vpop.permute.xlu0 %1409
    %v1412 = vadd.f32 %v1402, %v1410
    %v1413 = vtanh.pop %v1412
    %1415 = vrot.lane.b32.xlu0 %v1413, 3
    %v1416 = vpop.permute.xlu0 %1415
    %v1418 = vmul.f32 %v1397, %v1416
    %1420 = vset.pattern.permute.xlu0 6
    %1421 = vperm.xlu0 %1420, %v1418
    %v1422 = vpop.permute.xlu0 %1421
    %v1424 = vmul.f32 %v1422, %v1135
    %1425 = vset.pattern.permute.xlu0 7
    %1426 = vperm.xlu0 %1425, %v1418
    %v1427 = vpop.permute.xlu0 %1426
    %v1429 = vmul.f32 %v1427, %v1140
    %v1430 = vadd.f32 %v1424, %v1429
    %1431 = vset.pattern.permute.xlu0 8
    %1432 = vperm.xlu0 %1431, %v1418
    %v1433 = vpop.permute.xlu0 %1432
    %v1435 = vmul.f32 %v1433, %v1146
    %v1436 = vadd.f32 %v1430, %v1435
    %v1438 = vrot.slane %v1436, 6
    %v1440 = vadd.f32 %v1129, %v1438
    %v1441 = vxor.u32 %v1440, 2147483648
    %v1442 = vmul.f32 %v1441, 1.442695
    %v1443 = vpow.pop %v1442
    %v1444 = vadd.f32 %v1443, 1.0
    %v1445 = vrcp.pop %v1444
    %v1446 = vmul.f32 1.0, %v1445
    %v1447 = vtanh.pop %v1440
    %v1449 = vrot.slane %v1412, 6
    %v1451 = vmul.f32 %v1446, %v1449
    %1453 = vrot.lane.b32.xlu0 %v1447, 119
    %v1454 = vpop.permute.xlu0 %1453
    %v1456 = vmul.f32 %v1446, %v1454
    %1458 = vrot.lane.b32.xlu0 %v1456, 3
    %v1459 = vpop.permute.xlu0 %1458
    %v1461 = vadd.f32 %v1451, %v1459
    %v1462 = vtanh.pop %v1461
    %1464 = vrot.lane.b32.xlu0 %v1462, 3
    %v1465 = vpop.permute.xlu0 %1464
    %v1467 = vmul.f32 %v1446, %v1465
    %1469 = vset.pattern.permute.xlu0 6
    %1470 = vperm.xlu0 %1469, %v1467
    %v1471 = vpop.permute.xlu0 %1470
    %v1473 = vmul.f32 %v1471, %v1135
    %1474 = vset.pattern.permute.xlu0 7
    %1475 = vperm.xlu0 %1474, %v1467
    %v1476 = vpop.permute.xlu0 %1475
    %v1478 = vmul.f32 %v1476, %v1140
    %v1479 = vadd.f32 %v1473, %v1478
    %1480 = vset.pattern.permute.xlu0 8
    %1481 = vperm.xlu0 %1480, %v1467
    %v1482 = vpop.permute.xlu0 %1481
    %v1484 = vmul.f32 %v1482, %v1146
    %v1485 = vadd.f32 %v1479, %v1484
    %v1487 = vrot.slane %v1485, 6
    %v1489 = vadd.f32 %v1129, %v1487
    %v1490 = vxor.u32 %v1489, 2147483648
    %v1491 = vmul.f32 %v1490, 1.442695
    %v1492 = vpow.pop %v1491
    %v1493 = vadd.f32 %v1492, 1.0
    %v1494 = vrcp.pop %v1493
    %v1495 = vmul.f32 1.0, %v1494
    %v1496 = vtanh.pop %v1489
    %v1498 = vrot.slane %v1461, 6
    %v1500 = vmul.f32 %v1495, %v1498
    %1502 = vrot.lane.b32.xlu0 %v1496, 119
    %v1503 = vpop.permute.xlu0 %1502
    %v1505 = vmul.f32 %v1495, %v1503
    %1507 = vrot.lane.b32.xlu0 %v1505, 3
    %v1508 = vpop.permute.xlu0 %1507
    %v1510 = vadd.f32 %v1500, %v1508
    %v1511 = vtanh.pop %v1510
    %1513 = vrot.lane.b32.xlu0 %v1511, 3
    %v1514 = vpop.permute.xlu0 %1513
    %v1516 = vmul.f32 %v1495, %v1514
    %v1517 = vsel %vm532, %v1173, %v1222
    %v1518 = vsel %vm534, %v1517, %v1271
    %v1519 = vsel %vm536, %v1518, %v1320
    %v1520 = vsel %vm532, %v1369, %v1418
    %v1521 = vsel %vm534, %v1520, %v1467
    %v1522 = vsel %vm536, %v1521, %v1516
    %s1523 = scalar_lea.vmem %s1, 12
    %v1524 = vld [vmem:[%s1523] sm:$0x7]
    %s1525 = scalar_lea.vmem [#allocation2], 12
    %v1526 = vld [vmem:[%s1525] sm:$0x7]
    %s1527 = scalar_lea.vmem %s3, 3
    %v1528 = vld [vmem:[%s1527] sm:$0x1]
    %v1530 = vlaneseq
    %v1531 = vshrl.u32 %v1530, 7
    %v1532 = vsub.s32 0, %v1531
    %v1533 = vrot.slane %v1528, %v1532
    %1537 = vrot.lane.b32.xlu0 %v1519, 122
    %v1538 = vpop.permute.xlu0 %1537
    %1539 = vrot.lane.b32.xlu0 %v1522, 122
    %v1540 = vpop.permute.xlu0 %1539
    %v1541 = vsel %vm61, %v1538, 0
    %v1543 = vsel %vm61, %v1540, 0
    %v1546 = vsel %vm68, %v1524, 0
    %1548 = vmatprep.subr.mxu0 0.0
    %1549 = vmatpush1.msra.mxu0 0.0
    %1550 = vmatprep.subr.mxu0 0.0
    %1551 = vmatpush1.msra.mxu0 0.0
    %1552 = vmatprep.subr.mxu0 0.0
    %1553 = vmatpush1.msra.mxu0 0.0
    %1554 = vmatprep.subr.mxu0 0.0
    %1555 = vmatpush1.msra.mxu0 0.0
    %1556 = vmatprep.subr.mxu0 0.0
    %1557 = vmatpush1.msra.mxu0 0.0
    %1558 = vmatprep.subr.mxu0 0.0
    %1559 = vmatpush1.msra.mxu0 0.0
    %1560 = vmatprep.subr.mxu0 0.0
    %1561 = vmatpush1.msra.mxu0 0.0
    %1562 = vmatprep.subr.mxu0 0.0
    %1563 = vmatpush1.msra.mxu0 0.0
    %1564 = vmatprep.subr.mxu0 0.0
    %1565 = vmatpush1.msra.mxu0 0.0
    %1566 = vmatprep.subr.mxu0 0.0
    %1567 = vmatpush1.msra.mxu0 0.0
    %1568 = vmatprep.subr.mxu0 0.0
    %1569 = vmatpush1.msra.mxu0 0.0
    %1570 = vmatprep.subr.mxu0 0.0
    %1571 = vmatpush1.msra.mxu0 0.0
    %1572 = vmatprep.subr.mxu0 0.0
    %1573 = vmatpush1.msra.mxu0 0.0
    %1574 = vmatprep.subr.mxu0 0.0
    %1575 = vmatpush1.msra.mxu0 0.0
    %1576 = vmatprep.subr.mxu0 0.0
    %1577 = vmatpush1.msra.mxu0 0.0
    %1578 = vmatprep.subr.mxu0 0.0
    %1579 = vmatpush1.msra.mxu0 %v1546
    %1580 = vmatprep.subr.mxu0 0.0
    %1581 = vmatpush2.msra.mxu0 0.0
    %1582 = vmatprep.subr.mxu0 0.0
    %1583 = vmatpush2.msra.mxu0 0.0
    %1584 = vmatprep.subr.mxu0 0.0
    %1585 = vmatpush2.msra.mxu0 0.0
    %1586 = vmatprep.subr.mxu0 0.0
    %1587 = vmatpush2.msra.mxu0 0.0
    %1588 = vmatprep.subr.mxu0 0.0
    %1589 = vmatpush2.msra.mxu0 0.0
    %1590 = vmatprep.subr.mxu0 0.0
    %1591 = vmatpush2.msra.mxu0 0.0
    %1592 = vmatprep.subr.mxu0 0.0
    %1593 = vmatpush2.msra.mxu0 0.0
    %1594 = vmatprep.subr.mxu0 0.0
    %1595 = vmatpush2.msra.mxu0 0.0
    %1596 = vmatprep.subr.mxu0 0.0
    %1597 = vmatpush2.msra.mxu0 0.0
    %1598 = vmatprep.subr.mxu0 0.0
    %1599 = vmatpush2.msra.mxu0 0.0
    %1600 = vmatprep.subr.mxu0 0.0
    %1601 = vmatpush2.msra.mxu0 0.0
    %1602 = vmatprep.subr.mxu0 0.0
    %1603 = vmatpush2.msra.mxu0 0.0
    %1604 = vmatprep.subr.mxu0 0.0
    %1605 = vmatpush2.msra.mxu0 0.0
    %1606 = vmatprep.subr.mxu0 0.0
    %1607 = vmatpush2.msra.mxu0 0.0
    %1608 = vmatprep.subr.mxu0 0.0
    %1609 = vmatpush2.msra.mxu0 0.0
    %1610 = vmatprep.subr.mxu0 0.0
    %1611 = vmatpush2.msra.mxu0 0.0
    %1612 = vmatprep.mubr.f32.mxu0 0.0
    %1613 = vmatmul.mubr.f32.gmra.mxu0 %v1541
    %v1614 = vpop.f32.mrf.mxu0
    %v1615 = vadd.f32 %v1533, %v1614
    %v1616 = vpop.f32.mrf.mxu0
    %1617 = vmatprep.mubr.f32.mxu0 0.0
    %1618 = vmatmul.mubr.f32.gmra.mxu0 %v1543
    %v1619 = vpop.f32.mrf.mxu0
    %v1620 = vadd.f32 %v1533, %v1619
    %v1621 = vpop.f32.mrf.mxu0
    %1622 = vdwg.mxu0
    %v1623 = vlaneseq
    %v1624 = vshrl.u32 %v1623, 7
    %v1625 = vsub.s32 0, %v1624
    %v1626 = vrot.slane %v1526, %v1625
    %v1627 = vmul.f32 %v1626, 0.0
    %v1628 = vlaneseq
    %v1629 = vshrl.u32 %v1628, 7
    %v1630 = vsub.s32 1, %v1629
    %v1631 = vrot.slane %v1526, %v1630
    %v1632 = vmul.f32 %v1631, 0.0
    %v1633 = vadd.f32 %v1627, %v1632
    %v1634 = vlaneseq
    %v1635 = vshrl.u32 %v1634, 7
    %v1636 = vsub.s32 2, %v1635
    %v1637 = vrot.slane %v1526, %v1636
    %v1638 = vmul.f32 %v1637, 0.0
    %v1639 = vadd.f32 %v1633, %v1638
    %v1640 = vadd.f32 %v1615, %v1639
    %v1641 = vxor.u32 %v1640, 2147483648
    %v1642 = vmul.f32 %v1641, 1.442695
    %v1643 = vpow.pop %v1642
    %v1644 = vadd.f32 %v1643, 1.0
    %v1645 = vrcp.pop %v1644
    %v1646 = vmul.f32 1.0, %v1645
    %v1647 = vtanh.pop %v1640
    %v1648 = vmul.f32 %v1646, 0.0
    %1650 = vrot.lane.b32.xlu0 %v1647, 119
    %v1651 = vpop.permute.xlu0 %1650
    %v1653 = vmul.f32 %v1646, %v1651
    %1655 = vrot.lane.b32.xlu0 %v1653, 3
    %v1656 = vpop.permute.xlu0 %1655
    %v1658 = vadd.f32 %v1648, %v1656
    %v1659 = vtanh.pop %v1658
    %1661 = vrot.lane.b32.xlu0 %v1659, 3
    %v1662 = vpop.permute.xlu0 %1661
    %v1664 = vmul.f32 %v1646, %v1662
    %1666 = vset.pattern.permute.xlu0 6
    %1667 = vperm.xlu0 %1666, %v1664
    %v1668 = vpop.permute.xlu0 %1667
    %v1670 = vmul.f32 %v1668, %v1626
    %1671 = vset.pattern.permute.xlu0 7
    %1672 = vperm.xlu0 %1671, %v1664
    %v1673 = vpop.permute.xlu0 %1672
    %v1675 = vmul.f32 %v1673, %v1631
    %v1676 = vadd.f32 %v1670, %v1675
    %1677 = vset.pattern.permute.xlu0 8
    %1678 = vperm.xlu0 %1677, %v1664
    %v1679 = vpop.permute.xlu0 %1678
    %v1681 = vmul.f32 %v1679, %v1637
    %v1682 = vadd.f32 %v1676, %v1681
    %v1684 = vrot.slane %v1682, 6
    %v1686 = vadd.f32 %v1615, %v1684
    %v1687 = vxor.u32 %v1686, 2147483648
    %v1688 = vmul.f32 %v1687, 1.442695
    %v1689 = vpow.pop %v1688
    %v1690 = vadd.f32 %v1689, 1.0
    %v1691 = vrcp.pop %v1690
    %v1692 = vmul.f32 1.0, %v1691
    %v1693 = vtanh.pop %v1686
    %v1695 = vrot.slane %v1658, 6
    %v1697 = vmul.f32 %v1692, %v1695
    %1699 = vrot.lane.b32.xlu0 %v1693, 119
    %v1700 = vpop.permute.xlu0 %1699
    %v1702 = vmul.f32 %v1692, %v1700
    %1704 = vrot.lane.b32.xlu0 %v1702, 3
    %v1705 = vpop.permute.xlu0 %1704
    %v1707 = vadd.f32 %v1697, %v1705
    %v1708 = vtanh.pop %v1707
    %1710 = vrot.lane.b32.xlu0 %v1708, 3
    %v1711 = vpop.permute.xlu0 %1710
    %v1713 = vmul.f32 %v1692, %v1711
    %1715 = vset.pattern.permute.xlu0 6
    %1716 = vperm.xlu0 %1715, %v1713
    %v1717 = vpop.permute.xlu0 %1716
    %v1719 = vmul.f32 %v1717, %v1626
    %1720 = vset.pattern.permute.xlu0 7
    %1721 = vperm.xlu0 %1720, %v1713
    %v1722 = vpop.permute.xlu0 %1721
    %v1724 = vmul.f32 %v1722, %v1631
    %v1725 = vadd.f32 %v1719, %v1724
    %1726 = vset.pattern.permute.xlu0 8
    %1727 = vperm.xlu0 %1726, %v1713
    %v1728 = vpop.permute.xlu0 %1727
    %v1730 = vmul.f32 %v1728, %v1637
    %v1731 = vadd.f32 %v1725, %v1730
    %v1733 = vrot.slane %v1731, 6
    %v1735 = vadd.f32 %v1615, %v1733
    %v1736 = vxor.u32 %v1735, 2147483648
    %v1737 = vmul.f32 %v1736, 1.442695
    %v1738 = vpow.pop %v1737
    %v1739 = vadd.f32 %v1738, 1.0
    %v1740 = vrcp.pop %v1739
    %v1741 = vmul.f32 1.0, %v1740
    %v1742 = vtanh.pop %v1735
    %v1744 = vrot.slane %v1707, 6
    %v1746 = vmul.f32 %v1741, %v1744
    %1748 = vrot.lane.b32.xlu0 %v1742, 119
    %v1749 = vpop.permute.xlu0 %1748
    %v1751 = vmul.f32 %v1741, %v1749
    %1753 = vrot.lane.b32.xlu0 %v1751, 3
    %v1754 = vpop.permute.xlu0 %1753
    %v1756 = vadd.f32 %v1746, %v1754
    %v1757 = vtanh.pop %v1756
    %1759 = vrot.lane.b32.xlu0 %v1757, 3
    %v1760 = vpop.permute.xlu0 %1759
    %v1762 = vmul.f32 %v1741, %v1760
    %1764 = vset.pattern.permute.xlu0 6
    %1765 = vperm.xlu0 %1764, %v1762
    %v1766 = vpop.permute.xlu0 %1765
    %v1768 = vmul.f32 %v1766, %v1626
    %1769 = vset.pattern.permute.xlu0 7
    %1770 = vperm.xlu0 %1769, %v1762
    %v1771 = vpop.permute.xlu0 %1770
    %v1773 = vmul.f32 %v1771, %v1631
    %v1774 = vadd.f32 %v1768, %v1773
    %1775 = vset.pattern.permute.xlu0 8
    %1776 = vperm.xlu0 %1775, %v1762
    %v1777 = vpop.permute.xlu0 %1776
    %v1779 = vmul.f32 %v1777, %v1637
    %v1780 = vadd.f32 %v1774, %v1779
    %v1782 = vrot.slane %v1780, 6
    %v1784 = vadd.f32 %v1615, %v1782
    %v1785 = vxor.u32 %v1784, 2147483648
    %v1786 = vmul.f32 %v1785, 1.442695
    %v1787 = vpow.pop %v1786
    %v1788 = vadd.f32 %v1787, 1.0
    %v1789 = vrcp.pop %v1788
    %v1790 = vmul.f32 1.0, %v1789
    %v1791 = vtanh.pop %v1784
    %v1793 = vrot.slane %v1756, 6
    %v1795 = vmul.f32 %v1790, %v1793
    %1797 = vrot.lane.b32.xlu0 %v1791, 119
    %v1798 = vpop.permute.xlu0 %1797
    %v1800 = vmul.f32 %v1790, %v1798
    %1802 = vrot.lane.b32.xlu0 %v1800, 3
    %v1803 = vpop.permute.xlu0 %1802
    %v1805 = vadd.f32 %v1795, %v1803
    %v1806 = vtanh.pop %v1805
    %1808 = vrot.lane.b32.xlu0 %v1806, 3
    %v1809 = vpop.permute.xlu0 %1808
    %v1811 = vmul.f32 %v1790, %v1809
    %1813 = vset.pattern.permute.xlu0 6
    %1814 = vperm.xlu0 %1813, %v1811
    %v1815 = vpop.permute.xlu0 %1814
    %v1817 = vmul.f32 %v1815, %v1626
    %1818 = vset.pattern.permute.xlu0 7
    %1819 = vperm.xlu0 %1818, %v1811
    %v1820 = vpop.permute.xlu0 %1819
    %v1822 = vmul.f32 %v1820, %v1631
    %v1823 = vadd.f32 %v1817, %v1822
    %1824 = vset.pattern.permute.xlu0 8
    %1825 = vperm.xlu0 %1824, %v1811
    %v1826 = vpop.permute.xlu0 %1825
    %v1828 = vmul.f32 %v1826, %v1637
    %v1829 = vadd.f32 %v1823, %v1828
    %v1831 = vrot.slane %v1829, 6
    %v1833 = vadd.f32 %v1620, %v1831
    %v1834 = vxor.u32 %v1833, 2147483648
    %v1835 = vmul.f32 %v1834, 1.442695
    %v1836 = vpow.pop %v1835
    %v1837 = vadd.f32 %v1836, 1.0
    %v1838 = vrcp.pop %v1837
    %v1839 = vmul.f32 1.0, %v1838
    %v1840 = vtanh.pop %v1833
    %v1842 = vrot.slane %v1805, 6
    %v1844 = vmul.f32 %v1839, %v1842
    %1846 = vrot.lane.b32.xlu0 %v1840, 119
    %v1847 = vpop.permute.xlu0 %1846
    %v1849 = vmul.f32 %v1839, %v1847
    %1851 = vrot.lane.b32.xlu0 %v1849, 3
    %v1852 = vpop.permute.xlu0 %1851
    %v1854 = vadd.f32 %v1844, %v1852
    %v1855 = vtanh.pop %v1854
    %1857 = vrot.lane.b32.xlu0 %v1855, 3
    %v1858 = vpop.permute.xlu0 %1857
    %v1860 = vmul.f32 %v1839, %v1858
    %1862 = vset.pattern.permute.xlu0 6
    %1863 = vperm.xlu0 %1862, %v1860
    %v1864 = vpop.permute.xlu0 %1863
    %v1866 = vmul.f32 %v1864, %v1626
    %1867 = vset.pattern.permute.xlu0 7
    %1868 = vperm.xlu0 %1867, %v1860
    %v1869 = vpop.permute.xlu0 %1868
    %v1871 = vmul.f32 %v1869, %v1631
    %v1872 = vadd.f32 %v1866, %v1871
    %1873 = vset.pattern.permute.xlu0 8
    %1874 = vperm.xlu0 %1873, %v1860
    %v1875 = vpop.permute.xlu0 %1874
    %v1877 = vmul.f32 %v1875, %v1637
    %v1878 = vadd.f32 %v1872, %v1877
    %v1880 = vrot.slane %v1878, 6
    %v1882 = vadd.f32 %v1620, %v1880
    %v1883 = vxor.u32 %v1882, 2147483648
    %v1884 = vmul.f32 %v1883, 1.442695
    %v1885 = vpow.pop %v1884
    %v1886 = vadd.f32 %v1885, 1.0
    %v1887 = vrcp.pop %v1886
    %v1888 = vmul.f32 1.0, %v1887
    %v1889 = vtanh.pop %v1882
    %v1891 = vrot.slane %v1854, 6
    %v1893 = vmul.f32 %v1888, %v1891
    %1895 = vrot.lane.b32.xlu0 %v1889, 119
    %v1896 = vpop.permute.xlu0 %1895
    %v1898 = vmul.f32 %v1888, %v1896
    %1900 = vrot.lane.b32.xlu0 %v1898, 3
    %v1901 = vpop.permute.xlu0 %1900
    %v1903 = vadd.f32 %v1893, %v1901
    %v1904 = vtanh.pop %v1903
    %1906 = vrot.lane.b32.xlu0 %v1904, 3
    %v1907 = vpop.permute.xlu0 %1906
    %v1909 = vmul.f32 %v1888, %v1907
    %1911 = vset.pattern.permute.xlu0 6
    %1912 = vperm.xlu0 %1911, %v1909
    %v1913 = vpop.permute.xlu0 %1912
    %v1915 = vmul.f32 %v1913, %v1626
    %1916 = vset.pattern.permute.xlu0 7
    %1917 = vperm.xlu0 %1916, %v1909
    %v1918 = vpop.permute.xlu0 %1917
    %v1920 = vmul.f32 %v1918, %v1631
    %v1921 = vadd.f32 %v1915, %v1920
    %1922 = vset.pattern.permute.xlu0 8
    %1923 = vperm.xlu0 %1922, %v1909
    %v1924 = vpop.permute.xlu0 %1923
    %v1926 = vmul.f32 %v1924, %v1637
    %v1927 = vadd.f32 %v1921, %v1926
    %v1929 = vrot.slane %v1927, 6
    %v1931 = vadd.f32 %v1620, %v1929
    %v1932 = vxor.u32 %v1931, 2147483648
    %v1933 = vmul.f32 %v1932, 1.442695
    %v1934 = vpow.pop %v1933
    %v1935 = vadd.f32 %v1934, 1.0
    %v1936 = vrcp.pop %v1935
    %v1937 = vmul.f32 1.0, %v1936
    %v1938 = vtanh.pop %v1931
    %v1940 = vrot.slane %v1903, 6
    %v1942 = vmul.f32 %v1937, %v1940
    %1944 = vrot.lane.b32.xlu0 %v1938, 119
    %v1945 = vpop.permute.xlu0 %1944
    %v1947 = vmul.f32 %v1937, %v1945
    %1949 = vrot.lane.b32.xlu0 %v1947, 3
    %v1950 = vpop.permute.xlu0 %1949
    %v1952 = vadd.f32 %v1942, %v1950
    %v1953 = vtanh.pop %v1952
    %1955 = vrot.lane.b32.xlu0 %v1953, 3
    %v1956 = vpop.permute.xlu0 %1955
    %v1958 = vmul.f32 %v1937, %v1956
    %1960 = vset.pattern.permute.xlu0 6
    %1961 = vperm.xlu0 %1960, %v1958
    %v1962 = vpop.permute.xlu0 %1961
    %v1964 = vmul.f32 %v1962, %v1626
    %1965 = vset.pattern.permute.xlu0 7
    %1966 = vperm.xlu0 %1965, %v1958
    %v1967 = vpop.permute.xlu0 %1966
    %v1969 = vmul.f32 %v1967, %v1631
    %v1970 = vadd.f32 %v1964, %v1969
    %1971 = vset.pattern.permute.xlu0 8
    %1972 = vperm.xlu0 %1971, %v1958
    %v1973 = vpop.permute.xlu0 %1972
    %v1975 = vmul.f32 %v1973, %v1637
    %v1976 = vadd.f32 %v1970, %v1975
    %v1978 = vrot.slane %v1976, 6
    %v1980 = vadd.f32 %v1620, %v1978
    %v1981 = vxor.u32 %v1980, 2147483648
    %v1982 = vmul.f32 %v1981, 1.442695
    %v1983 = vpow.pop %v1982
    %v1984 = vadd.f32 %v1983, 1.0
    %v1985 = vrcp.pop %v1984
    %v1986 = vmul.f32 1.0, %v1985
    %v1987 = vtanh.pop %v1980
    %v1989 = vrot.slane %v1952, 6
    %v1991 = vmul.f32 %v1986, %v1989
    %1993 = vrot.lane.b32.xlu0 %v1987, 119
    %v1994 = vpop.permute.xlu0 %1993
    %v1996 = vmul.f32 %v1986, %v1994
    %1998 = vrot.lane.b32.xlu0 %v1996, 3
    %v1999 = vpop.permute.xlu0 %1998
    %v2001 = vadd.f32 %v1991, %v1999
    %v2002 = vtanh.pop %v2001
    %2004 = vrot.lane.b32.xlu0 %v2002, 3
    %v2005 = vpop.permute.xlu0 %2004
    %v2007 = vmul.f32 %v1986, %v2005
    %v2008 = vsel %vm532, %v1664, %v1713
    %v2009 = vsel %vm534, %v2008, %v1762
    %v2010 = vsel %vm536, %v2009, %v1811
    %v2011 = vsel %vm532, %v1860, %v1909
    %v2012 = vsel %vm534, %v2011, %v1958
    %v2013 = vsel %vm536, %v2012, %v2007
    %s2014 = scalar_lea.vmem %s1, 16
    %v2015 = vld [vmem:[%s2014] sm:$0x7]
    %s2016 = scalar_lea.vmem [#allocation2], 16
    %v2017 = vld [vmem:[%s2016] sm:$0x7]
    %s2018 = scalar_lea.vmem %s3, 4
    %v2019 = vld [vmem:[%s2018] sm:$0x1]
    %v2021 = vlaneseq
    %v2022 = vshrl.u32 %v2021, 7
    %v2023 = vsub.s32 0, %v2022
    %v2024 = vrot.slane %v2019, %v2023
    %2028 = vrot.lane.b32.xlu0 %v2010, 122
    %v2029 = vpop.permute.xlu0 %2028
    %2030 = vrot.lane.b32.xlu0 %v2013, 122
    %v2031 = vpop.permute.xlu0 %2030
    %v2032 = vsel %vm61, %v2029, 0
    %v2034 = vsel %vm61, %v2031, 0
    %v2037 = vsel %vm68, %v2015, 0
    %2039 = vmatprep.subr.mxu0 0.0
    %2040 = vmatpush1.msra.mxu0 0.0
    %2041 = vmatprep.subr.mxu0 0.0
    %2042 = vmatpush1.msra.mxu0 0.0
    %2043 = vmatprep.subr.mxu0 0.0
    %2044 = vmatpush1.msra.mxu0 0.0
    %2045 = vmatprep.subr.mxu0 0.0
    %2046 = vmatpush1.msra.mxu0 0.0
    %2047 = vmatprep.subr.mxu0 0.0
    %2048 = vmatpush1.msra.mxu0 0.0
    %2049 = vmatprep.subr.mxu0 0.0
    %2050 = vmatpush1.msra.mxu0 0.0
    %2051 = vmatprep.subr.mxu0 0.0
    %2052 = vmatpush1.msra.mxu0 0.0
    %2053 = vmatprep.subr.mxu0 0.0
    %2054 = vmatpush1.msra.mxu0 0.0
    %2055 = vmatprep.subr.mxu0 0.0
    %2056 = vmatpush1.msra.mxu0 0.0
    %2057 = vmatprep.subr.mxu0 0.0
    %2058 = vmatpush1.msra.mxu0 0.0
    %2059 = vmatprep.subr.mxu0 0.0
    %2060 = vmatpush1.msra.mxu0 0.0
    %2061 = vmatprep.subr.mxu0 0.0
    %2062 = vmatpush1.msra.mxu0 0.0
    %2063 = vmatprep.subr.mxu0 0.0
    %2064 = vmatpush1.msra.mxu0 0.0
    %2065 = vmatprep.subr.mxu0 0.0
    %2066 = vmatpush1.msra.mxu0 0.0
    %2067 = vmatprep.subr.mxu0 0.0
    %2068 = vmatpush1.msra.mxu0 0.0
    %2069 = vmatprep.subr.mxu0 0.0
    %2070 = vmatpush1.msra.mxu0 %v2037
    %2071 = vmatprep.subr.mxu0 0.0
    %2072 = vmatpush2.msra.mxu0 0.0
    %2073 = vmatprep.subr.mxu0 0.0
    %2074 = vmatpush2.msra.mxu0 0.0
    %2075 = vmatprep.subr.mxu0 0.0
    %2076 = vmatpush2.msra.mxu0 0.0
    %2077 = vmatprep.subr.mxu0 0.0
    %2078 = vmatpush2.msra.mxu0 0.0
    %2079 = vmatprep.subr.mxu0 0.0
    %2080 = vmatpush2.msra.mxu0 0.0
    %2081 = vmatprep.subr.mxu0 0.0
    %2082 = vmatpush2.msra.mxu0 0.0
    %2083 = vmatprep.subr.mxu0 0.0
    %2084 = vmatpush2.msra.mxu0 0.0
    %2085 = vmatprep.subr.mxu0 0.0
    %2086 = vmatpush2.msra.mxu0 0.0
    %2087 = vmatprep.subr.mxu0 0.0
    %2088 = vmatpush2.msra.mxu0 0.0
    %2089 = vmatprep.subr.mxu0 0.0
    %2090 = vmatpush2.msra.mxu0 0.0
    %2091 = vmatprep.subr.mxu0 0.0
    %2092 = vmatpush2.msra.mxu0 0.0
    %2093 = vmatprep.subr.mxu0 0.0
    %2094 = vmatpush2.msra.mxu0 0.0
    %2095 = vmatprep.subr.mxu0 0.0
    %2096 = vmatpush2.msra.mxu0 0.0
    %2097 = vmatprep.subr.mxu0 0.0
    %2098 = vmatpush2.msra.mxu0 0.0
    %2099 = vmatprep.subr.mxu0 0.0
    %2100 = vmatpush2.msra.mxu0 0.0
    %2101 = vmatprep.subr.mxu0 0.0
    %2102 = vmatpush2.msra.mxu0 0.0
    %2103 = vmatprep.mubr.f32.mxu0 0.0
    %2104 = vmatmul.mubr.f32.gmra.mxu0 %v2032
    %v2105 = vpop.f32.mrf.mxu0
    %v2106 = vadd.f32 %v2024, %v2105
    %v2107 = vpop.f32.mrf.mxu0
    %2108 = vmatprep.mubr.f32.mxu0 0.0
    %2109 = vmatmul.mubr.f32.gmra.mxu0 %v2034
    %v2110 = vpop.f32.mrf.mxu0
    %v2111 = vadd.f32 %v2024, %v2110
    %v2112 = vpop.f32.mrf.mxu0
    %2113 = vdwg.mxu0
    %v2114 = vlaneseq
    %v2115 = vshrl.u32 %v2114, 7
    %v2116 = vsub.s32 0, %v2115
    %v2117 = vrot.slane %v2017, %v2116
    %v2118 = vmul.f32 %v2117, 0.0
    %v2119 = vlaneseq
    %v2120 = vshrl.u32 %v2119, 7
    %v2121 = vsub.s32 1, %v2120
    %v2122 = vrot.slane %v2017, %v2121
    %v2123 = vmul.f32 %v2122, 0.0
    %v2124 = vadd.f32 %v2118, %v2123
    %v2125 = vlaneseq
    %v2126 = vshrl.u32 %v2125, 7
    %v2127 = vsub.s32 2, %v2126
    %v2128 = vrot.slane %v2017, %v2127
    %v2129 = vmul.f32 %v2128, 0.0
    %v2130 = vadd.f32 %v2124, %v2129
    %v2131 = vadd.f32 %v2106, %v2130
    %v2132 = vxor.u32 %v2131, 2147483648
    %v2133 = vmul.f32 %v2132, 1.442695
    %v2134 = vpow.pop %v2133
    %v2135 = vadd.f32 %v2134, 1.0
    %v2136 = vrcp.pop %v2135
    %v2137 = vmul.f32 1.0, %v2136
    %v2138 = vtanh.pop %v2131
    %v2139 = vmul.f32 %v2137, 0.0
    %2141 = vrot.lane.b32.xlu0 %v2138, 119
    %v2142 = vpop.permute.xlu0 %2141
    %v2144 = vmul.f32 %v2137, %v2142
    %2146 = vrot.lane.b32.xlu0 %v2144, 3
    %v2147 = vpop.permute.xlu0 %2146
    %v2149 = vadd.f32 %v2139, %v2147
    %v2150 = vtanh.pop %v2149
    %2152 = vrot.lane.b32.xlu0 %v2150, 3
    %v2153 = vpop.permute.xlu0 %2152
    %v2155 = vmul.f32 %v2137, %v2153
    %2157 = vset.pattern.permute.xlu0 6
    %2158 = vperm.xlu0 %2157, %v2155
    %v2159 = vpop.permute.xlu0 %2158
    %v2161 = vmul.f32 %v2159, %v2117
    %2162 = vset.pattern.permute.xlu0 7
    %2163 = vperm.xlu0 %2162, %v2155
    %v2164 = vpop.permute.xlu0 %2163
    %v2166 = vmul.f32 %v2164, %v2122
    %v2167 = vadd.f32 %v2161, %v2166
    %2168 = vset.pattern.permute.xlu0 8
    %2169 = vperm.xlu0 %2168, %v2155
    %v2170 = vpop.permute.xlu0 %2169
    %v2172 = vmul.f32 %v2170, %v2128
    %v2173 = vadd.f32 %v2167, %v2172
    %v2175 = vrot.slane %v2173, 6
    %v2177 = vadd.f32 %v2106, %v2175
    %v2178 = vxor.u32 %v2177, 2147483648
    %v2179 = vmul.f32 %v2178, 1.442695
    %v2180 = vpow.pop %v2179
    %v2181 = vadd.f32 %v2180, 1.0
    %v2182 = vrcp.pop %v2181
    %v2183 = vmul.f32 1.0, %v2182
    %v2184 = vtanh.pop %v2177
    %v2186 = vrot.slane %v2149, 6
    %v2188 = vmul.f32 %v2183, %v2186
    %2190 = vrot.lane.b32.xlu0 %v2184, 119
    %v2191 = vpop.permute.xlu0 %2190
    %v2193 = vmul.f32 %v2183, %v2191
    %2195 = vrot.lane.b32.xlu0 %v2193, 3
    %v2196 = vpop.permute.xlu0 %2195
    %v2198 = vadd.f32 %v2188, %v2196
    %v2199 = vtanh.pop %v2198
    %2201 = vrot.lane.b32.xlu0 %v2199, 3
    %v2202 = vpop.permute.xlu0 %2201
    %v2204 = vmul.f32 %v2183, %v2202
    %2206 = vset.pattern.permute.xlu0 6
    %2207 = vperm.xlu0 %2206, %v2204
    %v2208 = vpop.permute.xlu0 %2207
    %v2210 = vmul.f32 %v2208, %v2117
    %2211 = vset.pattern.permute.xlu0 7
    %2212 = vperm.xlu0 %2211, %v2204
    %v2213 = vpop.permute.xlu0 %2212
    %v2215 = vmul.f32 %v2213, %v2122
    %v2216 = vadd.f32 %v2210, %v2215
    %2217 = vset.pattern.permute.xlu0 8
    %2218 = vperm.xlu0 %2217, %v2204
    %v2219 = vpop.permute.xlu0 %2218
    %v2221 = vmul.f32 %v2219, %v2128
    %v2222 = vadd.f32 %v2216, %v2221
    %v2224 = vrot.slane %v2222, 6
    %v2226 = vadd.f32 %v2106, %v2224
    %v2227 = vxor.u32 %v2226, 2147483648
    %v2228 = vmul.f32 %v2227, 1.442695
    %v2229 = vpow.pop %v2228
    %v2230 = vadd.f32 %v2229, 1.0
    %v2231 = vrcp.pop %v2230
    %v2232 = vmul.f32 1.0, %v2231
    %v2233 = vtanh.pop %v2226
    %v2235 = vrot.slane %v2198, 6
    %v2237 = vmul.f32 %v2232, %v2235
    %2239 = vrot.lane.b32.xlu0 %v2233, 119
    %v2240 = vpop.permute.xlu0 %2239
    %v2242 = vmul.f32 %v2232, %v2240
    %2244 = vrot.lane.b32.xlu0 %v2242, 3
    %v2245 = vpop.permute.xlu0 %2244
    %v2247 = vadd.f32 %v2237, %v2245
    %v2248 = vtanh.pop %v2247
    %2250 = vrot.lane.b32.xlu0 %v2248, 3
    %v2251 = vpop.permute.xlu0 %2250
    %v2253 = vmul.f32 %v2232, %v2251
    %2255 = vset.pattern.permute.xlu0 6
    %2256 = vperm.xlu0 %2255, %v2253
    %v2257 = vpop.permute.xlu0 %2256
    %v2259 = vmul.f32 %v2257, %v2117
    %2260 = vset.pattern.permute.xlu0 7
    %2261 = vperm.xlu0 %2260, %v2253
    %v2262 = vpop.permute.xlu0 %2261
    %v2264 = vmul.f32 %v2262, %v2122
    %v2265 = vadd.f32 %v2259, %v2264
    %2266 = vset.pattern.permute.xlu0 8
    %2267 = vperm.xlu0 %2266, %v2253
    %v2268 = vpop.permute.xlu0 %2267
    %v2270 = vmul.f32 %v2268, %v2128
    %v2271 = vadd.f32 %v2265, %v2270
    %v2273 = vrot.slane %v2271, 6
    %v2275 = vadd.f32 %v2106, %v2273
    %v2276 = vxor.u32 %v2275, 2147483648
    %v2277 = vmul.f32 %v2276, 1.442695
    %v2278 = vpow.pop %v2277
    %v2279 = vadd.f32 %v2278, 1.0
    %v2280 = vrcp.pop %v2279
    %v2281 = vmul.f32 1.0, %v2280
    %v2282 = vtanh.pop %v2275
    %v2284 = vrot.slane %v2247, 6
    %v2286 = vmul.f32 %v2281, %v2284
    %2288 = vrot.lane.b32.xlu0 %v2282, 119
    %v2289 = vpop.permute.xlu0 %2288
    %v2291 = vmul.f32 %v2281, %v2289
    %2293 = vrot.lane.b32.xlu0 %v2291, 3
    %v2294 = vpop.permute.xlu0 %2293
    %v2296 = vadd.f32 %v2286, %v2294
    %v2297 = vtanh.pop %v2296
    %2299 = vrot.lane.b32.xlu0 %v2297, 3
    %v2300 = vpop.permute.xlu0 %2299
    %v2302 = vmul.f32 %v2281, %v2300
    %2304 = vset.pattern.permute.xlu0 6
    %2305 = vperm.xlu0 %2304, %v2302
    %v2306 = vpop.permute.xlu0 %2305
    %v2308 = vmul.f32 %v2306, %v2117
    %2309 = vset.pattern.permute.xlu0 7
    %2310 = vperm.xlu0 %2309, %v2302
    %v2311 = vpop.permute.xlu0 %2310
    %v2313 = vmul.f32 %v2311, %v2122
    %v2314 = vadd.f32 %v2308, %v2313
    %2315 = vset.pattern.permute.xlu0 8
    %2316 = vperm.xlu0 %2315, %v2302
    %v2317 = vpop.permute.xlu0 %2316
    %v2319 = vmul.f32 %v2317, %v2128
    %v2320 = vadd.f32 %v2314, %v2319
    %v2322 = vrot.slane %v2320, 6
    %v2324 = vadd.f32 %v2111, %v2322
    %v2325 = vxor.u32 %v2324, 2147483648
    %v2326 = vmul.f32 %v2325, 1.442695
    %v2327 = vpow.pop %v2326
    %v2328 = vadd.f32 %v2327, 1.0
    %v2329 = vrcp.pop %v2328
    %v2330 = vmul.f32 1.0, %v2329
    %v2331 = vtanh.pop %v2324
    %v2333 = vrot.slane %v2296, 6
    %v2335 = vmul.f32 %v2330, %v2333
    %2337 = vrot.lane.b32.xlu0 %v2331, 119
    %v2338 = vpop.permute.xlu0 %2337
    %v2340 = vmul.f32 %v2330, %v2338
    %2342 = vrot.lane.b32.xlu0 %v2340, 3
    %v2343 = vpop.permute.xlu0 %2342
    %v2345 = vadd.f32 %v2335, %v2343
    %v2346 = vtanh.pop %v2345
    %2348 = vrot.lane.b32.xlu0 %v2346, 3
    %v2349 = vpop.permute.xlu0 %2348
    %v2351 = vmul.f32 %v2330, %v2349
    %2353 = vset.pattern.permute.xlu0 6
    %2354 = vperm.xlu0 %2353, %v2351
    %v2355 = vpop.permute.xlu0 %2354
    %v2357 = vmul.f32 %v2355, %v2117
    %2358 = vset.pattern.permute.xlu0 7
    %2359 = vperm.xlu0 %2358, %v2351
    %v2360 = vpop.permute.xlu0 %2359
    %v2362 = vmul.f32 %v2360, %v2122
    %v2363 = vadd.f32 %v2357, %v2362
    %2364 = vset.pattern.permute.xlu0 8
    %2365 = vperm.xlu0 %2364, %v2351
    %v2366 = vpop.permute.xlu0 %2365
    %v2368 = vmul.f32 %v2366, %v2128
    %v2369 = vadd.f32 %v2363, %v2368
    %v2371 = vrot.slane %v2369, 6
    %v2373 = vadd.f32 %v2111, %v2371
    %v2374 = vxor.u32 %v2373, 2147483648
    %v2375 = vmul.f32 %v2374, 1.442695
    %v2376 = vpow.pop %v2375
    %v2377 = vadd.f32 %v2376, 1.0
    %v2378 = vrcp.pop %v2377
    %v2379 = vmul.f32 1.0, %v2378
    %v2380 = vtanh.pop %v2373
    %v2382 = vrot.slane %v2345, 6
    %v2384 = vmul.f32 %v2379, %v2382
    %2386 = vrot.lane.b32.xlu0 %v2380, 119
    %v2387 = vpop.permute.xlu0 %2386
    %v2389 = vmul.f32 %v2379, %v2387
    %2391 = vrot.lane.b32.xlu0 %v2389, 3
    %v2392 = vpop.permute.xlu0 %2391
    %v2394 = vadd.f32 %v2384, %v2392
    %v2395 = vtanh.pop %v2394
    %2397 = vrot.lane.b32.xlu0 %v2395, 3
    %v2398 = vpop.permute.xlu0 %2397
    %v2400 = vmul.f32 %v2379, %v2398
    %2402 = vset.pattern.permute.xlu0 6
    %2403 = vperm.xlu0 %2402, %v2400
    %v2404 = vpop.permute.xlu0 %2403
    %v2406 = vmul.f32 %v2404, %v2117
    %2407 = vset.pattern.permute.xlu0 7
    %2408 = vperm.xlu0 %2407, %v2400
    %v2409 = vpop.permute.xlu0 %2408
    %v2411 = vmul.f32 %v2409, %v2122
    %v2412 = vadd.f32 %v2406, %v2411
    %2413 = vset.pattern.permute.xlu0 8
    %2414 = vperm.xlu0 %2413, %v2400
    %v2415 = vpop.permute.xlu0 %2414
    %v2417 = vmul.f32 %v2415, %v2128
    %v2418 = vadd.f32 %v2412, %v2417
    %v2420 = vrot.slane %v2418, 6
    %v2422 = vadd.f32 %v2111, %v2420
    %v2423 = vxor.u32 %v2422, 2147483648
    %v2424 = vmul.f32 %v2423, 1.442695
    %v2425 = vpow.pop %v2424
    %v2426 = vadd.f32 %v2425, 1.0
    %v2427 = vrcp.pop %v2426
    %v2428 = vmul.f32 1.0, %v2427
    %v2429 = vtanh.pop %v2422
    %v2431 = vrot.slane %v2394, 6
    %v2433 = vmul.f32 %v2428, %v2431
    %2435 = vrot.lane.b32.xlu0 %v2429, 119
    %v2436 = vpop.permute.xlu0 %2435
    %v2438 = vmul.f32 %v2428, %v2436
    %2440 = vrot.lane.b32.xlu0 %v2438, 3
    %v2441 = vpop.permute.xlu0 %2440
    %v2443 = vadd.f32 %v2433, %v2441
    %v2444 = vtanh.pop %v2443
    %2446 = vrot.lane.b32.xlu0 %v2444, 3
    %v2447 = vpop.permute.xlu0 %2446
    %v2449 = vmul.f32 %v2428, %v2447
    %2451 = vset.pattern.permute.xlu0 6
    %2452 = vperm.xlu0 %2451, %v2449
    %v2453 = vpop.permute.xlu0 %2452
    %v2455 = vmul.f32 %v2453, %v2117
    %2456 = vset.pattern.permute.xlu0 7
    %2457 = vperm.xlu0 %2456, %v2449
    %v2458 = vpop.permute.xlu0 %2457
    %v2460 = vmul.f32 %v2458, %v2122
    %v2461 = vadd.f32 %v2455, %v2460
    %2462 = vset.pattern.permute.xlu0 8
    %2463 = vperm.xlu0 %2462, %v2449
    %v2464 = vpop.permute.xlu0 %2463
    %v2466 = vmul.f32 %v2464, %v2128
    %v2467 = vadd.f32 %v2461, %v2466
    %v2469 = vrot.slane %v2467, 6
    %v2471 = vadd.f32 %v2111, %v2469
    %v2472 = vxor.u32 %v2471, 2147483648
    %v2473 = vmul.f32 %v2472, 1.442695
    %v2474 = vpow.pop %v2473
    %v2475 = vadd.f32 %v2474, 1.0
    %v2476 = vrcp.pop %v2475
    %v2477 = vmul.f32 1.0, %v2476
    %v2478 = vtanh.pop %v2471
    %v2480 = vrot.slane %v2443, 6
    %v2482 = vmul.f32 %v2477, %v2480
    %2484 = vrot.lane.b32.xlu0 %v2478, 119
    %v2485 = vpop.permute.xlu0 %2484
    %v2487 = vmul.f32 %v2477, %v2485
    %2489 = vrot.lane.b32.xlu0 %v2487, 3
    %v2490 = vpop.permute.xlu0 %2489
    %v2492 = vadd.f32 %v2482, %v2490
    %v2493 = vtanh.pop %v2492
    %2495 = vrot.lane.b32.xlu0 %v2493, 3
    %v2496 = vpop.permute.xlu0 %2495
    %v2498 = vmul.f32 %v2477, %v2496
    %v2499 = vld [vmem:[#allocation5] sm:$0x7]
    %v2500 = vld [vmem:[%s5] sm:$0x1]
    %v2502 = vlaneseq
    %v2503 = vshrl.u32 %v2502, 7
    %v2504 = vsub.s32 0, %v2503
    %v2505 = vrot.slane %v2500, %v2504
    %v2508 = vrot.slane %v2498, 6
    %2509 = vrot.lane.b32.xlu0 %v2508, 122
    %v2510 = vpop.permute.xlu0 %2509
    %v2511 = vsel %vm61, %v2510, 0
    %v2514 = vsel %vm68, %v2499, 0
    %2516 = vmatprep.subr.mxu0 0.0
    %2517 = vmatpush1.msra.mxu0 0.0
    %2518 = vmatprep.subr.mxu0 0.0
    %2519 = vmatpush1.msra.mxu0 0.0
    %2520 = vmatprep.subr.mxu0 0.0
    %2521 = vmatpush1.msra.mxu0 0.0
    %2522 = vmatprep.subr.mxu0 0.0
    %2523 = vmatpush1.msra.mxu0 0.0
    %2524 = vmatprep.subr.mxu0 0.0
    %2525 = vmatpush1.msra.mxu0 0.0
    %2526 = vmatprep.subr.mxu0 0.0
    %2527 = vmatpush1.msra.mxu0 0.0
    %2528 = vmatprep.subr.mxu0 0.0
    %2529 = vmatpush1.msra.mxu0 0.0
    %2530 = vmatprep.subr.mxu0 0.0
    %2531 = vmatpush1.msra.mxu0 0.0
    %2532 = vmatprep.subr.mxu0 0.0
    %2533 = vmatpush1.msra.mxu0 0.0
    %2534 = vmatprep.subr.mxu0 0.0
    %2535 = vmatpush1.msra.mxu0 0.0
    %2536 = vmatprep.subr.mxu0 0.0
    %2537 = vmatpush1.msra.mxu0 0.0
    %2538 = vmatprep.subr.mxu0 0.0
    %2539 = vmatpush1.msra.mxu0 0.0
    %2540 = vmatprep.subr.mxu0 0.0
    %2541 = vmatpush1.msra.mxu0 0.0
    %2542 = vmatprep.subr.mxu0 0.0
    %2543 = vmatpush1.msra.mxu0 0.0
    %2544 = vmatprep.subr.mxu0 0.0
    %2545 = vmatpush1.msra.mxu0 0.0
    %2546 = vmatprep.subr.mxu0 0.0
    %2547 = vmatpush1.msra.mxu0 %v2514
    %2548 = vmatprep.subr.mxu0 0.0
    %2549 = vmatpush2.msra.mxu0 0.0
    %2550 = vmatprep.subr.mxu0 0.0
    %2551 = vmatpush2.msra.mxu0 0.0
    %2552 = vmatprep.subr.mxu0 0.0
    %2553 = vmatpush2.msra.mxu0 0.0
    %2554 = vmatprep.subr.mxu0 0.0
    %2555 = vmatpush2.msra.mxu0 0.0
    %2556 = vmatprep.subr.mxu0 0.0
    %2557 = vmatpush2.msra.mxu0 0.0
    %2558 = vmatprep.subr.mxu0 0.0
    %2559 = vmatpush2.msra.mxu0 0.0
    %2560 = vmatprep.subr.mxu0 0.0
    %2561 = vmatpush2.msra.mxu0 0.0
    %2562 = vmatprep.subr.mxu0 0.0
    %2563 = vmatpush2.msra.mxu0 0.0
    %2564 = vmatprep.subr.mxu0 0.0
    %2565 = vmatpush2.msra.mxu0 0.0
    %2566 = vmatprep.subr.mxu0 0.0
    %2567 = vmatpush2.msra.mxu0 0.0
    %2568 = vmatprep.subr.mxu0 0.0
    %2569 = vmatpush2.msra.mxu0 0.0
    %2570 = vmatprep.subr.mxu0 0.0
    %2571 = vmatpush2.msra.mxu0 0.0
    %2572 = vmatprep.subr.mxu0 0.0
    %2573 = vmatpush2.msra.mxu0 0.0
    %2574 = vmatprep.subr.mxu0 0.0
    %2575 = vmatpush2.msra.mxu0 0.0
    %2576 = vmatprep.subr.mxu0 0.0
    %2577 = vmatpush2.msra.mxu0 0.0
    %2578 = vmatprep.subr.mxu0 0.0
    %2579 = vmatpush2.msra.mxu0 0.0
    %2580 = vmatprep.mubr.f32.mxu0 0.0
    %2581 = vmatmul.mubr.f32.gmra.mxu0 %v2511
    %v2582 = vpop.f32.mrf.mxu0
    %v2583 = vadd.f32 %v2505, %v2582
    %v2584 = vpop.f32.mrf.mxu0
    %2585 = vdwg.mxu0
    %v2586 = vadd.f32 %v2583, 1.0
    %v2587 = vrot.slane %v51, 6
    %v2589 = vmul.f32 %v2586, %v2587
    %v2590 = vmax.f32 %v2589, 0.0
    %vm2591 = vcmask 17408
    %2592 = vst.msk [vmem:[#allocation7] sm:$0x3] %vm2591, %v2590
    // Predicated region
    $region34: #{tpu_custom_call.1} parent=1 // pred_check
      _
    $region35: #{tpu_custom_call.1} parent=1 // pred_check_branch
      %2594 = sbr.rel (0) target = $region37
    $region36: #{tpu_custom_call.1} parent=1 // pred_region
      %s2596 = ssub.s32 32, 32
      %2597 = vsyncadd [#allocation4], %s2596
      %s2599 = sshll.u32 [#allocation7], 4
      %s2600 = int_to_ptr.vmem [resolvable:$true] %s2599
      %2602 = dma.vmem_to_hbm [thread:$0]  %s2600, 32, %s6, [#allocation4]
    $region37: #{tpu_custom_call.1} parent=1 // pred_fallthru
      _
    // Predicated region
    $region38: #{tpu_custom_call.1} parent=1 // pred_check
      _
    $region39: #{tpu_custom_call.1} parent=1 // pred_check_branch
      %2604 = sbr.rel (0) target = $region41
    $region40: #{tpu_custom_call.1} parent=1 // pred_region
      %2605 = dma.done [#allocation4], 32
    $region41: #{tpu_custom_call.1} parent=1 // pred_fallthru
      _
    %2606 = vsyncpa [#allocation3], 1
    %2607 = vsyncpa [#allocation6], 1
    %2608 = vsyncpa [#allocation4], 1

</llo_original>
